<compile_context>
chip_gen: v7x
topology: tpu7x:2x2x1
jax: 0.10.0
libtpu: 0.0.40
codegen_flags: <defaults>
</compile_context>

<pallas_src>
import functools
import inspect

import jax
import jax.numpy as jnp
from jax.experimental import pallas as pl
from jax.experimental.pallas import tpu as pltpu

DROPOUT_P = 0.2
N_EMBED = 384  # module constant

try:
    _HAS_PIPELINE_MODE = (
        hasattr(pl, "Buffered")
        and "pipeline_mode" in inspect.signature(pl.BlockSpec).parameters
    )
except (TypeError, ValueError):  # pragma: no cover
    _HAS_PIPELINE_MODE = False


def ffn_kernel(seed_ref, x_ref, w1_ref, b1_ref, w2_ref, b2_ref, o_ref, acc_ref,
               *, training: bool, drop_p: float):
    # Grid: (row tiles i, hidden chunks k).  Per (i, k):
    #   x_ref: (tm, C)   w1_ref: (C, th)   b1_ref: (1, th)
    #   w2_ref: (th, C)  b2_ref: (1, C)    o_ref: (tm, C)   acc_ref: (tm, C) f32
    k = pl.program_id(1)

    @pl.when(k == 0)
    def _():
        acc_ref[...] = jnp.zeros_like(acc_ref)

    # Linear 1 chunk + ReLU (bf16 operands on the MXU, f32 accumulate).
    h = jnp.dot(x_ref[...], w1_ref[...], preferred_element_type=jnp.float32)
    h = jnp.maximum(h + b1_ref[...].astype(jnp.float32), 0.0)

    # Linear 2 chunk, accumulated over hidden chunks in f32.
    acc_ref[...] += jnp.dot(h.astype(w2_ref.dtype), w2_ref[...],
                            preferred_element_type=jnp.float32)

    @pl.when(k == pl.num_programs(1) - 1)
    def _():
        y = acc_ref[...] + b2_ref[...].astype(jnp.float32)
        if training and drop_p > 0.0:
            # Inverted dropout via the on-chip PRNG: keep w.p. (1-p), scale
            # 1/(1-p).  Cannot bit-match torch's RNG stream; semantics match.
            # Seed mixes the row-tile index with a large odd constant so
            # adjacent tiles do not get near-identical streams.  Note: the
            # mask depends on tm for a fixed seed.
            mixed = seed_ref[0] ^ (pl.program_id(0) * jnp.int32(-1640531527))
            pltpu.prng_seed(mixed)
            bits = pltpu.bitcast(pltpu.prng_random_bits(y.shape), jnp.uint32)
            threshold = jnp.uint32(min(int(drop_p * (1 << 32)), (1 << 32) - 1))
            keep = bits >= threshold
            y = jnp.where(keep, y * (1.0 / (1.0 - drop_p)), 0.0)
        o_ref[...] = y.astype(o_ref.dtype)


def _round_up(a: int, b: int) -> int:
    return ((a + b - 1) // b) * b


def _vmem_capacity() -> int:
    try:
        return int(pltpu.get_tpu_info().vmem_capacity_bytes)
    except Exception:
        return 128 << 20  # conservative fallback (v5e/v6e size)


def _pick_tm(M: int, requested: int) -> int:
    """Row tile: never tiny for large M (MXU occupancy), >=2 tiles when possible
    (both v7x TensorCores), always a multiple of 8 (sublane)."""
    requested = max(8, _round_up(min(requested, max(M, 8)), 8))
    if M >= 2 * requested:
        return requested
    return max(8, min(requested, _round_up(pl.cdiv(M, 2), 8)))


def _pick_th(H: int, C: int, tm: int, w_itemsize: int, vmem_cap: int) -> int:
    """Largest hidden-chunk (multiple of 128, divides H) whose double-buffered
    W1/W2 panels + (tm, th) f32 intermediate fit in ~half of VMEM."""
    budget = vmem_cap // 2
    best = 128
    for th in range(H, 0, -128):
        if H % th:
            continue
        best = min(best, th) if best != 128 else th
        need = 2 * (2 * C * th * w_itemsize) + tm * th * 4
        if need <= budget:
            return th
    return best


def _vmem_budget(tm, th, C, x_itemsize, w_itemsize, out_itemsize,
                 single_buffer_weights: bool) -> int:
    wbuf = 1 if single_buffer_weights else 2
    weights = wbuf * (2 * C * th * w_itemsize + (th + C) * 4)  # W1/W2 panels + biases
    io = 2 * tm * C * (x_itemsize + out_itemsize)              # dbl-buffered x/out tiles
    acc = tm * C * 4
    interm = tm * th * 4 + tm * C * 4                          # h + y f32 temporaries
    return weights + io + acc + interm


def _vmem_limit(needed: int, vmem_cap: int) -> int:
    # Leave ~16 MiB for Mosaic internal scratch/spill (matters on 64-MiB v7x);
    # allow large limits on 128-MiB v5e/v6e.
    cap = max(32 << 20, vmem_cap - (16 << 20))
    return int(min(cap, max(needed + (4 << 20), 32 << 20)))


def feed_forward(x, w1, b1, w2, b2, *, training=False, drop_p=DROPOUT_P,
                 seed=0, tm=None, compute_dtype=jnp.bfloat16):
    """x: (B, T, C);  w1: (C, 4C);  b1: (4C,);  w2: (4C, C);  b2: (C,).

    MXU operands run in `compute_dtype` (default bf16, f32 accumulation);
    pass compute_dtype=jnp.float32 if exact-f32 operand fidelity is required.
    """
    B, T, C = x.shape
    H = w1.shape[1]
    M = B * T
    assert C % 128 == 0 and H % 128 == 0, "feature dims must be lane-aligned"
    if training:
        assert 0.0 <= drop_p < 1.0

    vmem_cap = _vmem_capacity()
    w_itemsize = jnp.dtype(compute_dtype).itemsize
    x_itemsize = w_itemsize
    out_itemsize = jnp.dtype(x.dtype).itemsize

    if tm is None:
        tm = 1024 if vmem_cap >= (100 << 20) else 512  # bigger row tiles on v5e/v6e
    tm = _pick_tm(M, tm)
    th = _pick_th(H, C, tm, w_itemsize, vmem_cap)
    nmt = pl.cdiv(M, tm)          # ragged last row block is masked by Pallas
    nk = H // th                  # th divides H exactly (contraction must be exact)

    # Single-buffer the constant-index weight blocks only when double-buffering
    # them would waste meaningful VMEM (only matters for large models / v7x).
    single_buffer_weights = (
        _HAS_PIPELINE_MODE and nk == 1
        and (2 * C * H * w_itemsize) > (8 << 20)
    )
    w_kwargs = dict(pipeline_mode=pl.Buffered(1)) if single_buffer_weights else {}

    xf = x.reshape(M, C).astype(compute_dtype)
    w1c = w1.astype(compute_dtype)
    w2c = w2.astype(compute_dtype)
    b1r = b1.reshape(1, H).astype(jnp.float32)
    b2r = b2.reshape(1, C).astype(jnp.float32)
    seed_arr = jnp.array([seed], dtype=jnp.int32)

    needed = _vmem_budget(tm, th, C, x_itemsize, w_itemsize, out_itemsize,
                          single_buffer_weights)

    out = pl.pallas_call(
        functools.partial(ffn_kernel, training=training, drop_p=drop_p),
        out_shape=jax.ShapeDtypeStruct((M, C), x.dtype),
        grid_spec=pltpu.PrefetchScalarGridSpec(
            num_scalar_prefetch=1,                      # dropout seed in SMEM
            grid=(nmt, nk),
            in_specs=[
                pl.BlockSpec((tm, C), lambda i, k, s: (i, 0)),              # x rows
                pl.BlockSpec((C, th), lambda i, k, s: (0, k), **w_kwargs),  # W1 panel
                pl.BlockSpec((1, th), lambda i, k, s: (0, k), **w_kwargs),  # b1 chunk
                pl.BlockSpec((th, C), lambda i, k, s: (k, 0), **w_kwargs),  # W2 panel
                pl.BlockSpec((1, C), lambda i, k, s: (0, 0), **w_kwargs),   # b2
            ],
            out_specs=pl.BlockSpec((tm, C), lambda i, k, s: (i, 0)),
            scratch_shapes=[pltpu.VMEM((tm, C), jnp.float32)],              # f32 acc
        ),
        compiler_params=pltpu.CompilerParams(
            dimension_semantics=("parallel", "arbitrary"),
            vmem_limit_bytes=_vmem_limit(needed, vmem_cap),
        ),
    )(seed_arr, xf, w1c, b1r, w2c, b2r)

    return out.reshape(B, T, C)


if __name__ == "__main__":
    # Small shapes consistent with the module (n_embed -> 4*n_embed -> n_embed).
    B, T, n_embed = 2, 8, N_EMBED
    hidden = 4 * n_embed

    key = jax.random.PRNGKey(0)
    kx, k1, kb1, k2, kb2 = jax.random.split(key, 5)

    # Deterministic init mirroring torch.nn.Linear's uniform(-1/sqrt(fan_in), ...).
    bound1 = 1.0 / (n_embed ** 0.5)
    bound2 = 1.0 / (hidden ** 0.5)
    x = jax.random.normal(kx, (B, T, n_embed), dtype=jnp.float32)
    w1 = jax.random.uniform(k1, (n_embed, hidden), jnp.float32, -bound1, bound1)
    b1 = jax.random.uniform(kb1, (hidden,), jnp.float32, -bound1, bound1)
    w2 = jax.random.uniform(k2, (hidden, n_embed), jnp.float32, -bound2, bound2)
    b2 = jax.random.uniform(kb2, (n_embed,), jnp.float32, -bound2, bound2)

    # Eval-mode forward (dropout = identity), matching module.eval() semantics.
    out = jax.block_until_ready(feed_forward(x, w1, b1, w2, b2, training=False))

    # Pure-JAX reference.  Tolerance documents the committed bf16-operand /
    # f32-accumulate MXU precision (see perf review).
    ref = jnp.maximum(x @ w1 + b1, 0.0) @ w2 + b2
    assert out.shape == (B, T, n_embed)
    assert jnp.allclose(out, ref, atol=3e-2, rtol=3e-2), float(
        jnp.max(jnp.abs(out - ref)))

    # Training-mode forward uses the TPU hardware PRNG; only exercise it on a
    # real TPU backend (no CPU/interpret lowering exists for prng_seed).
    if jax.default_backend() == "tpu":
        out_train = jax.block_until_ready(
            feed_forward(x, w1, b1, w2, b2, training=True, seed=42))
        assert out_train.shape == (B, T, n_embed)
        assert bool(jnp.all(jnp.isfinite(out_train)))

    print("KERNEL_OK")
</pallas_src>

<mosaic_0001>
module attributes {stable_mosaic.version = 11 : i64} {
  func.func @ffn_kernel(%arg0: i32, %arg1: i32, %arg2: memref<1xi32, #tpu.memory_space<smem>>, %arg3: memref<8x384xbf16, #tpu.memory_space<vmem>>, %arg4: memref<384x1536xbf16, #tpu.memory_space<vmem>>, %arg5: memref<1x1536xf32, #tpu.memory_space<vmem>>, %arg6: memref<1536x384xbf16, #tpu.memory_space<vmem>>, %arg7: memref<1x384xf32, #tpu.memory_space<vmem>>, %arg8: memref<8x384xf32, #tpu.memory_space<vmem>>, %arg9: memref<8x384xf32, #tpu.memory_space<vmem>>) attributes {dimension_semantics = [#tpu.dimension_semantics<parallel>, #tpu.dimension_semantics<arbitrary>], iteration_bounds = array<i64: 2, 1>, scalar_prefetch = 1 : i64, scratch_operands = 1 : i64, tpu.core_type = #tpu.core_type<tc>, window_params = [{transform_indices = @transform_0, window_bounds = array<i64: 8, 384>}, {transform_indices = @transform_1, window_bounds = array<i64: 384, 1536>}, {transform_indices = @transform_2, window_bounds = array<i64: 1, 1536>}, {transform_indices = @transform_3, window_bounds = array<i64: 1536, 384>}, {pipeline_mode = #tpu.pipeline_mode<synchronous>, transform_indices = @transform_4, window_bounds = array<i64: 1, 384>}, {transform_indices = @transform_5, window_bounds = array<i64: 8, 384>}]} {
    %c0_i32 = arith.constant 0 : i32
    %0 = arith.cmpi eq, %arg1, %c0_i32 : i32
    %1 = arith.extui %0 : i1 to i32
    %c0_i32_0 = arith.constant 0 : i32
    %2 = arith.cmpi ne, %1, %c0_i32_0 : i32
    scf.if %2 {
      %cst_16 = arith.constant 0.000000e+00 : f32
      %20 = vector.broadcast %cst_16 : f32 to vector<8x384xf32>
      %c0_17 = arith.constant 0 : index
      %c0_18 = arith.constant 0 : index
      %21 = vector.load %arg9[%c0_17, %c0_18] : memref<8x384xf32, #tpu.memory_space<vmem>>, vector<8x384xf32>
      tpu.vector_store %arg9[%c0_17, %c0_18], %20 {strides = array<i32>} : memref<8x384xf32, #tpu.memory_space<vmem>>, vector<8x384xf32>,
    } else {
    }
    %c0 = arith.constant 0 : index
    %c0_1 = arith.constant 0 : index
    %3 = vector.load %arg3[%c0, %c0_1] : memref<8x384xbf16, #tpu.memory_space<vmem>>, vector<8x384xbf16>
    %c0_2 = arith.constant 0 : index
    %c0_3 = arith.constant 0 : index
    %4 = vector.load %arg4[%c0_2, %c0_3] : memref<384x1536xbf16, #tpu.memory_space<vmem>>, vector<384x1536xbf16>
    %cst = arith.constant dense<0.000000e+00> : vector<8x1536xf32>
    %5 = tpu.matmul %3, %4, %cst {dimension_numbers = #tpu.dot_dimension_numbers<[1], [0], [0], [1], [0, 0, 1, 1], [], []>} : vector<8x384xbf16>, vector<384x1536xbf16>, vector<8x1536xf32> -> vector<8x1536xf32>
    %c0_4 = arith.constant 0 : index
    %c0_5 = arith.constant 0 : index
    %6 = vector.load %arg5[%c0_4, %c0_5] : memref<1x1536xf32, #tpu.memory_space<vmem>>, vector<1x1536xf32>
    %7 = vector.broadcast %6 : vector<1x1536xf32> to vector<8x1536xf32>
    %8 = arith.addf %5, %7 : vector<8x1536xf32>
    %cst_6 = arith.constant 0.000000e+00 : f32
    %9 = vector.broadcast %cst_6 : f32 to vector<8x1536xf32>
    %10 = arith.maximumf %8, %9 : vector<8x1536xf32>
    %c0_7 = arith.constant 0 : index
    %c0_8 = arith.constant 0 : index
    %11 = vector.load %arg9[%c0_7, %c0_8] : memref<8x384xf32, #tpu.memory_space<vmem>>, vector<8x384xf32>
    %12 = arith.truncf %10 : vector<8x1536xf32> to vector<8x1536xbf16>
    %c0_9 = arith.constant 0 : index
    %c0_10 = arith.constant 0 : index
    %13 = vector.load %arg6[%c0_9, %c0_10] : memref<1536x384xbf16, #tpu.memory_space<vmem>>, vector<1536x384xbf16>
    %cst_11 = arith.constant dense<0.000000e+00> : vector<8x384xf32>
    %14 = tpu.matmul %12, %13, %cst_11 {dimension_numbers = #tpu.dot_dimension_numbers<[1], [0], [0], [1], [0, 0, 1, 1], [], []>} : vector<8x1536xbf16>, vector<1536x384xbf16>, vector<8x384xf32> -> vector<8x384xf32>
    %15 = arith.addf %11, %14 : vector<8x384xf32>
    %c0_12 = arith.constant 0 : index
    %c0_13 = arith.constant 0 : index
    %16 = vector.load %arg9[%c0_12, %c0_13] : memref<8x384xf32, #tpu.memory_space<vmem>>, vector<8x384xf32>
    tpu.vector_store %arg9[%c0_12, %c0_13], %15 {strides = array<i32>} : memref<8x384xf32, #tpu.memory_space<vmem>>, vector<8x384xf32>,
    %c0_i32_14 = arith.constant 0 : i32
    %17 = arith.cmpi eq, %arg1, %c0_i32_14 : i32
    %18 = arith.extui %17 : i1 to i32
    %c0_i32_15 = arith.constant 0 : i32
    %19 = arith.cmpi ne, %18, %c0_i32_15 : i32
    scf.if %19 {
      %c0_16 = arith.constant 0 : index
      %c0_17 = arith.constant 0 : index
      %20 = vector.load %arg9[%c0_16, %c0_17] : memref<8x384xf32, #tpu.memory_space<vmem>>, vector<8x384xf32>
      %c0_18 = arith.constant 0 : index
      %c0_19 = arith.constant 0 : index
      %21 = vector.load %arg7[%c0_18, %c0_19] : memref<1x384xf32, #tpu.memory_space<vmem>>, vector<1x384xf32>
      %22 = vector.broadcast %21 : vector<1x384xf32> to vector<8x384xf32>
      %23 = arith.addf %20, %22 : vector<8x384xf32>
      %c0_20 = arith.constant 0 : index
      %c0_21 = arith.constant 0 : index
      %24 = vector.load %arg8[%c0_20, %c0_21] : memref<8x384xf32, #tpu.memory_space<vmem>>, vector<8x384xf32>
      tpu.vector_store %arg8[%c0_20, %c0_21], %23 {strides = array<i32>} : memref<8x384xf32, #tpu.memory_space<vmem>>, vector<8x384xf32>,
    } else {
    }
    return
  }
  func.func @transform_0(%arg0: i32, %arg1: i32, %arg2: memref<1xi32, #tpu.memory_space<smem>>) -> (i32, i32) {
    %c0_i32 = arith.constant 0 : i32
    %c0_i32_0 = arith.constant 0 : i32
    return %arg0, %c0_i32 : i32, i32
  }
  func.func @transform_1(%arg0: i32, %arg1: i32, %arg2: memref<1xi32, #tpu.memory_space<smem>>) -> (i32, i32) {
    %c0_i32 = arith.constant 0 : i32
    %c0_i32_0 = arith.constant 0 : i32
    return %c0_i32, %arg1 : i32, i32
  }
  func.func @transform_2(%arg0: i32, %arg1: i32, %arg2: memref<1xi32, #tpu.memory_space<smem>>) -> (i32, i32) {
    %c0_i32 = arith.constant 0 : i32
    %c0_i32_0 = arith.constant 0 : i32
    return %c0_i32, %arg1 : i32, i32
  }
  func.func @transform_3(%arg0: i32, %arg1: i32, %arg2: memref<1xi32, #tpu.memory_space<smem>>) -> (i32, i32) {
    %c0_i32 = arith.constant 0 : i32
    %c0_i32_0 = arith.constant 0 : i32
    return %arg1, %c0_i32 : i32, i32
  }
  func.func @transform_4(%arg0: i32, %arg1: i32, %arg2: memref<1xi32, #tpu.memory_space<smem>>) -> (i32, i32) {
    %c0_i32 = arith.constant 0 : i32
    %c0_i32_0 = arith.constant 0 : i32
    %c0_i32_1 = arith.constant 0 : i32
    return %c0_i32, %c0_i32_0 : i32, i32
  }
  func.func @transform_5(%arg0: i32, %arg1: i32, %arg2: memref<1xi32, #tpu.memory_space<smem>>) -> (i32, i32) {
    %c0_i32 = arith.constant 0 : i32
    %c0_i32_0 = arith.constant 0 : i32
    return %arg0, %c0_i32 : i32, i32
  }
}

</mosaic_0001>

<llo_original>
// kernel: tpu_custom_call.1
$region0: #{tpu_custom_call.1}
  #allocation0 [shape = 'u32[]', space=smem, size = 0x4, offset = 0x4, fixed_abs, tag = 'smem constant byte address 0x4 - core index']
  #allocation1 [shape = 'u32[144,128]{1,0:T(1,128)}', space=vmem, size = 0x12000, scoped, tag = 'internal scratch']
  #allocation2 [shape = 'f32[8,384]{1,0:T(8,128)}', space=vmem, size = 0x3000, scoped, tag = 'scratch operand']
  #allocation3 [shape = 's32[1]{0}', space=sflag, size = 0x4, scoped, tag = 'scoped memory for tpu_custom_call.1']
  #allocation4 [shape = 's32[1]{0:T(128)S(6)}', space=smem, size = 0x200, scoped, tag = 'prefetched SMEM operand 0']
  %s0 = inlined_call_operand.<no memory space> [shape: s32[1], index: 0, kind: input, shape index: {}]
  %s1 = inlined_call_operand.hbm [shape: bf16[16,384], index: 1, kind: input, shape index: {}]
  %s2 = inlined_call_operand.hbm [shape: bf16[384,1536], index: 2, kind: input, shape index: {}]
  %s3 = inlined_call_operand.hbm [shape: f32[1,1536], index: 3, kind: input, shape index: {}]
  %s4 = inlined_call_operand.hbm [shape: bf16[1536,384], index: 4, kind: input, shape index: {}]
  %s5 = inlined_call_operand.hbm [shape: f32[1,384], index: 5, kind: input, shape index: {}]
  %s6 = inlined_call_operand.hbm [shape: f32[16,384], index: 6, kind: output, shape index: {}]
  %s7 = sld [smem:[#allocation0]]
  $region81: #{tpu_custom_call.1} parent=0
    _
  %s9 = ssub.s32 1, %s7
  %s10 = scalar_select 0, %s9, %s7
  %11 = sst [smem:[#allocation4]] %s0
  $region1: #{tpu_custom_call.1} parent=0
    #allocation5 [shape = 'u8[12288]{0}', space=vmem, size = 0x3000, scoped, tag = 'input window, operand 1']
    #allocation6 [shape = 's32[2]{0}', space=sflag, size = 0x8, scoped, tag = 'scoped memory for tpu_custom_call.1']
    #allocation7 [shape = 's32[2]{0}', space=sflag, size = 0x8, scoped, tag = 'scoped memory for tpu_custom_call.1']
    #allocation8 [shape = 'u8[1179648]{0}', space=vmem, size = 0x120000, scoped, tag = 'input window, operand 2, single buffered']
    #allocation9 [shape = 's32[1]{0}', space=sflag, size = 0x4, scoped, tag = 'scoped memory for tpu_custom_call.1']
    #allocation10 [shape = 'u8[6144]{0}', space=vmem, size = 0x1800, scoped, tag = 'input window, operand 3, single buffered']
    #allocation11 [shape = 'u8[1179648]{0}', space=vmem, size = 0x120000, scoped, tag = 'input window, operand 4, single buffered']
    #allocation12 [shape = 's32[1]{0}', space=sflag, size = 0x4, scoped, tag = 'scoped memory for tpu_custom_call.1']
    #allocation13 [shape = 'u8[1536]{0}', space=vmem, size = 0x800, scoped, tag = 'input window, operand 5, single buffered']
    #allocation14 [shape = 'u8[24576]{0}', space=vmem, size = 0x6000, scoped, tag = 'output window, operand 0']
    %12 = vsyncpa [#allocation6], 0
    %s13 = scalar_lea.sflag [#allocation6], 1
    %14 = vsyncpa %s13, 0
    %15 = vsyncpa [#allocation9], 0
    %16 = vsyncpa [#allocation12], 0
    %17 = vsyncpa [#allocation7], 0
    %s18 = scalar_lea.sflag [#allocation7], 1
    %19 = vsyncpa %s18, 0
    loop: start=0, step=1, limit=4
    $region2: #{tpu_custom_call.1} parent=1 // loop_pre_header
      _
    $region3: #{tpu_custom_call.1} parent=1 // loop_header
      %s21 = sphi 0, %s25
      %p22 = scmp.ge.s32.totalorder %s21, 4
      %s28 = sphi 0, %s40
      %s29 = sphi 0, %s36
      %s30 = sphi 0, %s28
      %s31 = sphi 0, %s29
      %s32 = sphi 0, %s30
      %s33 = sphi 0, %s31
      %s43 = sphi 0, %s45
      %s46 = sphi 0, %s43
      %s47 = sphi 0, %s46
      %s63 = sphi 0, %s47
      %s69 = sphi 0, %s71
      %s72 = sphi 0, %s69
      %s73 = sphi 0, %s72
      %s89 = sphi 0, %s73
      %s95 = sphi 0, %s97
      %s98 = sphi 0, %s95
      %s99 = sphi 0, %s98
      %s115 = sphi 0, %s99
      %s121 = sphi 0, %s123
      %s124 = sphi 0, %s121
      %s125 = sphi 0, %s124
      %s141 = sphi 0, %s125
      %s145 = sphi 0, %s145
      %s147 = sphi 0, %s145
      %s148 = sphi 0, %s147
      %s162 = sphi 0, %s148
      %s168 = sphi 0, %s170
      %s171 = sphi 0, %s168
      %s172 = sphi 0, %s171
      %s188 = sphi 0, %s172
    $region4: #{tpu_custom_call.1} parent=1 // loop_header_branch
      %24 = sbr.rel (%p22) target = $region8
    $region5: #{tpu_custom_call.1} parent=1 // loop_body
      %s26 = ssub.s32 %s21, 1
      %s27 = ssub.s32 %s21, 2
      %s34 = sadd.s32 1, %s29
      %p35 = scmp.ge.s32.totalorder %s34, 1
      %s36 = scalar_select %p35, 0, %s34
      %s37 = sadd.s32 1, %s28
      %s38 = scalar_select %p35, %s37, %s28
      %p39 = scmp.ge.s32.totalorder %s38, 2
      %s40 = scalar_select %p39, 0, %s38
      %s41 = ssub.s32 %s28, %s40
      %p42 = scmp.eq.s32.totalorder %s41, 0
      %s44 = sadd.s32 %s43, 1
      %s45 = scalar_select %p42, %s43, %s44
      %p48 = pneg %p42
      %p49 = scmp.eq.s32.totalorder %s21, 1
      %p50 = por %p48, %p49
      %p51 = scmp.ne.s32.totalorder %s43, %s46
      %p52 = scmp.eq.s32.totalorder %s21, 0
      %p53 = por %p51, %p52
      %p54 = scmp.ne.s32.totalorder %s43, %s46
      %p55 = scmp.eq.s32.totalorder %s26, 1
      %p56 = por %p54, %p55
      %p57 = scmp.ne.s32.totalorder %s46, %s47
      %p58 = scmp.eq.s32.totalorder %s26, 0
      %p59 = por %p57, %p58
      %p60 = scmp.ne.s32.totalorder %s46, %s47
      %p61 = scmp.eq.s32.totalorder %s27, 1
      %p62 = por %p60, %p61
      %p64 = scmp.ne.s32.totalorder %s47, %s63
      %p65 = scmp.eq.s32.totalorder %s27, 0
      %p66 = por %p64, %p65
      %s67 = ssub.s32 %s29, %s36
      %p68 = scmp.eq.s32.totalorder %s67, 0
      %s70 = sadd.s32 %s69, 1
      %s71 = scalar_select %p68, %s69, %s70
      %p74 = pneg %p68
      %p75 = scmp.eq.s32.totalorder %s21, 1
      %p76 = por %p74, %p75
      %p77 = scmp.ne.s32.totalorder %s69, %s72
      %p78 = scmp.eq.s32.totalorder %s21, 0
      %p79 = por %p77, %p78
      %p80 = scmp.ne.s32.totalorder %s69, %s72
      %p81 = scmp.eq.s32.totalorder %s26, 1
      %p82 = por %p80, %p81
      %p83 = scmp.ne.s32.totalorder %s72, %s73
      %p84 = scmp.eq.s32.totalorder %s26, 0
      %p85 = por %p83, %p84
      %p86 = scmp.ne.s32.totalorder %s72, %s73
      %p87 = scmp.eq.s32.totalorder %s27, 1
      %p88 = por %p86, %p87
      %p90 = scmp.ne.s32.totalorder %s73, %s89
      %p91 = scmp.eq.s32.totalorder %s27, 0
      %p92 = por %p90, %p91
      %s93 = ssub.s32 %s29, %s36
      %p94 = scmp.eq.s32.totalorder %s93, 0
      %s96 = sadd.s32 %s95, 1
      %s97 = scalar_select %p94, %s95, %s96
      %p100 = pneg %p94
      %p101 = scmp.eq.s32.totalorder %s21, 1
      %p102 = por %p100, %p101
      %p103 = scmp.ne.s32.totalorder %s95, %s98
      %p104 = scmp.eq.s32.totalorder %s21, 0
      %p105 = por %p103, %p104
      %p106 = scmp.ne.s32.totalorder %s95, %s98
      %p107 = scmp.eq.s32.totalorder %s26, 1
      %p108 = por %p106, %p107
      %p109 = scmp.ne.s32.totalorder %s98, %s99
      %p110 = scmp.eq.s32.totalorder %s26, 0
      %p111 = por %p109, %p110
      %p112 = scmp.ne.s32.totalorder %s98, %s99
      %p113 = scmp.eq.s32.totalorder %s27, 1
      %p114 = por %p112, %p113
      %p116 = scmp.ne.s32.totalorder %s99, %s115
      %p117 = scmp.eq.s32.totalorder %s27, 0
      %p118 = por %p116, %p117
      %s119 = ssub.s32 %s29, %s36
      %p120 = scmp.eq.s32.totalorder %s119, 0
      %s122 = sadd.s32 %s121, 1
      %s123 = scalar_select %p120, %s121, %s122
      %p126 = pneg %p120
      %p127 = scmp.eq.s32.totalorder %s21, 1
      %p128 = por %p126, %p127
      %p129 = scmp.ne.s32.totalorder %s121, %s124
      %p130 = scmp.eq.s32.totalorder %s21, 0
      %p131 = por %p129, %p130
      %p132 = scmp.ne.s32.totalorder %s121, %s124
      %p133 = scmp.eq.s32.totalorder %s26, 1
      %p134 = por %p132, %p133
      %p135 = scmp.ne.s32.totalorder %s124, %s125
      %p136 = scmp.eq.s32.totalorder %s26, 0
      %p137 = por %p135, %p136
      %p138 = scmp.ne.s32.totalorder %s124, %s125
      %p139 = scmp.eq.s32.totalorder %s27, 1
      %p140 = por %p138, %p139
      %p142 = scmp.ne.s32.totalorder %s125, %s141
      %p143 = scmp.eq.s32.totalorder %s27, 0
      %p144 = por %p142, %p143
      %s146 = sadd.s32 %s145, 1
      %p149 = scmp.eq.s32.totalorder %s21, 1
      %p150 = scmp.ne.s32.totalorder %s145, %s147
      %p151 = scmp.eq.s32.totalorder %s21, 0
      %p152 = por %p150, %p151
      %p153 = scmp.ne.s32.totalorder %s145, %s147
      %p154 = scmp.eq.s32.totalorder %s26, 1
      %p155 = por %p153, %p154
      %p156 = scmp.ne.s32.totalorder %s147, %s148
      %p157 = scmp.eq.s32.totalorder %s26, 0
      %p158 = por %p156, %p157
      %p159 = scmp.ne.s32.totalorder %s147, %s148
      %p160 = scmp.eq.s32.totalorder %s27, 1
      %p161 = por %p159, %p160
      %p163 = scmp.ne.s32.totalorder %s148, %s162
      %p164 = scmp.eq.s32.totalorder %s27, 0
      %p165 = por %p163, %p164
      %s166 = ssub.s32 %s28, %s40
      %p167 = scmp.eq.s32.totalorder %s166, 0
      %s169 = sadd.s32 %s168, 1
      %s170 = scalar_select %p167, %s168, %s169
      %p173 = pneg %p167
      %p174 = scmp.eq.s32.totalorder %s21, 1
      %p175 = por %p173, %p174
      %p176 = scmp.ne.s32.totalorder %s168, %s171
      %p177 = scmp.eq.s32.totalorder %s21, 0
      %p178 = por %p176, %p177
      %p179 = scmp.ne.s32.totalorder %s168, %s171
      %p180 = scmp.eq.s32.totalorder %s26, 1
      %p181 = por %p179, %p180
      %p182 = scmp.ne.s32.totalorder %s171, %s172
      %p183 = scmp.eq.s32.totalorder %s26, 0
      %p184 = por %p182, %p183
      %p185 = scmp.ne.s32.totalorder %s171, %s172
      %p186 = scmp.eq.s32.totalorder %s27, 1
      %p187 = por %p185, %p186
      %p189 = scmp.ne.s32.totalorder %s172, %s188
      %p190 = scmp.eq.s32.totalorder %s27, 0
      %p191 = por %p189, %p190
      %p192 = scmp.le.s32.totalorder 1, %s21
      %p193 = scmp.lt.s32.totalorder %s21, 3
      %p194 = pnand %p192, %p193
      %p195 = pneg %p194
      // Predicated region
      $region9: #{tpu_custom_call.1} parent=5 // pred_check
        _
      $region10: #{tpu_custom_call.1} parent=5 // pred_check_branch
        %197 = sbr.rel (%p194) target = $region12
      $region11: #{tpu_custom_call.1} parent=5 // pred_region
        %s198 = ssub.s32 %s21, 1
        // Predicated region
        $region13: #{tpu_custom_call.1} parent=11 // pred_check
          %p199 = pneg %p85
        $region14: #{tpu_custom_call.1} parent=11 // pred_check_branch
          %201 = sbr.rel (%p199) target = $region16
        $region15: #{tpu_custom_call.1} parent=11 // pred_region
          %s202 = smul.u32 12, %s31
          %s204 = ssub.s32 36864, 36864
          %205 = vsyncadd [#allocation9], %s204
          %s206 = smul.addr %s202, 64
          %s207 = scalar_lea.hbm %s2, %s206
          %s208 = sshll.u32 [#allocation8], 4
          %s209 = int_to_ptr.vmem [resolvable:$true] %s208
          %214 = dma.hbm_to_vmem [thread:$0]  %s207, 36864, %s209, [#allocation9], 768, 768, 48
        $region16: #{tpu_custom_call.1} parent=11 // pred_fallthru
          _
        // Predicated region
        $region17: #{tpu_custom_call.1} parent=11 // pred_check
          %p215 = pneg %p111
        $region18: #{tpu_custom_call.1} parent=11 // pred_check_branch
          %217 = sbr.rel (%p215) target = $region20
        $region19: #{tpu_custom_call.1} parent=11 // pred_region
          %s218 = smul.u32 12, %s31
          %s220 = ssub.s32 192, 192
          %221 = vsyncadd [#allocation9], %s220
          %s222 = smul.addr %s218, 16
          %s223 = scalar_lea.hbm %s3, %s222
          %s225 = sshll.u32 [#allocation10], 4
          %s226 = int_to_ptr.vmem [resolvable:$true] %s225
          %228 = dma.hbm_to_vmem [thread:$0]  %s223, 192, %s226, [#allocation9]
        $region20: #{tpu_custom_call.1} parent=11 // pred_fallthru
          _
        // Predicated region
        $region21: #{tpu_custom_call.1} parent=11 // pred_check
          %p229 = pneg %p137
        $region22: #{tpu_custom_call.1} parent=11 // pred_check_branch
          %231 = sbr.rel (%p229) target = $region24
        $region23: #{tpu_custom_call.1} parent=11 // pred_region
          %s232 = smul.u32 192, %s31
          %s234 = ssub.s32 36864, 36864
          %235 = vsyncadd [#allocation12], %s234
          %s236 = smul.addr %s232, 3
          %s237 = smul.addr %s236, 64
          %s238 = scalar_lea.hbm %s4, %s237
          %s239 = sshll.u32 [#allocation11], 4
          %s240 = int_to_ptr.vmem [resolvable:$true] %s239
          %245 = dma.hbm_to_vmem [thread:$0]  %s238, 36864, %s240, [#allocation12], 192, 192, 12
        $region24: #{tpu_custom_call.1} parent=11 // pred_fallthru
          _
        // Predicated region
        $region25: #{tpu_custom_call.1} parent=11 // pred_check
          %p246 = pneg %p158
        $region26: #{tpu_custom_call.1} parent=11 // pred_check_branch
          %248 = sbr.rel (%p246) target = $region28
        $region27: #{tpu_custom_call.1} parent=11 // pred_region
          %s250 = ssub.s32 48, 48
          %251 = vsyncadd [#allocation12], %s250
          %s253 = sshll.u32 [#allocation13], 4
          %s254 = int_to_ptr.vmem [resolvable:$true] %s253
          %256 = dma.hbm_to_vmem [thread:$0]  %s5, 48, %s254, [#allocation12]
        $region28: #{tpu_custom_call.1} parent=11 // pred_fallthru
          _
      $region12: #{tpu_custom_call.1} parent=5 // pred_fallthru
        _
      %p257 = scmp.lt.s32.totalorder %s21, 2
      // Predicated region
      $region29: #{tpu_custom_call.1} parent=5 // pred_check
        %p258 = pneg %p257
      $region30: #{tpu_custom_call.1} parent=5 // pred_check_branch
        %260 = sbr.rel (%p258) target = $region32
      $region31: #{tpu_custom_call.1} parent=5 // pred_region
        // Predicated region
        $region33: #{tpu_custom_call.1} parent=31 // pred_check
          %p261 = pneg %p53
        $region34: #{tpu_custom_call.1} parent=31 // pred_check_branch
          %263 = sbr.rel (%p261) target = $region36
        $region35: #{tpu_custom_call.1} parent=31 // pred_region
          %s264 = sand.u32 %s43, 1
          %s265 = scalar_lea.sflag [#allocation6], %s264
          %s266 = sand.u32 %s43, 1
          %s267 = smul.addr %s266, 12
          %s268 = scalar_lea.vmem [#allocation5], %s267
          %s270 = ssub.s32 192, 192
          %271 = vsyncadd %s265, %s270
          %s272 = smul.addr %s28, 3
          %s273 = smul.addr %s272, 64
          %s274 = scalar_lea.hbm %s1, %s273
          %s276 = sshll.u32 %s268, 4
          %s277 = int_to_ptr.vmem [resolvable:$true] %s276
          %279 = dma.hbm_to_vmem [thread:$0]  %s274, 192, %s277, %s265
        $region36: #{tpu_custom_call.1} parent=31 // pred_fallthru
          _
      $region32: #{tpu_custom_call.1} parent=5 // pred_fallthru
        _
      %p280 = scmp.le.s32.totalorder 1, %s21
      %p281 = scmp.lt.s32.totalorder %s21, 3
      %p282 = pnand %p280, %p281
      %p283 = pneg %p282
      // Predicated region
      $region37: #{tpu_custom_call.1} parent=5 // pred_check
        _
      $region38: #{tpu_custom_call.1} parent=5 // pred_check_branch
        %285 = sbr.rel (%p282) target = $region40
      $region39: #{tpu_custom_call.1} parent=5 // pred_region
        %s286 = ssub.s32 %s21, 1
        %s287 = sand.u32 %s46, 1
        %s288 = scalar_lea.sflag [#allocation6], %s287
        %s289 = sand.u32 %s46, 1
        %s290 = smul.addr %s289, 12
        %s291 = scalar_lea.vmem [#allocation5], %s290
        // Predicated region
        $region41: #{tpu_custom_call.1} parent=39 // pred_check
          %p292 = pneg %p59
        $region42: #{tpu_custom_call.1} parent=39 // pred_check_branch
          %294 = sbr.rel (%p292) target = $region44
        $region43: #{tpu_custom_call.1} parent=39 // pred_region
          %295 = dma.done %s288, 192
        $region44: #{tpu_custom_call.1} parent=39 // pred_fallthru
          _
        // Predicated region
        $region45: #{tpu_custom_call.1} parent=39 // pred_check
          %p296 = pneg %p85
        $region46: #{tpu_custom_call.1} parent=39 // pred_check_branch
          %298 = sbr.rel (%p296) target = $region48
        $region47: #{tpu_custom_call.1} parent=39 // pred_region
          %299 = dma.done [#allocation9], 36864
        $region48: #{tpu_custom_call.1} parent=39 // pred_fallthru
          _
        // Predicated region
        $region49: #{tpu_custom_call.1} parent=39 // pred_check
          %p300 = pneg %p111
        $region50: #{tpu_custom_call.1} parent=39 // pred_check_branch
          %302 = sbr.rel (%p300) target = $region52
        $region51: #{tpu_custom_call.1} parent=39 // pred_region
          %303 = dma.done [#allocation9], 192
        $region52: #{tpu_custom_call.1} parent=39 // pred_fallthru
          _
        // Predicated region
        $region53: #{tpu_custom_call.1} parent=39 // pred_check
          %p304 = pneg %p137
        $region54: #{tpu_custom_call.1} parent=39 // pred_check_branch
          %306 = sbr.rel (%p304) target = $region56
        $region55: #{tpu_custom_call.1} parent=39 // pred_region
          %307 = dma.done [#allocation12], 36864
        $region56: #{tpu_custom_call.1} parent=39 // pred_fallthru
          _
        // Predicated region
        $region57: #{tpu_custom_call.1} parent=39 // pred_check
          %p308 = pneg %p158
        $region58: #{tpu_custom_call.1} parent=39 // pred_check_branch
          %310 = sbr.rel (%p308) target = $region60
        $region59: #{tpu_custom_call.1} parent=39 // pred_region
          %311 = dma.done [#allocation12], 48
        $region60: #{tpu_custom_call.1} parent=39 // pred_fallthru
          _
        %s312 = sand.u32 %s46, 1
        %s313 = scalar_lea.sflag [#allocation6], %s312
        %s314 = sand.u32 %s46, 1
        %s315 = smul.addr %s314, 12
        %s316 = scalar_lea.vmem [#allocation5], %s315
        %p317 = pneg %p59
        %p318 = pneg %p56
        %p319 = pneg %p85
        %p320 = pneg %p82
        %p321 = pneg %p111
        %p322 = pneg %p108
        %p323 = pneg %p137
        %p324 = pneg %p134
        %p325 = pneg %p158
        %p326 = pneg %p155
        %p327 = pneg %p184
        %p328 = pneg %p181
        %s329 = sand.u32 %s171, 1
        %s330 = scalar_lea.sflag [#allocation7], %s329
        %s331 = sand.u32 %s171, 1
        %s332 = smul.addr %s331, 24
        %s333 = scalar_lea.vmem [#allocation14], %s332
        %s334 = smul.u32 12, %s31
        %s335 = smul.u32 12, %s31
        %s336 = smul.u32 192, %s31
        %p338 = scmp.eq.s32.totalorder %s31, 0
        // Predicated region
        $region61: #{tpu_custom_call.1} parent=39 // pred_check
          %p339 = pneg %p338
        $region62: #{tpu_custom_call.1} parent=39 // pred_check_branch
          %341 = sbr.rel (%p339) target = $region64
        $region63: #{tpu_custom_call.1} parent=39 // pred_region
          %342 = vst [vmem:[#allocation2] sm:$0xff] 0.0
          %343 = vst [vmem:[#allocation2 + $0x8] sm:$0xff] 0.0
          %344 = vst [vmem:[#allocation2 + $0x10] sm:$0xff] 0.0
        $region64: #{tpu_custom_call.1} parent=39 // pred_fallthru
          _
        %v345 = vld [vmem:[%s291] sm:$0xff]
        %v346 = vld [vmem:[%s291 + $0x8] sm:$0xf]
        %v347 = vld [vmem:[#allocation8] sm:$0xff]
        %v348 = vld [vmem:[#allocation8 + $0x8] sm:$0xff]
        %v349 = vld [vmem:[#allocation8 + $0x10] sm:$0xff]
        %v350 = vld [vmem:[#allocation8 + $0x18] sm:$0xff]
        %v351 = vld [vmem:[#allocation8 + $0x20] sm:$0xff]
        %v352 = vld [vmem:[#allocation8 + $0x28] sm:$0xff]
        %v353 = vld [vmem:[#allocation8 + $0x30] sm:$0xff]
        %v354 = vld [vmem:[#allocation8 + $0x38] sm:$0xff]
        %v355 = vld [vmem:[#allocation8 + $0x40] sm:$0xff]
        %v356 = vld [vmem:[#allocation8 + $0x48] sm:$0xff]
        %v357 = vld [vmem:[#allocation8 + $0x50] sm:$0xff]
        %v358 = vld [vmem:[#allocation8 + $0x58] sm:$0xff]
        %v359 = vld [vmem:[#allocation8 + $0x60] sm:$0xff]
        %v360 = vld [vmem:[#allocation8 + $0x68] sm:$0xff]
        %v361 = vld [vmem:[#allocation8 + $0x70] sm:$0xff]
        %v362 = vld [vmem:[#allocation8 + $0x78] sm:$0xff]
        %v363 = vld [vmem:[#allocation8 + $0x80] sm:$0xff]
        %v364 = vld [vmem:[#allocation8 + $0x88] sm:$0xff]
        %v365 = vld [vmem:[#allocation8 + $0x90] sm:$0xff]
        %v366 = vld [vmem:[#allocation8 + $0x98] sm:$0xff]
        %v367 = vld [vmem:[#allocation8 + $0xa0] sm:$0xff]
        %v368 = vld [vmem:[#allocation8 + $0xa8] sm:$0xff]
        %v369 = vld [vmem:[#allocation8 + $0xb0] sm:$0xff]
        %v370 = vld [vmem:[#allocation8 + $0xb8] sm:$0xff]
        %v371 = vld [vmem:[#allocation8 + $0xc0] sm:$0xff]
        %v372 = vld [vmem:[#allocation8 + $0xc8] sm:$0xff]
        %v373 = vld [vmem:[#allocation8 + $0xd0] sm:$0xff]
        %v374 = vld [vmem:[#allocation8 + $0xd8] sm:$0xff]
        %v375 = vld [vmem:[#allocation8 + $0xe0] sm:$0xff]
        %v376 = vld [vmem:[#allocation8 + $0xe8] sm:$0xff]
        %v377 = vld [vmem:[#allocation8 + $0xf0] sm:$0xff]
        %v378 = vld [vmem:[#allocation8 + $0xf8] sm:$0xff]
        %v379 = vld [vmem:[#allocation8 + $0x100] sm:$0xff]
        %v380 = vld [vmem:[#allocation8 + $0x108] sm:$0xff]
        %v381 = vld [vmem:[#allocation8 + $0x110] sm:$0xff]
        %v382 = vld [vmem:[#allocation8 + $0x118] sm:$0xff]
        %v383 = vld [vmem:[#allocation8 + $0x120] sm:$0xff]
        %v384 = vld [vmem:[#allocation8 + $0x128] sm:$0xff]
        %v385 = vld [vmem:[#allocation8 + $0x130] sm:$0xff]
        %v386 = vld [vmem:[#allocation8 + $0x138] sm:$0xff]
        %v387 = vld [vmem:[#allocation8 + $0x140] sm:$0xff]
        %v388 = vld [vmem:[#allocation8 + $0x148] sm:$0xff]
        %v389 = vld [vmem:[#allocation8 + $0x150] sm:$0xff]
        %v390 = vld [vmem:[#allocation8 + $0x158] sm:$0xff]
        %v391 = vld [vmem:[#allocation8 + $0x160] sm:$0xff]
        %v392 = vld [vmem:[#allocation8 + $0x168] sm:$0xff]
        %v393 = vld [vmem:[#allocation8 + $0x170] sm:$0xff]
        %v394 = vld [vmem:[#allocation8 + $0x178] sm:$0xff]
        %v395 = vld [vmem:[#allocation8 + $0x180] sm:$0xff]
        %v396 = vld [vmem:[#allocation8 + $0x188] sm:$0xff]
        %v397 = vld [vmem:[#allocation8 + $0x190] sm:$0xff]
        %v398 = vld [vmem:[#allocation8 + $0x198] sm:$0xff]
        %v399 = vld [vmem:[#allocation8 + $0x1a0] sm:$0xff]
        %v400 = vld [vmem:[#allocation8 + $0x1a8] sm:$0xff]
        %v401 = vld [vmem:[#allocation8 + $0x1b0] sm:$0xff]
        %v402 = vld [vmem:[#allocation8 + $0x1b8] sm:$0xff]
        %v403 = vld [vmem:[#allocation8 + $0x1c0] sm:$0xff]
        %v404 = vld [vmem:[#allocation8 + $0x1c8] sm:$0xff]
        %v405 = vld [vmem:[#allocation8 + $0x1d0] sm:$0xff]
        %v406 = vld [vmem:[#allocation8 + $0x1d8] sm:$0xff]
        %v407 = vld [vmem:[#allocation8 + $0x1e0] sm:$0xff]
        %v408 = vld [vmem:[#allocation8 + $0x1e8] sm:$0xff]
        %v409 = vld [vmem:[#allocation8 + $0x1f0] sm:$0xff]
        %v410 = vld [vmem:[#allocation8 + $0x1f8] sm:$0xff]
        %v411 = vld [vmem:[#allocation8 + $0x200] sm:$0xff]
        %v412 = vld [vmem:[#allocation8 + $0x208] sm:$0xff]
        %v413 = vld [vmem:[#allocation8 + $0x210] sm:$0xff]
        %v414 = vld [vmem:[#allocation8 + $0x218] sm:$0xff]
        %v415 = vld [vmem:[#allocation8 + $0x220] sm:$0xff]
        %v416 = vld [vmem:[#allocation8 + $0x228] sm:$0xff]
        %v417 = vld [vmem:[#allocation8 + $0x230] sm:$0xff]
        %v418 = vld [vmem:[#allocation8 + $0x238] sm:$0xff]
        %v419 = vld [vmem:[#allocation8 + $0x240] sm:$0xff]
        %v420 = vld [vmem:[#allocation8 + $0x248] sm:$0xff]
        %v421 = vld [vmem:[#allocation8 + $0x250] sm:$0xff]
        %v422 = vld [vmem:[#allocation8 + $0x258] sm:$0xff]
        %v423 = vld [vmem:[#allocation8 + $0x260] sm:$0xff]
        %v424 = vld [vmem:[#allocation8 + $0x268] sm:$0xff]
        %v425 = vld [vmem:[#allocation8 + $0x270] sm:$0xff]
        %v426 = vld [vmem:[#allocation8 + $0x278] sm:$0xff]
        %v427 = vld [vmem:[#allocation8 + $0x280] sm:$0xff]
        %v428 = vld [vmem:[#allocation8 + $0x288] sm:$0xff]
        %v429 = vld [vmem:[#allocation8 + $0x290] sm:$0xff]
        %v430 = vld [vmem:[#allocation8 + $0x298] sm:$0xff]
        %v431 = vld [vmem:[#allocation8 + $0x2a0] sm:$0xff]
        %v432 = vld [vmem:[#allocation8 + $0x2a8] sm:$0xff]
        %v433 = vld [vmem:[#allocation8 + $0x2b0] sm:$0xff]
        %v434 = vld [vmem:[#allocation8 + $0x2b8] sm:$0xff]
        %v435 = vld [vmem:[#allocation8 + $0x2c0] sm:$0xff]
        %v436 = vld [vmem:[#allocation8 + $0x2c8] sm:$0xff]
        %v437 = vld [vmem:[#allocation8 + $0x2d0] sm:$0xff]
        %v438 = vld [vmem:[#allocation8 + $0x2d8] sm:$0xff]
        %v439 = vld [vmem:[#allocation8 + $0x2e0] sm:$0xff]
        %v440 = vld [vmem:[#allocation8 + $0x2e8] sm:$0xff]
        %v441 = vld [vmem:[#allocation8 + $0x2f0] sm:$0xff]
        %v442 = vld [vmem:[#allocation8 + $0x2f8] sm:$0xff]
        %v443 = vld [vmem:[#allocation8 + $0x300] sm:$0xff]
        %v444 = vld [vmem:[#allocation8 + $0x308] sm:$0xff]
        %v445 = vld [vmem:[#allocation8 + $0x310] sm:$0xff]
        %v446 = vld [vmem:[#allocation8 + $0x318] sm:$0xff]
        %v447 = vld [vmem:[#allocation8 + $0x320] sm:$0xff]
        %v448 = vld [vmem:[#allocation8 + $0x328] sm:$0xff]
        %v449 = vld [vmem:[#allocation8 + $0x330] sm:$0xff]
        %v450 = vld [vmem:[#allocation8 + $0x338] sm:$0xff]
        %v451 = vld [vmem:[#allocation8 + $0x340] sm:$0xff]
        %v452 = vld [vmem:[#allocation8 + $0x348] sm:$0xff]
        %v453 = vld [vmem:[#allocation8 + $0x350] sm:$0xff]
        %v454 = vld [vmem:[#allocation8 + $0x358] sm:$0xff]
        %v455 = vld [vmem:[#allocation8 + $0x360] sm:$0xff]
        %v456 = vld [vmem:[#allocation8 + $0x368] sm:$0xff]
        %v457 = vld [vmem:[#allocation8 + $0x370] sm:$0xff]
        %v458 = vld [vmem:[#allocation8 + $0x378] sm:$0xff]
        %v459 = vld [vmem:[#allocation8 + $0x380] sm:$0xff]
        %v460 = vld [vmem:[#allocation8 + $0x388] sm:$0xff]
        %v461 = vld [vmem:[#allocation8 + $0x390] sm:$0xff]
        %v462 = vld [vmem:[#allocation8 + $0x398] sm:$0xff]
        %v463 = vld [vmem:[#allocation8 + $0x3a0] sm:$0xff]
        %v464 = vld [vmem:[#allocation8 + $0x3a8] sm:$0xff]
        %v465 = vld [vmem:[#allocation8 + $0x3b0] sm:$0xff]
        %v466 = vld [vmem:[#allocation8 + $0x3b8] sm:$0xff]
        %v467 = vld [vmem:[#allocation8 + $0x3c0] sm:$0xff]
        %v468 = vld [vmem:[#allocation8 + $0x3c8] sm:$0xff]
        %v469 = vld [vmem:[#allocation8 + $0x3d0] sm:$0xff]
        %v470 = vld [vmem:[#allocation8 + $0x3d8] sm:$0xff]
        %v471 = vld [vmem:[#allocation8 + $0x3e0] sm:$0xff]
        %v472 = vld [vmem:[#allocation8 + $0x3e8] sm:$0xff]
        %v473 = vld [vmem:[#allocation8 + $0x3f0] sm:$0xff]
        %v474 = vld [vmem:[#allocation8 + $0x3f8] sm:$0xff]
        %v475 = vld [vmem:[#allocation8 + $0x400] sm:$0xff]
        %v476 = vld [vmem:[#allocation8 + $0x408] sm:$0xff]
        %v477 = vld [vmem:[#allocation8 + $0x410] sm:$0xff]
        %v478 = vld [vmem:[#allocation8 + $0x418] sm:$0xff]
        %v479 = vld [vmem:[#allocation8 + $0x420] sm:$0xff]
        %v480 = vld [vmem:[#allocation8 + $0x428] sm:$0xff]
        %v481 = vld [vmem:[#allocation8 + $0x430] sm:$0xff]
        %v482 = vld [vmem:[#allocation8 + $0x438] sm:$0xff]
        %v483 = vld [vmem:[#allocation8 + $0x440] sm:$0xff]
        %v484 = vld [vmem:[#allocation8 + $0x448] sm:$0xff]
        %v485 = vld [vmem:[#allocation8 + $0x450] sm:$0xff]
        %v486 = vld [vmem:[#allocation8 + $0x458] sm:$0xff]
        %v487 = vld [vmem:[#allocation8 + $0x460] sm:$0xff]
        %v488 = vld [vmem:[#allocation8 + $0x468] sm:$0xff]
        %v489 = vld [vmem:[#allocation8 + $0x470] sm:$0xff]
        %v490 = vld [vmem:[#allocation8 + $0x478] sm:$0xff]
        %v491 = vld [vmem:[#allocation8 + $0x480] sm:$0xff]
        %v492 = vld [vmem:[#allocation8 + $0x488] sm:$0xff]
        %v493 = vld [vmem:[#allocation8 + $0x490] sm:$0xff]
        %v494 = vld [vmem:[#allocation8 + $0x498] sm:$0xff]
        %v495 = vld [vmem:[#allocation8 + $0x4a0] sm:$0xff]
        %v496 = vld [vmem:[#allocation8 + $0x4a8] sm:$0xff]
        %v497 = vld [vmem:[#allocation8 + $0x4b0] sm:$0xff]
        %v498 = vld [vmem:[#allocation8 + $0x4b8] sm:$0xff]
        %v499 = vld [vmem:[#allocation8 + $0x4c0] sm:$0xff]
        %v500 = vld [vmem:[#allocation8 + $0x4c8] sm:$0xff]
        %v501 = vld [vmem:[#allocation8 + $0x4d0] sm:$0xff]
        %v502 = vld [vmem:[#allocation8 + $0x4d8] sm:$0xff]
        %v503 = vld [vmem:[#allocation8 + $0x4e0] sm:$0xff]
        %v504 = vld [vmem:[#allocation8 + $0x4e8] sm:$0xff]
        %v505 = vld [vmem:[#allocation8 + $0x4f0] sm:$0xff]
        %v506 = vld [vmem:[#allocation8 + $0x4f8] sm:$0xff]
        %v507 = vld [vmem:[#allocation8 + $0x500] sm:$0xff]
        %v508 = vld [vmem:[#allocation8 + $0x508] sm:$0xff]
        %v509 = vld [vmem:[#allocation8 + $0x510] sm:$0xff]
        %v510 = vld [vmem:[#allocation8 + $0x518] sm:$0xff]
        %v511 = vld [vmem:[#allocation8 + $0x520] sm:$0xff]
        %v512 = vld [vmem:[#allocation8 + $0x528] sm:$0xff]
        %v513 = vld [vmem:[#allocation8 + $0x530] sm:$0xff]
        %v514 = vld [vmem:[#allocation8 + $0x538] sm:$0xff]
        %v515 = vld [vmem:[#allocation8 + $0x540] sm:$0xff]
        %v516 = vld [vmem:[#allocation8 + $0x548] sm:$0xff]
        %v517 = vld [vmem:[#allocation8 + $0x550] sm:$0xff]
        %v518 = vld [vmem:[#allocation8 + $0x558] sm:$0xff]
        %v519 = vld [vmem:[#allocation8 + $0x560] sm:$0xff]
        %v520 = vld [vmem:[#allocation8 + $0x568] sm:$0xff]
        %v521 = vld [vmem:[#allocation8 + $0x570] sm:$0xff]
        %v522 = vld [vmem:[#allocation8 + $0x578] sm:$0xff]
        %v523 = vld [vmem:[#allocation8 + $0x580] sm:$0xff]
        %v524 = vld [vmem:[#allocation8 + $0x588] sm:$0xff]
        %v525 = vld [vmem:[#allocation8 + $0x590] sm:$0xff]
        %v526 = vld [vmem:[#allocation8 + $0x598] sm:$0xff]
        %v527 = vld [vmem:[#allocation8 + $0x5a0] sm:$0xff]
        %v528 = vld [vmem:[#allocation8 + $0x5a8] sm:$0xff]
        %v529 = vld [vmem:[#allocation8 + $0x5b0] sm:$0xff]
        %v530 = vld [vmem:[#allocation8 + $0x5b8] sm:$0xff]
        %v531 = vld [vmem:[#allocation8 + $0x5c0] sm:$0xff]
        %v532 = vld [vmem:[#allocation8 + $0x5c8] sm:$0xff]
        %v533 = vld [vmem:[#allocation8 + $0x5d0] sm:$0xff]
        %v534 = vld [vmem:[#allocation8 + $0x5d8] sm:$0xff]
        %v535 = vld [vmem:[#allocation8 + $0x5e0] sm:$0xff]
        %v536 = vld [vmem:[#allocation8 + $0x5e8] sm:$0xff]
        %v537 = vld [vmem:[#allocation8 + $0x5f0] sm:$0xff]
        %v538 = vld [vmem:[#allocation8 + $0x5f8] sm:$0xff]
        %v539 = vld [vmem:[#allocation8 + $0x600] sm:$0xff]
        %v540 = vld [vmem:[#allocation8 + $0x608] sm:$0xff]
        %v541 = vld [vmem:[#allocation8 + $0x610] sm:$0xff]
        %v542 = vld [vmem:[#allocation8 + $0x618] sm:$0xff]
        %v543 = vld [vmem:[#allocation8 + $0x620] sm:$0xff]
        %v544 = vld [vmem:[#allocation8 + $0x628] sm:$0xff]
        %v545 = vld [vmem:[#allocation8 + $0x630] sm:$0xff]
        %v546 = vld [vmem:[#allocation8 + $0x638] sm:$0xff]
        %v547 = vld [vmem:[#allocation8 + $0x640] sm:$0xff]
        %v548 = vld [vmem:[#allocation8 + $0x648] sm:$0xff]
        %v549 = vld [vmem:[#allocation8 + $0x650] sm:$0xff]
        %v550 = vld [vmem:[#allocation8 + $0x658] sm:$0xff]
        %v551 = vld [vmem:[#allocation8 + $0x660] sm:$0xff]
        %v552 = vld [vmem:[#allocation8 + $0x668] sm:$0xff]
        %v553 = vld [vmem:[#allocation8 + $0x670] sm:$0xff]
        %v554 = vld [vmem:[#allocation8 + $0x678] sm:$0xff]
        %v555 = vld [vmem:[#allocation8 + $0x680] sm:$0xff]
        %v556 = vld [vmem:[#allocation8 + $0x688] sm:$0xff]
        %v557 = vld [vmem:[#allocation8 + $0x690] sm:$0xff]
        %v558 = vld [vmem:[#allocation8 + $0x698] sm:$0xff]
        %v559 = vld [vmem:[#allocation8 + $0x6a0] sm:$0xff]
        %v560 = vld [vmem:[#allocation8 + $0x6a8] sm:$0xff]
        %v561 = vld [vmem:[#allocation8 + $0x6b0] sm:$0xff]
        %v562 = vld [vmem:[#allocation8 + $0x6b8] sm:$0xff]
        %v563 = vld [vmem:[#allocation8 + $0x6c0] sm:$0xff]
        %v564 = vld [vmem:[#allocation8 + $0x6c8] sm:$0xff]
        %v565 = vld [vmem:[#allocation8 + $0x6d0] sm:$0xff]
        %v566 = vld [vmem:[#allocation8 + $0x6d8] sm:$0xff]
        %v567 = vld [vmem:[#allocation8 + $0x6e0] sm:$0xff]
        %v568 = vld [vmem:[#allocation8 + $0x6e8] sm:$0xff]
        %v569 = vld [vmem:[#allocation8 + $0x6f0] sm:$0xff]
        %v570 = vld [vmem:[#allocation8 + $0x6f8] sm:$0xff]
        %v571 = vld [vmem:[#allocation8 + $0x700] sm:$0xff]
        %v572 = vld [vmem:[#allocation8 + $0x708] sm:$0xff]
        %v573 = vld [vmem:[#allocation8 + $0x710] sm:$0xff]
        %v574 = vld [vmem:[#allocation8 + $0x718] sm:$0xff]
        %v575 = vld [vmem:[#allocation8 + $0x720] sm:$0xff]
        %v576 = vld [vmem:[#allocation8 + $0x728] sm:$0xff]
        %v577 = vld [vmem:[#allocation8 + $0x730] sm:$0xff]
        %v578 = vld [vmem:[#allocation8 + $0x738] sm:$0xff]
        %v579 = vld [vmem:[#allocation8 + $0x740] sm:$0xff]
        %v580 = vld [vmem:[#allocation8 + $0x748] sm:$0xff]
        %v581 = vld [vmem:[#allocation8 + $0x750] sm:$0xff]
        %v582 = vld [vmem:[#allocation8 + $0x758] sm:$0xff]
        %v583 = vld [vmem:[#allocation8 + $0x760] sm:$0xff]
        %v584 = vld [vmem:[#allocation8 + $0x768] sm:$0xff]
        %v585 = vld [vmem:[#allocation8 + $0x770] sm:$0xff]
        %v586 = vld [vmem:[#allocation8 + $0x778] sm:$0xff]
        %v587 = vld [vmem:[#allocation8 + $0x780] sm:$0xff]
        %v588 = vld [vmem:[#allocation8 + $0x788] sm:$0xff]
        %v589 = vld [vmem:[#allocation8 + $0x790] sm:$0xff]
        %v590 = vld [vmem:[#allocation8 + $0x798] sm:$0xff]
        %v591 = vld [vmem:[#allocation8 + $0x7a0] sm:$0xff]
        %v592 = vld [vmem:[#allocation8 + $0x7a8] sm:$0xff]
        %v593 = vld [vmem:[#allocation8 + $0x7b0] sm:$0xff]
        %v594 = vld [vmem:[#allocation8 + $0x7b8] sm:$0xff]
        %v595 = vld [vmem:[#allocation8 + $0x7c0] sm:$0xff]
        %v596 = vld [vmem:[#allocation8 + $0x7c8] sm:$0xff]
        %v597 = vld [vmem:[#allocation8 + $0x7d0] sm:$0xff]
        %v598 = vld [vmem:[#allocation8 + $0x7d8] sm:$0xff]
        %v599 = vld [vmem:[#allocation8 + $0x7e0] sm:$0xff]
        %v600 = vld [vmem:[#allocation8 + $0x7e8] sm:$0xff]
        %v601 = vld [vmem:[#allocation8 + $0x7f0] sm:$0xff]
        %v602 = vld [vmem:[#allocation8 + $0x7f8] sm:$0xff]
        %v603 = vld [vmem:[#allocation8 + $0x800] sm:$0xff]
        %v604 = vld [vmem:[#allocation8 + $0x808] sm:$0xff]
        %v605 = vld [vmem:[#allocation8 + $0x810] sm:$0xff]
        %v606 = vld [vmem:[#allocation8 + $0x818] sm:$0xff]
        %v607 = vld [vmem:[#allocation8 + $0x820] sm:$0xff]
        %v608 = vld [vmem:[#allocation8 + $0x828] sm:$0xff]
        %v609 = vld [vmem:[#allocation8 + $0x830] sm:$0xff]
        %v610 = vld [vmem:[#allocation8 + $0x838] sm:$0xff]
        %v611 = vld [vmem:[#allocation8 + $0x840] sm:$0xff]
        %v612 = vld [vmem:[#allocation8 + $0x848] sm:$0xff]
        %v613 = vld [vmem:[#allocation8 + $0x850] sm:$0xff]
        %v614 = vld [vmem:[#allocation8 + $0x858] sm:$0xff]
        %v615 = vld [vmem:[#allocation8 + $0x860] sm:$0xff]
        %v616 = vld [vmem:[#allocation8 + $0x868] sm:$0xff]
        %v617 = vld [vmem:[#allocation8 + $0x870] sm:$0xff]
        %v618 = vld [vmem:[#allocation8 + $0x878] sm:$0xff]
        %v619 = vld [vmem:[#allocation8 + $0x880] sm:$0xff]
        %v620 = vld [vmem:[#allocation8 + $0x888] sm:$0xff]
        %v621 = vld [vmem:[#allocation8 + $0x890] sm:$0xff]
        %v622 = vld [vmem:[#allocation8 + $0x898] sm:$0xff]
        %v623 = vld [vmem:[#allocation8 + $0x8a0] sm:$0xff]
        %v624 = vld [vmem:[#allocation8 + $0x8a8] sm:$0xff]
        %v625 = vld [vmem:[#allocation8 + $0x8b0] sm:$0xff]
        %v626 = vld [vmem:[#allocation8 + $0x8b8] sm:$0xff]
        %v627 = vld [vmem:[#allocation8 + $0x8c0] sm:$0xff]
        %v628 = vld [vmem:[#allocation8 + $0x8c8] sm:$0xff]
        %v629 = vld [vmem:[#allocation8 + $0x8d0] sm:$0xff]
        %v630 = vld [vmem:[#allocation8 + $0x8d8] sm:$0xff]
        %v631 = vld [vmem:[#allocation8 + $0x8e0] sm:$0xff]
        %v632 = vld [vmem:[#allocation8 + $0x8e8] sm:$0xff]
        %v633 = vld [vmem:[#allocation8 + $0x8f0] sm:$0xff]
        %v634 = vld [vmem:[#allocation8 + $0x8f8] sm:$0xff]
        %v635 = vld [vmem:[#allocation10] sm:$0xff]
        %v636 = vld [vmem:[#allocation10 + $0x8] sm:$0xf]
        %v639 = vlaneseq
        %v640 = vshrl.u32 %v639, 7
        %v641 = vsub.s32 0, %v640
        %v642 = vrot.slane %v635, %v641
        %v643 = vlaneseq
        %v644 = vshrl.u32 %v643, 7
        %v645 = vsub.s32 1, %v644
        %v646 = vrot.slane %v635, %v645
        %v647 = vlaneseq
        %v648 = vshrl.u32 %v647, 7
        %v649 = vsub.s32 2, %v648
        %v650 = vrot.slane %v635, %v649
        %v651 = vlaneseq
        %v652 = vshrl.u32 %v651, 7
        %v653 = vsub.s32 3, %v652
        %v654 = vrot.slane %v635, %v653
        %v655 = vlaneseq
        %v656 = vshrl.u32 %v655, 7
        %v657 = vsub.s32 4, %v656
        %v658 = vrot.slane %v635, %v657
        %v659 = vlaneseq
        %v660 = vshrl.u32 %v659, 7
        %v661 = vsub.s32 5, %v660
        %v662 = vrot.slane %v635, %v661
        %v663 = vlaneseq
        %v664 = vshrl.u32 %v663, 7
        %v665 = vsub.s32 6, %v664
        %v666 = vrot.slane %v635, %v665
        %v667 = vlaneseq
        %v668 = vshrl.u32 %v667, 7
        %v669 = vsub.s32 7, %v668
        %v670 = vrot.slane %v635, %v669
        %v671 = vlaneseq
        %v672 = vshrl.u32 %v671, 7
        %v673 = vsub.s32 0, %v672
        %v674 = vrot.slane %v636, %v673
        %v675 = vlaneseq
        %v676 = vshrl.u32 %v675, 7
        %v677 = vsub.s32 1, %v676
        %v678 = vrot.slane %v636, %v677
        %v679 = vlaneseq
        %v680 = vshrl.u32 %v679, 7
        %v681 = vsub.s32 2, %v680
        %v682 = vrot.slane %v636, %v681
        %v683 = vlaneseq
        %v684 = vshrl.u32 %v683, 7
        %v685 = vsub.s32 3, %v684
        %v686 = vrot.slane %v636, %v685
        %v701 = vunpack.c.l.b16 %v345
        %v702 = vunpack.c.h.b16 %v345
        %v703 = vunpack.c.l.b16 %v346
        %v704 = vpack.c.b16 %v701, %v701
        %v705 = vpack.c.b16 %v702, %v702
        %v706 = vpack.c.b16 %v703, %v703
        %v998 = vunpack.c.l.b16 %v347
        %v999 = vunpack.c.h.b16 %v347
        %v1000 = vunpack.c.l.b16 %v348
        %v1001 = vunpack.c.h.b16 %v348
        %v1002 = vunpack.c.l.b16 %v349
        %v1003 = vunpack.c.h.b16 %v349
        %v1004 = vunpack.c.l.b16 %v350
        %v1005 = vunpack.c.h.b16 %v350
        %v1006 = vunpack.c.l.b16 %v351
        %v1007 = vunpack.c.h.b16 %v351
        %v1008 = vunpack.c.l.b16 %v352
        %v1009 = vunpack.c.h.b16 %v352
        %v1010 = vunpack.c.l.b16 %v353
        %v1011 = vunpack.c.h.b16 %v353
        %v1012 = vunpack.c.l.b16 %v354
        %v1013 = vunpack.c.h.b16 %v354
        %v1014 = vunpack.c.l.b16 %v355
        %v1015 = vunpack.c.h.b16 %v355
        %v1016 = vunpack.c.l.b16 %v356
        %v1017 = vunpack.c.h.b16 %v356
        %v1018 = vunpack.c.l.b16 %v357
        %v1019 = vunpack.c.h.b16 %v357
        %v1020 = vunpack.c.l.b16 %v358
        %v1021 = vunpack.c.h.b16 %v358
        %v1022 = vunpack.c.l.b16 %v359
        %v1023 = vunpack.c.h.b16 %v359
        %v1024 = vunpack.c.l.b16 %v360
        %v1025 = vunpack.c.h.b16 %v360
        %v1026 = vunpack.c.l.b16 %v361
        %v1027 = vunpack.c.h.b16 %v361
        %v1028 = vunpack.c.l.b16 %v362
        %v1029 = vunpack.c.h.b16 %v362
        %v1030 = vunpack.c.l.b16 %v363
        %v1031 = vunpack.c.h.b16 %v363
        %v1032 = vunpack.c.l.b16 %v364
        %v1033 = vunpack.c.h.b16 %v364
        %v1034 = vunpack.c.l.b16 %v365
        %v1035 = vunpack.c.h.b16 %v365
        %v1036 = vunpack.c.l.b16 %v366
        %v1037 = vunpack.c.h.b16 %v366
        %v1038 = vunpack.c.l.b16 %v367
        %v1039 = vunpack.c.h.b16 %v367
        %v1040 = vunpack.c.l.b16 %v368
        %v1041 = vunpack.c.h.b16 %v368
        %v1042 = vunpack.c.l.b16 %v369
        %v1043 = vunpack.c.h.b16 %v369
        %v1044 = vunpack.c.l.b16 %v370
        %v1045 = vunpack.c.h.b16 %v370
        %v1046 = vunpack.c.l.b16 %v371
        %v1047 = vunpack.c.h.b16 %v371
        %v1048 = vunpack.c.l.b16 %v372
        %v1049 = vunpack.c.h.b16 %v372
        %v1050 = vunpack.c.l.b16 %v373
        %v1051 = vunpack.c.h.b16 %v373
        %v1052 = vunpack.c.l.b16 %v374
        %v1053 = vunpack.c.h.b16 %v374
        %v1054 = vunpack.c.l.b16 %v375
        %v1055 = vunpack.c.h.b16 %v375
        %v1056 = vunpack.c.l.b16 %v376
        %v1057 = vunpack.c.h.b16 %v376
        %v1058 = vunpack.c.l.b16 %v377
        %v1059 = vunpack.c.h.b16 %v377
        %v1060 = vunpack.c.l.b16 %v378
        %v1061 = vunpack.c.h.b16 %v378
        %v1062 = vunpack.c.l.b16 %v379
        %v1063 = vunpack.c.h.b16 %v379
        %v1064 = vunpack.c.l.b16 %v380
        %v1065 = vunpack.c.h.b16 %v380
        %v1066 = vunpack.c.l.b16 %v381
        %v1067 = vunpack.c.h.b16 %v381
        %v1068 = vunpack.c.l.b16 %v382
        %v1069 = vunpack.c.h.b16 %v382
        %v1070 = vunpack.c.l.b16 %v383
        %v1071 = vunpack.c.h.b16 %v383
        %v1072 = vunpack.c.l.b16 %v384
        %v1073 = vunpack.c.h.b16 %v384
        %v1074 = vunpack.c.l.b16 %v385
        %v1075 = vunpack.c.h.b16 %v385
        %v1076 = vunpack.c.l.b16 %v386
        %v1077 = vunpack.c.h.b16 %v386
        %v1078 = vunpack.c.l.b16 %v387
        %v1079 = vunpack.c.h.b16 %v387
        %v1080 = vunpack.c.l.b16 %v388
        %v1081 = vunpack.c.h.b16 %v388
        %v1082 = vunpack.c.l.b16 %v389
        %v1083 = vunpack.c.h.b16 %v389
        %v1084 = vunpack.c.l.b16 %v390
        %v1085 = vunpack.c.h.b16 %v390
        %v1086 = vunpack.c.l.b16 %v391
        %v1087 = vunpack.c.h.b16 %v391
        %v1088 = vunpack.c.l.b16 %v392
        %v1089 = vunpack.c.h.b16 %v392
        %v1090 = vunpack.c.l.b16 %v393
        %v1091 = vunpack.c.h.b16 %v393
        %v1092 = vunpack.c.l.b16 %v394
        %v1093 = vunpack.c.h.b16 %v394
        %v1094 = vunpack.c.l.b16 %v395
        %v1095 = vunpack.c.h.b16 %v395
        %v1096 = vunpack.c.l.b16 %v396
        %v1097 = vunpack.c.h.b16 %v396
        %v1098 = vunpack.c.l.b16 %v397
        %v1099 = vunpack.c.h.b16 %v397
        %v1100 = vunpack.c.l.b16 %v398
        %v1101 = vunpack.c.h.b16 %v398
        %v1102 = vunpack.c.l.b16 %v399
        %v1103 = vunpack.c.h.b16 %v399
        %v1104 = vunpack.c.l.b16 %v400
        %v1105 = vunpack.c.h.b16 %v400
        %v1106 = vunpack.c.l.b16 %v401
        %v1107 = vunpack.c.h.b16 %v401
        %v1108 = vunpack.c.l.b16 %v402
        %v1109 = vunpack.c.h.b16 %v402
        %v1110 = vunpack.c.l.b16 %v403
        %v1111 = vunpack.c.h.b16 %v403
        %v1112 = vunpack.c.l.b16 %v404
        %v1113 = vunpack.c.h.b16 %v404
        %v1114 = vunpack.c.l.b16 %v405
        %v1115 = vunpack.c.h.b16 %v405
        %v1116 = vunpack.c.l.b16 %v406
        %v1117 = vunpack.c.h.b16 %v406
        %v1118 = vunpack.c.l.b16 %v407
        %v1119 = vunpack.c.h.b16 %v407
        %v1120 = vunpack.c.l.b16 %v408
        %v1121 = vunpack.c.h.b16 %v408
        %v1122 = vunpack.c.l.b16 %v409
        %v1123 = vunpack.c.h.b16 %v409
        %v1124 = vunpack.c.l.b16 %v410
        %v1125 = vunpack.c.h.b16 %v410
        %v1126 = vunpack.c.l.b16 %v411
        %v1127 = vunpack.c.h.b16 %v411
        %v1128 = vunpack.c.l.b16 %v412
        %v1129 = vunpack.c.h.b16 %v412
        %v1130 = vunpack.c.l.b16 %v413
        %v1131 = vunpack.c.h.b16 %v413
        %v1132 = vunpack.c.l.b16 %v414
        %v1133 = vunpack.c.h.b16 %v414
        %v1134 = vunpack.c.l.b16 %v415
        %v1135 = vunpack.c.h.b16 %v415
        %v1136 = vunpack.c.l.b16 %v416
        %v1137 = vunpack.c.h.b16 %v416
        %v1138 = vunpack.c.l.b16 %v417
        %v1139 = vunpack.c.h.b16 %v417
        %v1140 = vunpack.c.l.b16 %v418
        %v1141 = vunpack.c.h.b16 %v418
        %v1142 = vunpack.c.l.b16 %v419
        %v1143 = vunpack.c.h.b16 %v419
        %v1144 = vunpack.c.l.b16 %v420
        %v1145 = vunpack.c.h.b16 %v420
        %v1146 = vunpack.c.l.b16 %v421
        %v1147 = vunpack.c.h.b16 %v421
        %v1148 = vunpack.c.l.b16 %v422
        %v1149 = vunpack.c.h.b16 %v422
        %v1150 = vunpack.c.l.b16 %v423
        %v1151 = vunpack.c.h.b16 %v423
        %v1152 = vunpack.c.l.b16 %v424
        %v1153 = vunpack.c.h.b16 %v424
        %v1154 = vunpack.c.l.b16 %v425
        %v1155 = vunpack.c.h.b16 %v425
        %v1156 = vunpack.c.l.b16 %v426
        %v1157 = vunpack.c.h.b16 %v426
        %v1158 = vunpack.c.l.b16 %v427
        %v1159 = vunpack.c.h.b16 %v427
        %v1160 = vunpack.c.l.b16 %v428
        %v1161 = vunpack.c.h.b16 %v428
        %v1162 = vunpack.c.l.b16 %v429
        %v1163 = vunpack.c.h.b16 %v429
        %v1164 = vunpack.c.l.b16 %v430
        %v1165 = vunpack.c.h.b16 %v430
        %v1166 = vunpack.c.l.b16 %v431
        %v1167 = vunpack.c.h.b16 %v431
        %v1168 = vunpack.c.l.b16 %v432
        %v1169 = vunpack.c.h.b16 %v432
        %v1170 = vunpack.c.l.b16 %v433
        %v1171 = vunpack.c.h.b16 %v433
        %v1172 = vunpack.c.l.b16 %v434
        %v1173 = vunpack.c.h.b16 %v434
        %v1174 = vunpack.c.l.b16 %v435
        %v1175 = vunpack.c.h.b16 %v435
        %v1176 = vunpack.c.l.b16 %v436
        %v1177 = vunpack.c.h.b16 %v436
        %v1178 = vunpack.c.l.b16 %v437
        %v1179 = vunpack.c.h.b16 %v437
        %v1180 = vunpack.c.l.b16 %v438
        %v1181 = vunpack.c.h.b16 %v438
        %v1182 = vunpack.c.l.b16 %v439
        %v1183 = vunpack.c.h.b16 %v439
        %v1184 = vunpack.c.l.b16 %v440
        %v1185 = vunpack.c.h.b16 %v440
        %v1186 = vunpack.c.l.b16 %v441
        %v1187 = vunpack.c.h.b16 %v441
        %v1188 = vunpack.c.l.b16 %v442
        %v1189 = vunpack.c.h.b16 %v442
        %v1190 = vunpack.c.l.b16 %v443
        %v1191 = vunpack.c.h.b16 %v443
        %v1192 = vunpack.c.l.b16 %v444
        %v1193 = vunpack.c.h.b16 %v444
        %v1194 = vunpack.c.l.b16 %v445
        %v1195 = vunpack.c.h.b16 %v445
        %v1196 = vunpack.c.l.b16 %v446
        %v1197 = vunpack.c.h.b16 %v446
        %v1198 = vunpack.c.l.b16 %v447
        %v1199 = vunpack.c.h.b16 %v447
        %v1200 = vunpack.c.l.b16 %v448
        %v1201 = vunpack.c.h.b16 %v448
        %v1202 = vunpack.c.l.b16 %v449
        %v1203 = vunpack.c.h.b16 %v449
        %v1204 = vunpack.c.l.b16 %v450
        %v1205 = vunpack.c.h.b16 %v450
        %v1206 = vunpack.c.l.b16 %v451
        %v1207 = vunpack.c.h.b16 %v451
        %v1208 = vunpack.c.l.b16 %v452
        %v1209 = vunpack.c.h.b16 %v452
        %v1210 = vunpack.c.l.b16 %v453
        %v1211 = vunpack.c.h.b16 %v453
        %v1212 = vunpack.c.l.b16 %v454
        %v1213 = vunpack.c.h.b16 %v454
        %v1214 = vunpack.c.l.b16 %v455
        %v1215 = vunpack.c.h.b16 %v455
        %v1216 = vunpack.c.l.b16 %v456
        %v1217 = vunpack.c.h.b16 %v456
        %v1218 = vunpack.c.l.b16 %v457
        %v1219 = vunpack.c.h.b16 %v457
        %v1220 = vunpack.c.l.b16 %v458
        %v1221 = vunpack.c.h.b16 %v458
        %v1222 = vunpack.c.l.b16 %v459
        %v1223 = vunpack.c.h.b16 %v459
        %v1224 = vunpack.c.l.b16 %v460
        %v1225 = vunpack.c.h.b16 %v460
        %v1226 = vunpack.c.l.b16 %v461
        %v1227 = vunpack.c.h.b16 %v461
        %v1228 = vunpack.c.l.b16 %v462
        %v1229 = vunpack.c.h.b16 %v462
        %v1230 = vunpack.c.l.b16 %v463
        %v1231 = vunpack.c.h.b16 %v463
        %v1232 = vunpack.c.l.b16 %v464
        %v1233 = vunpack.c.h.b16 %v464
        %v1234 = vunpack.c.l.b16 %v465
        %v1235 = vunpack.c.h.b16 %v465
        %v1236 = vunpack.c.l.b16 %v466
        %v1237 = vunpack.c.h.b16 %v466
        %v1238 = vunpack.c.l.b16 %v467
        %v1239 = vunpack.c.h.b16 %v467
        %v1240 = vunpack.c.l.b16 %v468
        %v1241 = vunpack.c.h.b16 %v468
        %v1242 = vunpack.c.l.b16 %v469
        %v1243 = vunpack.c.h.b16 %v469
        %v1244 = vunpack.c.l.b16 %v470
        %v1245 = vunpack.c.h.b16 %v470
        %v1246 = vunpack.c.l.b16 %v471
        %v1247 = vunpack.c.h.b16 %v471
        %v1248 = vunpack.c.l.b16 %v472
        %v1249 = vunpack.c.h.b16 %v472
        %v1250 = vunpack.c.l.b16 %v473
        %v1251 = vunpack.c.h.b16 %v473
        %v1252 = vunpack.c.l.b16 %v474
        %v1253 = vunpack.c.h.b16 %v474
        %v1254 = vunpack.c.l.b16 %v475
        %v1255 = vunpack.c.h.b16 %v475
        %v1256 = vunpack.c.l.b16 %v476
        %v1257 = vunpack.c.h.b16 %v476
        %v1258 = vunpack.c.l.b16 %v477
        %v1259 = vunpack.c.h.b16 %v477
        %v1260 = vunpack.c.l.b16 %v478
        %v1261 = vunpack.c.h.b16 %v478
        %v1262 = vunpack.c.l.b16 %v479
        %v1263 = vunpack.c.h.b16 %v479
        %v1264 = vunpack.c.l.b16 %v480
        %v1265 = vunpack.c.h.b16 %v480
        %v1266 = vunpack.c.l.b16 %v481
        %v1267 = vunpack.c.h.b16 %v481
        %v1268 = vunpack.c.l.b16 %v482
        %v1269 = vunpack.c.h.b16 %v482
        %v1270 = vunpack.c.l.b16 %v483
        %v1271 = vunpack.c.h.b16 %v483
        %v1272 = vunpack.c.l.b16 %v484
        %v1273 = vunpack.c.h.b16 %v484
        %v1274 = vunpack.c.l.b16 %v485
        %v1275 = vunpack.c.h.b16 %v485
        %v1276 = vunpack.c.l.b16 %v486
        %v1277 = vunpack.c.h.b16 %v486
        %v1278 = vunpack.c.l.b16 %v487
        %v1279 = vunpack.c.h.b16 %v487
        %v1280 = vunpack.c.l.b16 %v488
        %v1281 = vunpack.c.h.b16 %v488
        %v1282 = vunpack.c.l.b16 %v489
        %v1283 = vunpack.c.h.b16 %v489
        %v1284 = vunpack.c.l.b16 %v490
        %v1285 = vunpack.c.h.b16 %v490
        %v1286 = vunpack.c.l.b16 %v491
        %v1287 = vunpack.c.h.b16 %v491
        %v1288 = vunpack.c.l.b16 %v492
        %v1289 = vunpack.c.h.b16 %v492
        %v1290 = vunpack.c.l.b16 %v493
        %v1291 = vunpack.c.h.b16 %v493
        %v1292 = vunpack.c.l.b16 %v494
        %v1293 = vunpack.c.h.b16 %v494
        %v1294 = vunpack.c.l.b16 %v495
        %v1295 = vunpack.c.h.b16 %v495
        %v1296 = vunpack.c.l.b16 %v496
        %v1297 = vunpack.c.h.b16 %v496
        %v1298 = vunpack.c.l.b16 %v497
        %v1299 = vunpack.c.h.b16 %v497
        %v1300 = vunpack.c.l.b16 %v498
        %v1301 = vunpack.c.h.b16 %v498
        %v1302 = vunpack.c.l.b16 %v499
        %v1303 = vunpack.c.h.b16 %v499
        %v1304 = vunpack.c.l.b16 %v500
        %v1305 = vunpack.c.h.b16 %v500
        %v1306 = vunpack.c.l.b16 %v501
        %v1307 = vunpack.c.h.b16 %v501
        %v1308 = vunpack.c.l.b16 %v502
        %v1309 = vunpack.c.h.b16 %v502
        %v1310 = vunpack.c.l.b16 %v503
        %v1311 = vunpack.c.h.b16 %v503
        %v1312 = vunpack.c.l.b16 %v504
        %v1313 = vunpack.c.h.b16 %v504
        %v1314 = vunpack.c.l.b16 %v505
        %v1315 = vunpack.c.h.b16 %v505
        %v1316 = vunpack.c.l.b16 %v506
        %v1317 = vunpack.c.h.b16 %v506
        %v1318 = vunpack.c.l.b16 %v507
        %v1319 = vunpack.c.h.b16 %v507
        %v1320 = vunpack.c.l.b16 %v508
        %v1321 = vunpack.c.h.b16 %v508
        %v1322 = vunpack.c.l.b16 %v509
        %v1323 = vunpack.c.h.b16 %v509
        %v1324 = vunpack.c.l.b16 %v510
        %v1325 = vunpack.c.h.b16 %v510
        %v1326 = vunpack.c.l.b16 %v511
        %v1327 = vunpack.c.h.b16 %v511
        %v1328 = vunpack.c.l.b16 %v512
        %v1329 = vunpack.c.h.b16 %v512
        %v1330 = vunpack.c.l.b16 %v513
        %v1331 = vunpack.c.h.b16 %v513
        %v1332 = vunpack.c.l.b16 %v514
        %v1333 = vunpack.c.h.b16 %v514
        %v1334 = vunpack.c.l.b16 %v515
        %v1335 = vunpack.c.h.b16 %v515
        %v1336 = vunpack.c.l.b16 %v516
        %v1337 = vunpack.c.h.b16 %v516
        %v1338 = vunpack.c.l.b16 %v517
        %v1339 = vunpack.c.h.b16 %v517
        %v1340 = vunpack.c.l.b16 %v518
        %v1341 = vunpack.c.h.b16 %v518
        %v1342 = vunpack.c.l.b16 %v519
        %v1343 = vunpack.c.h.b16 %v519
        %v1344 = vunpack.c.l.b16 %v520
        %v1345 = vunpack.c.h.b16 %v520
        %v1346 = vunpack.c.l.b16 %v521
        %v1347 = vunpack.c.h.b16 %v521
        %v1348 = vunpack.c.l.b16 %v522
        %v1349 = vunpack.c.h.b16 %v522
        %v1350 = vunpack.c.l.b16 %v523
        %v1351 = vunpack.c.h.b16 %v523
        %v1352 = vunpack.c.l.b16 %v524
        %v1353 = vunpack.c.h.b16 %v524
        %v1354 = vunpack.c.l.b16 %v525
        %v1355 = vunpack.c.h.b16 %v525
        %v1356 = vunpack.c.l.b16 %v526
        %v1357 = vunpack.c.h.b16 %v526
        %v1358 = vunpack.c.l.b16 %v527
        %v1359 = vunpack.c.h.b16 %v527
        %v1360 = vunpack.c.l.b16 %v528
        %v1361 = vunpack.c.h.b16 %v528
        %v1362 = vunpack.c.l.b16 %v529
        %v1363 = vunpack.c.h.b16 %v529
        %v1364 = vunpack.c.l.b16 %v530
        %v1365 = vunpack.c.h.b16 %v530
        %v1366 = vunpack.c.l.b16 %v531
        %v1367 = vunpack.c.h.b16 %v531
        %v1368 = vunpack.c.l.b16 %v532
        %v1369 = vunpack.c.h.b16 %v532
        %v1370 = vunpack.c.l.b16 %v533
        %v1371 = vunpack.c.h.b16 %v533
        %v1372 = vunpack.c.l.b16 %v534
        %v1373 = vunpack.c.h.b16 %v534
        %v1374 = vunpack.c.l.b16 %v535
        %v1375 = vunpack.c.h.b16 %v535
        %v1376 = vunpack.c.l.b16 %v536
        %v1377 = vunpack.c.h.b16 %v536
        %v1378 = vunpack.c.l.b16 %v537
        %v1379 = vunpack.c.h.b16 %v537
        %v1380 = vunpack.c.l.b16 %v538
        %v1381 = vunpack.c.h.b16 %v538
        %v1382 = vunpack.c.l.b16 %v539
        %v1383 = vunpack.c.h.b16 %v539
        %v1384 = vunpack.c.l.b16 %v540
        %v1385 = vunpack.c.h.b16 %v540
        %v1386 = vunpack.c.l.b16 %v541
        %v1387 = vunpack.c.h.b16 %v541
        %v1388 = vunpack.c.l.b16 %v542
        %v1389 = vunpack.c.h.b16 %v542
        %v1390 = vunpack.c.l.b16 %v543
        %v1391 = vunpack.c.h.b16 %v543
        %v1392 = vunpack.c.l.b16 %v544
        %v1393 = vunpack.c.h.b16 %v544
        %v1394 = vunpack.c.l.b16 %v545
        %v1395 = vunpack.c.h.b16 %v545
        %v1396 = vunpack.c.l.b16 %v546
        %v1397 = vunpack.c.h.b16 %v546
        %v1398 = vunpack.c.l.b16 %v547
        %v1399 = vunpack.c.h.b16 %v547
        %v1400 = vunpack.c.l.b16 %v548
        %v1401 = vunpack.c.h.b16 %v548
        %v1402 = vunpack.c.l.b16 %v549
        %v1403 = vunpack.c.h.b16 %v549
        %v1404 = vunpack.c.l.b16 %v550
        %v1405 = vunpack.c.h.b16 %v550
        %v1406 = vunpack.c.l.b16 %v551
        %v1407 = vunpack.c.h.b16 %v551
        %v1408 = vunpack.c.l.b16 %v552
        %v1409 = vunpack.c.h.b16 %v552
        %v1410 = vunpack.c.l.b16 %v553
        %v1411 = vunpack.c.h.b16 %v553
        %v1412 = vunpack.c.l.b16 %v554
        %v1413 = vunpack.c.h.b16 %v554
        %v1414 = vunpack.c.l.b16 %v555
        %v1415 = vunpack.c.h.b16 %v555
        %v1416 = vunpack.c.l.b16 %v556
        %v1417 = vunpack.c.h.b16 %v556
        %v1418 = vunpack.c.l.b16 %v557
        %v1419 = vunpack.c.h.b16 %v557
        %v1420 = vunpack.c.l.b16 %v558
        %v1421 = vunpack.c.h.b16 %v558
        %v1422 = vunpack.c.l.b16 %v559
        %v1423 = vunpack.c.h.b16 %v559
        %v1424 = vunpack.c.l.b16 %v560
        %v1425 = vunpack.c.h.b16 %v560
        %v1426 = vunpack.c.l.b16 %v561
        %v1427 = vunpack.c.h.b16 %v561
        %v1428 = vunpack.c.l.b16 %v562
        %v1429 = vunpack.c.h.b16 %v562
        %v1430 = vunpack.c.l.b16 %v563
        %v1431 = vunpack.c.h.b16 %v563
        %v1432 = vunpack.c.l.b16 %v564
        %v1433 = vunpack.c.h.b16 %v564
        %v1434 = vunpack.c.l.b16 %v565
        %v1435 = vunpack.c.h.b16 %v565
        %v1436 = vunpack.c.l.b16 %v566
        %v1437 = vunpack.c.h.b16 %v566
        %v1438 = vunpack.c.l.b16 %v567
        %v1439 = vunpack.c.h.b16 %v567
        %v1440 = vunpack.c.l.b16 %v568
        %v1441 = vunpack.c.h.b16 %v568
        %v1442 = vunpack.c.l.b16 %v569
        %v1443 = vunpack.c.h.b16 %v569
        %v1444 = vunpack.c.l.b16 %v570
        %v1445 = vunpack.c.h.b16 %v570
        %v1446 = vunpack.c.l.b16 %v571
        %v1447 = vunpack.c.h.b16 %v571
        %v1448 = vunpack.c.l.b16 %v572
        %v1449 = vunpack.c.h.b16 %v572
        %v1450 = vunpack.c.l.b16 %v573
        %v1451 = vunpack.c.h.b16 %v573
        %v1452 = vunpack.c.l.b16 %v574
        %v1453 = vunpack.c.h.b16 %v574
        %v1454 = vunpack.c.l.b16 %v575
        %v1455 = vunpack.c.h.b16 %v575
        %v1456 = vunpack.c.l.b16 %v576
        %v1457 = vunpack.c.h.b16 %v576
        %v1458 = vunpack.c.l.b16 %v577
        %v1459 = vunpack.c.h.b16 %v577
        %v1460 = vunpack.c.l.b16 %v578
        %v1461 = vunpack.c.h.b16 %v578
        %v1462 = vunpack.c.l.b16 %v579
        %v1463 = vunpack.c.h.b16 %v579
        %v1464 = vunpack.c.l.b16 %v580
        %v1465 = vunpack.c.h.b16 %v580
        %v1466 = vunpack.c.l.b16 %v581
        %v1467 = vunpack.c.h.b16 %v581
        %v1468 = vunpack.c.l.b16 %v582
        %v1469 = vunpack.c.h.b16 %v582
        %v1470 = vunpack.c.l.b16 %v583
        %v1471 = vunpack.c.h.b16 %v583
        %v1472 = vunpack.c.l.b16 %v584
        %v1473 = vunpack.c.h.b16 %v584
        %v1474 = vunpack.c.l.b16 %v585
        %v1475 = vunpack.c.h.b16 %v585
        %v1476 = vunpack.c.l.b16 %v586
        %v1477 = vunpack.c.h.b16 %v586
        %v1478 = vunpack.c.l.b16 %v587
        %v1479 = vunpack.c.h.b16 %v587
        %v1480 = vunpack.c.l.b16 %v588
        %v1481 = vunpack.c.h.b16 %v588
        %v1482 = vunpack.c.l.b16 %v589
        %v1483 = vunpack.c.h.b16 %v589
        %v1484 = vunpack.c.l.b16 %v590
        %v1485 = vunpack.c.h.b16 %v590
        %v1486 = vunpack.c.l.b16 %v591
        %v1487 = vunpack.c.h.b16 %v591
        %v1488 = vunpack.c.l.b16 %v592
        %v1489 = vunpack.c.h.b16 %v592
        %v1490 = vunpack.c.l.b16 %v593
        %v1491 = vunpack.c.h.b16 %v593
        %v1492 = vunpack.c.l.b16 %v594
        %v1493 = vunpack.c.h.b16 %v594
        %v1494 = vunpack.c.l.b16 %v595
        %v1495 = vunpack.c.h.b16 %v595
        %v1496 = vunpack.c.l.b16 %v596
        %v1497 = vunpack.c.h.b16 %v596
        %v1498 = vunpack.c.l.b16 %v597
        %v1499 = vunpack.c.h.b16 %v597
        %v1500 = vunpack.c.l.b16 %v598
        %v1501 = vunpack.c.h.b16 %v598
        %v1502 = vunpack.c.l.b16 %v599
        %v1503 = vunpack.c.h.b16 %v599
        %v1504 = vunpack.c.l.b16 %v600
        %v1505 = vunpack.c.h.b16 %v600
        %v1506 = vunpack.c.l.b16 %v601
        %v1507 = vunpack.c.h.b16 %v601
        %v1508 = vunpack.c.l.b16 %v602
        %v1509 = vunpack.c.h.b16 %v602
        %v1510 = vunpack.c.l.b16 %v603
        %v1511 = vunpack.c.h.b16 %v603
        %v1512 = vunpack.c.l.b16 %v604
        %v1513 = vunpack.c.h.b16 %v604
        %v1514 = vunpack.c.l.b16 %v605
        %v1515 = vunpack.c.h.b16 %v605
        %v1516 = vunpack.c.l.b16 %v606
        %v1517 = vunpack.c.h.b16 %v606
        %v1518 = vunpack.c.l.b16 %v607
        %v1519 = vunpack.c.h.b16 %v607
        %v1520 = vunpack.c.l.b16 %v608
        %v1521 = vunpack.c.h.b16 %v608
        %v1522 = vunpack.c.l.b16 %v609
        %v1523 = vunpack.c.h.b16 %v609
        %v1524 = vunpack.c.l.b16 %v610
        %v1525 = vunpack.c.h.b16 %v610
        %v1526 = vunpack.c.l.b16 %v611
        %v1527 = vunpack.c.h.b16 %v611
        %v1528 = vunpack.c.l.b16 %v612
        %v1529 = vunpack.c.h.b16 %v612
        %v1530 = vunpack.c.l.b16 %v613
        %v1531 = vunpack.c.h.b16 %v613
        %v1532 = vunpack.c.l.b16 %v614
        %v1533 = vunpack.c.h.b16 %v614
        %v1534 = vunpack.c.l.b16 %v615
        %v1535 = vunpack.c.h.b16 %v615
        %v1536 = vunpack.c.l.b16 %v616
        %v1537 = vunpack.c.h.b16 %v616
        %v1538 = vunpack.c.l.b16 %v617
        %v1539 = vunpack.c.h.b16 %v617
        %v1540 = vunpack.c.l.b16 %v618
        %v1541 = vunpack.c.h.b16 %v618
        %v1542 = vunpack.c.l.b16 %v619
        %v1543 = vunpack.c.h.b16 %v619
        %v1544 = vunpack.c.l.b16 %v620
        %v1545 = vunpack.c.h.b16 %v620
        %v1546 = vunpack.c.l.b16 %v621
        %v1547 = vunpack.c.h.b16 %v621
        %v1548 = vunpack.c.l.b16 %v622
        %v1549 = vunpack.c.h.b16 %v622
        %v1550 = vunpack.c.l.b16 %v623
        %v1551 = vunpack.c.h.b16 %v623
        %v1552 = vunpack.c.l.b16 %v624
        %v1553 = vunpack.c.h.b16 %v624
        %v1554 = vunpack.c.l.b16 %v625
        %v1555 = vunpack.c.h.b16 %v625
        %v1556 = vunpack.c.l.b16 %v626
        %v1557 = vunpack.c.h.b16 %v626
        %v1558 = vunpack.c.l.b16 %v627
        %v1559 = vunpack.c.h.b16 %v627
        %v1560 = vunpack.c.l.b16 %v628
        %v1561 = vunpack.c.h.b16 %v628
        %v1562 = vunpack.c.l.b16 %v629
        %v1563 = vunpack.c.h.b16 %v629
        %v1564 = vunpack.c.l.b16 %v630
        %v1565 = vunpack.c.h.b16 %v630
        %v1566 = vunpack.c.l.b16 %v631
        %v1567 = vunpack.c.h.b16 %v631
        %v1568 = vunpack.c.l.b16 %v632
        %v1569 = vunpack.c.h.b16 %v632
        %v1570 = vunpack.c.l.b16 %v633
        %v1571 = vunpack.c.h.b16 %v633
        %v1572 = vunpack.c.l.b16 %v634
        %v1573 = vunpack.c.h.b16 %v634
        %v1574 = vpack.c.b16 %v1010, %v998
        %v1575 = vpack.c.b16 %v1011, %v999
        %v1576 = vpack.c.b16 %v1012, %v1000
        %v1577 = vpack.c.b16 %v1013, %v1001
        %v1578 = vpack.c.b16 %v1014, %v1002
        %v1579 = vpack.c.b16 %v1015, %v1003
        %v1580 = vpack.c.b16 %v1016, %v1004
        %v1581 = vpack.c.b16 %v1017, %v1005
        %v1582 = vpack.c.b16 %v1018, %v1006
        %v1583 = vpack.c.b16 %v1019, %v1007
        %v1584 = vpack.c.b16 %v1020, %v1008
        %v1585 = vpack.c.b16 %v1021, %v1009
        %v1586 = vpack.c.b16 %v1034, %v1022
        %v1587 = vpack.c.b16 %v1035, %v1023
        %v1588 = vpack.c.b16 %v1036, %v1024
        %v1589 = vpack.c.b16 %v1037, %v1025
        %v1590 = vpack.c.b16 %v1038, %v1026
        %v1591 = vpack.c.b16 %v1039, %v1027
        %v1592 = vpack.c.b16 %v1040, %v1028
        %v1593 = vpack.c.b16 %v1041, %v1029
        %v1594 = vpack.c.b16 %v1042, %v1030
        %v1595 = vpack.c.b16 %v1043, %v1031
        %v1596 = vpack.c.b16 %v1044, %v1032
        %v1597 = vpack.c.b16 %v1045, %v1033
        %v1598 = vpack.c.b16 %v1058, %v1046
        %v1599 = vpack.c.b16 %v1059, %v1047
        %v1600 = vpack.c.b16 %v1060, %v1048
        %v1601 = vpack.c.b16 %v1061, %v1049
        %v1602 = vpack.c.b16 %v1062, %v1050
        %v1603 = vpack.c.b16 %v1063, %v1051
        %v1604 = vpack.c.b16 %v1064, %v1052
        %v1605 = vpack.c.b16 %v1065, %v1053
        %v1606 = vpack.c.b16 %v1066, %v1054
        %v1607 = vpack.c.b16 %v1067, %v1055
        %v1608 = vpack.c.b16 %v1068, %v1056
        %v1609 = vpack.c.b16 %v1069, %v1057
        %v1610 = vpack.c.b16 %v1082, %v1070
        %v1611 = vpack.c.b16 %v1083, %v1071
        %v1612 = vpack.c.b16 %v1084, %v1072
        %v1613 = vpack.c.b16 %v1085, %v1073
        %v1614 = vpack.c.b16 %v1086, %v1074
        %v1615 = vpack.c.b16 %v1087, %v1075
        %v1616 = vpack.c.b16 %v1088, %v1076
        %v1617 = vpack.c.b16 %v1089, %v1077
        %v1618 = vpack.c.b16 %v1090, %v1078
        %v1619 = vpack.c.b16 %v1091, %v1079
        %v1620 = vpack.c.b16 %v1092, %v1080
        %v1621 = vpack.c.b16 %v1093, %v1081
        %v1622 = vpack.c.b16 %v1106, %v1094
        %v1623 = vpack.c.b16 %v1107, %v1095
        %v1624 = vpack.c.b16 %v1108, %v1096
        %v1625 = vpack.c.b16 %v1109, %v1097
        %v1626 = vpack.c.b16 %v1110, %v1098
        %v1627 = vpack.c.b16 %v1111, %v1099
        %v1628 = vpack.c.b16 %v1112, %v1100
        %v1629 = vpack.c.b16 %v1113, %v1101
        %v1630 = vpack.c.b16 %v1114, %v1102
        %v1631 = vpack.c.b16 %v1115, %v1103
        %v1632 = vpack.c.b16 %v1116, %v1104
        %v1633 = vpack.c.b16 %v1117, %v1105
        %v1634 = vpack.c.b16 %v1130, %v1118
        %v1635 = vpack.c.b16 %v1131, %v1119
        %v1636 = vpack.c.b16 %v1132, %v1120
        %v1637 = vpack.c.b16 %v1133, %v1121
        %v1638 = vpack.c.b16 %v1134, %v1122
        %v1639 = vpack.c.b16 %v1135, %v1123
        %v1640 = vpack.c.b16 %v1136, %v1124
        %v1641 = vpack.c.b16 %v1137, %v1125
        %v1642 = vpack.c.b16 %v1138, %v1126
        %v1643 = vpack.c.b16 %v1139, %v1127
        %v1644 = vpack.c.b16 %v1140, %v1128
        %v1645 = vpack.c.b16 %v1141, %v1129
        %v1646 = vpack.c.b16 %v1154, %v1142
        %v1647 = vpack.c.b16 %v1155, %v1143
        %v1648 = vpack.c.b16 %v1156, %v1144
        %v1649 = vpack.c.b16 %v1157, %v1145
        %v1650 = vpack.c.b16 %v1158, %v1146
        %v1651 = vpack.c.b16 %v1159, %v1147
        %v1652 = vpack.c.b16 %v1160, %v1148
        %v1653 = vpack.c.b16 %v1161, %v1149
        %v1654 = vpack.c.b16 %v1162, %v1150
        %v1655 = vpack.c.b16 %v1163, %v1151
        %v1656 = vpack.c.b16 %v1164, %v1152
        %v1657 = vpack.c.b16 %v1165, %v1153
        %v1658 = vpack.c.b16 %v1178, %v1166
        %v1659 = vpack.c.b16 %v1179, %v1167
        %v1660 = vpack.c.b16 %v1180, %v1168
        %v1661 = vpack.c.b16 %v1181, %v1169
        %v1662 = vpack.c.b16 %v1182, %v1170
        %v1663 = vpack.c.b16 %v1183, %v1171
        %v1664 = vpack.c.b16 %v1184, %v1172
        %v1665 = vpack.c.b16 %v1185, %v1173
        %v1666 = vpack.c.b16 %v1186, %v1174
        %v1667 = vpack.c.b16 %v1187, %v1175
        %v1668 = vpack.c.b16 %v1188, %v1176
        %v1669 = vpack.c.b16 %v1189, %v1177
        %v1670 = vpack.c.b16 %v1202, %v1190
        %v1671 = vpack.c.b16 %v1203, %v1191
        %v1672 = vpack.c.b16 %v1204, %v1192
        %v1673 = vpack.c.b16 %v1205, %v1193
        %v1674 = vpack.c.b16 %v1206, %v1194
        %v1675 = vpack.c.b16 %v1207, %v1195
        %v1676 = vpack.c.b16 %v1208, %v1196
        %v1677 = vpack.c.b16 %v1209, %v1197
        %v1678 = vpack.c.b16 %v1210, %v1198
        %v1679 = vpack.c.b16 %v1211, %v1199
        %v1680 = vpack.c.b16 %v1212, %v1200
        %v1681 = vpack.c.b16 %v1213, %v1201
        %v1682 = vpack.c.b16 %v1226, %v1214
        %v1683 = vpack.c.b16 %v1227, %v1215
        %v1684 = vpack.c.b16 %v1228, %v1216
        %v1685 = vpack.c.b16 %v1229, %v1217
        %v1686 = vpack.c.b16 %v1230, %v1218
        %v1687 = vpack.c.b16 %v1231, %v1219
        %v1688 = vpack.c.b16 %v1232, %v1220
        %v1689 = vpack.c.b16 %v1233, %v1221
        %v1690 = vpack.c.b16 %v1234, %v1222
        %v1691 = vpack.c.b16 %v1235, %v1223
        %v1692 = vpack.c.b16 %v1236, %v1224
        %v1693 = vpack.c.b16 %v1237, %v1225
        %v1694 = vpack.c.b16 %v1250, %v1238
        %v1695 = vpack.c.b16 %v1251, %v1239
        %v1696 = vpack.c.b16 %v1252, %v1240
        %v1697 = vpack.c.b16 %v1253, %v1241
        %v1698 = vpack.c.b16 %v1254, %v1242
        %v1699 = vpack.c.b16 %v1255, %v1243
        %v1700 = vpack.c.b16 %v1256, %v1244
        %v1701 = vpack.c.b16 %v1257, %v1245
        %v1702 = vpack.c.b16 %v1258, %v1246
        %v1703 = vpack.c.b16 %v1259, %v1247
        %v1704 = vpack.c.b16 %v1260, %v1248
        %v1705 = vpack.c.b16 %v1261, %v1249
        %v1706 = vpack.c.b16 %v1274, %v1262
        %v1707 = vpack.c.b16 %v1275, %v1263
        %v1708 = vpack.c.b16 %v1276, %v1264
        %v1709 = vpack.c.b16 %v1277, %v1265
        %v1710 = vpack.c.b16 %v1278, %v1266
        %v1711 = vpack.c.b16 %v1279, %v1267
        %v1712 = vpack.c.b16 %v1280, %v1268
        %v1713 = vpack.c.b16 %v1281, %v1269
        %v1714 = vpack.c.b16 %v1282, %v1270
        %v1715 = vpack.c.b16 %v1283, %v1271
        %v1716 = vpack.c.b16 %v1284, %v1272
        %v1717 = vpack.c.b16 %v1285, %v1273
        %v1718 = vpack.c.b16 %v1298, %v1286
        %v1719 = vpack.c.b16 %v1299, %v1287
        %v1720 = vpack.c.b16 %v1300, %v1288
        %v1721 = vpack.c.b16 %v1301, %v1289
        %v1722 = vpack.c.b16 %v1302, %v1290
        %v1723 = vpack.c.b16 %v1303, %v1291
        %v1724 = vpack.c.b16 %v1304, %v1292
        %v1725 = vpack.c.b16 %v1305, %v1293
        %v1726 = vpack.c.b16 %v1306, %v1294
        %v1727 = vpack.c.b16 %v1307, %v1295
        %v1728 = vpack.c.b16 %v1308, %v1296
        %v1729 = vpack.c.b16 %v1309, %v1297
        %v1730 = vpack.c.b16 %v1322, %v1310
        %v1731 = vpack.c.b16 %v1323, %v1311
        %v1732 = vpack.c.b16 %v1324, %v1312
        %v1733 = vpack.c.b16 %v1325, %v1313
        %v1734 = vpack.c.b16 %v1326, %v1314
        %v1735 = vpack.c.b16 %v1327, %v1315
        %v1736 = vpack.c.b16 %v1328, %v1316
        %v1737 = vpack.c.b16 %v1329, %v1317
        %v1738 = vpack.c.b16 %v1330, %v1318
        %v1739 = vpack.c.b16 %v1331, %v1319
        %v1740 = vpack.c.b16 %v1332, %v1320
        %v1741 = vpack.c.b16 %v1333, %v1321
        %v1742 = vpack.c.b16 %v1346, %v1334
        %v1743 = vpack.c.b16 %v1347, %v1335
        %v1744 = vpack.c.b16 %v1348, %v1336
        %v1745 = vpack.c.b16 %v1349, %v1337
        %v1746 = vpack.c.b16 %v1350, %v1338
        %v1747 = vpack.c.b16 %v1351, %v1339
        %v1748 = vpack.c.b16 %v1352, %v1340
        %v1749 = vpack.c.b16 %v1353, %v1341
        %v1750 = vpack.c.b16 %v1354, %v1342
        %v1751 = vpack.c.b16 %v1355, %v1343
        %v1752 = vpack.c.b16 %v1356, %v1344
        %v1753 = vpack.c.b16 %v1357, %v1345
        %v1754 = vpack.c.b16 %v1370, %v1358
        %v1755 = vpack.c.b16 %v1371, %v1359
        %v1756 = vpack.c.b16 %v1372, %v1360
        %v1757 = vpack.c.b16 %v1373, %v1361
        %v1758 = vpack.c.b16 %v1374, %v1362
        %v1759 = vpack.c.b16 %v1375, %v1363
        %v1760 = vpack.c.b16 %v1376, %v1364
        %v1761 = vpack.c.b16 %v1377, %v1365
        %v1762 = vpack.c.b16 %v1378, %v1366
        %v1763 = vpack.c.b16 %v1379, %v1367
        %v1764 = vpack.c.b16 %v1380, %v1368
        %v1765 = vpack.c.b16 %v1381, %v1369
        %v1766 = vpack.c.b16 %v1394, %v1382
        %v1767 = vpack.c.b16 %v1395, %v1383
        %v1768 = vpack.c.b16 %v1396, %v1384
        %v1769 = vpack.c.b16 %v1397, %v1385
        %v1770 = vpack.c.b16 %v1398, %v1386
        %v1771 = vpack.c.b16 %v1399, %v1387
        %v1772 = vpack.c.b16 %v1400, %v1388
        %v1773 = vpack.c.b16 %v1401, %v1389
        %v1774 = vpack.c.b16 %v1402, %v1390
        %v1775 = vpack.c.b16 %v1403, %v1391
        %v1776 = vpack.c.b16 %v1404, %v1392
        %v1777 = vpack.c.b16 %v1405, %v1393
        %v1778 = vpack.c.b16 %v1418, %v1406
        %v1779 = vpack.c.b16 %v1419, %v1407
        %v1780 = vpack.c.b16 %v1420, %v1408
        %v1781 = vpack.c.b16 %v1421, %v1409
        %v1782 = vpack.c.b16 %v1422, %v1410
        %v1783 = vpack.c.b16 %v1423, %v1411
        %v1784 = vpack.c.b16 %v1424, %v1412
        %v1785 = vpack.c.b16 %v1425, %v1413
        %v1786 = vpack.c.b16 %v1426, %v1414
        %v1787 = vpack.c.b16 %v1427, %v1415
        %v1788 = vpack.c.b16 %v1428, %v1416
        %v1789 = vpack.c.b16 %v1429, %v1417
        %v1790 = vpack.c.b16 %v1442, %v1430
        %v1791 = vpack.c.b16 %v1443, %v1431
        %v1792 = vpack.c.b16 %v1444, %v1432
        %v1793 = vpack.c.b16 %v1445, %v1433
        %v1794 = vpack.c.b16 %v1446, %v1434
        %v1795 = vpack.c.b16 %v1447, %v1435
        %v1796 = vpack.c.b16 %v1448, %v1436
        %v1797 = vpack.c.b16 %v1449, %v1437
        %v1798 = vpack.c.b16 %v1450, %v1438
        %v1799 = vpack.c.b16 %v1451, %v1439
        %v1800 = vpack.c.b16 %v1452, %v1440
        %v1801 = vpack.c.b16 %v1453, %v1441
        %v1802 = vpack.c.b16 %v1466, %v1454
        %v1803 = vpack.c.b16 %v1467, %v1455
        %v1804 = vpack.c.b16 %v1468, %v1456
        %v1805 = vpack.c.b16 %v1469, %v1457
        %v1806 = vpack.c.b16 %v1470, %v1458
        %v1807 = vpack.c.b16 %v1471, %v1459
        %v1808 = vpack.c.b16 %v1472, %v1460
        %v1809 = vpack.c.b16 %v1473, %v1461
        %v1810 = vpack.c.b16 %v1474, %v1462
        %v1811 = vpack.c.b16 %v1475, %v1463
        %v1812 = vpack.c.b16 %v1476, %v1464
        %v1813 = vpack.c.b16 %v1477, %v1465
        %v1814 = vpack.c.b16 %v1490, %v1478
        %v1815 = vpack.c.b16 %v1491, %v1479
        %v1816 = vpack.c.b16 %v1492, %v1480
        %v1817 = vpack.c.b16 %v1493, %v1481
        %v1818 = vpack.c.b16 %v1494, %v1482
        %v1819 = vpack.c.b16 %v1495, %v1483
        %v1820 = vpack.c.b16 %v1496, %v1484
        %v1821 = vpack.c.b16 %v1497, %v1485
        %v1822 = vpack.c.b16 %v1498, %v1486
        %v1823 = vpack.c.b16 %v1499, %v1487
        %v1824 = vpack.c.b16 %v1500, %v1488
        %v1825 = vpack.c.b16 %v1501, %v1489
        %v1826 = vpack.c.b16 %v1514, %v1502
        %v1827 = vpack.c.b16 %v1515, %v1503
        %v1828 = vpack.c.b16 %v1516, %v1504
        %v1829 = vpack.c.b16 %v1517, %v1505
        %v1830 = vpack.c.b16 %v1518, %v1506
        %v1831 = vpack.c.b16 %v1519, %v1507
        %v1832 = vpack.c.b16 %v1520, %v1508
        %v1833 = vpack.c.b16 %v1521, %v1509
        %v1834 = vpack.c.b16 %v1522, %v1510
        %v1835 = vpack.c.b16 %v1523, %v1511
        %v1836 = vpack.c.b16 %v1524, %v1512
        %v1837 = vpack.c.b16 %v1525, %v1513
        %v1838 = vpack.c.b16 %v1538, %v1526
        %v1839 = vpack.c.b16 %v1539, %v1527
        %v1840 = vpack.c.b16 %v1540, %v1528
        %v1841 = vpack.c.b16 %v1541, %v1529
        %v1842 = vpack.c.b16 %v1542, %v1530
        %v1843 = vpack.c.b16 %v1543, %v1531
        %v1844 = vpack.c.b16 %v1544, %v1532
        %v1845 = vpack.c.b16 %v1545, %v1533
        %v1846 = vpack.c.b16 %v1546, %v1534
        %v1847 = vpack.c.b16 %v1547, %v1535
        %v1848 = vpack.c.b16 %v1548, %v1536
        %v1849 = vpack.c.b16 %v1549, %v1537
        %v1850 = vpack.c.b16 %v1562, %v1550
        %v1851 = vpack.c.b16 %v1563, %v1551
        %v1852 = vpack.c.b16 %v1564, %v1552
        %v1853 = vpack.c.b16 %v1565, %v1553
        %v1854 = vpack.c.b16 %v1566, %v1554
        %v1855 = vpack.c.b16 %v1567, %v1555
        %v1856 = vpack.c.b16 %v1568, %v1556
        %v1857 = vpack.c.b16 %v1569, %v1557
        %v1858 = vpack.c.b16 %v1570, %v1558
        %v1859 = vpack.c.b16 %v1571, %v1559
        %v1860 = vpack.c.b16 %v1572, %v1560
        %v1861 = vpack.c.b16 %v1573, %v1561
        %2150 = vmatprep.subr.bf16.mxu0 %v1575
        %2151 = vmatpush1.bf16.msra.mxu0 %v1574
        %2152 = vmatprep.subr.bf16.mxu0 %v1587
        %2153 = vmatpush1.bf16.msra.mxu0 %v1586
        %2154 = vmatprep.subr.bf16.mxu0 %v1599
        %2155 = vmatpush1.bf16.msra.mxu0 %v1598
        %2156 = vmatprep.subr.bf16.mxu0 %v1611
        %2157 = vmatpush1.bf16.msra.mxu0 %v1610
        %2158 = vmatprep.subr.bf16.mxu0 %v1623
        %2159 = vmatpush1.bf16.msra.mxu0 %v1622
        %2160 = vmatprep.subr.bf16.mxu0 %v1635
        %2161 = vmatpush1.bf16.msra.mxu0 %v1634
        %2162 = vmatprep.subr.bf16.mxu0 %v1647
        %2163 = vmatpush1.bf16.msra.mxu0 %v1646
        %2164 = vmatprep.subr.bf16.mxu0 %v1659
        %2165 = vmatpush1.bf16.msra.mxu0 %v1658
        %2166 = vmatprep.subr.bf16.mxu0 %v1671
        %2167 = vmatpush1.bf16.msra.mxu0 %v1670
        %2168 = vmatprep.subr.bf16.mxu0 %v1683
        %2169 = vmatpush1.bf16.msra.mxu0 %v1682
        %2170 = vmatprep.subr.bf16.mxu0 %v1695
        %2171 = vmatpush1.bf16.msra.mxu0 %v1694
        %2172 = vmatprep.subr.bf16.mxu0 %v1707
        %2173 = vmatpush1.bf16.msra.mxu0 %v1706
        %2174 = vmatprep.subr.bf16.mxu0 %v1719
        %2175 = vmatpush1.bf16.msra.mxu0 %v1718
        %2176 = vmatprep.subr.bf16.mxu0 %v1731
        %2177 = vmatpush1.bf16.msra.mxu0 %v1730
        %2178 = vmatprep.subr.bf16.mxu0 %v1743
        %2179 = vmatpush1.bf16.msra.mxu0 %v1742
        %2180 = vmatprep.subr.bf16.mxu0 %v1755
        %2181 = vmatpush1.bf16.msra.mxu0 %v1754
        %2182 = vmatprep.mubr.bf16.mxu0 %v705
        %2183 = vmatmul.mubr.bf16.gmra.mrb[0].mxu0 %v704
        %v2184 = vpop.f32.mrb[0].mxu0
        %v2185 = vadd.f32 %v642, %v2184
        %v2186 = vpop.f32.mrb[0].mxu0
        %v2187 = vadd.f32 %v646, %v2186
        %v2188 = vpop.f32.mrb[0].mxu0
        %v2189 = vpop.f32.mrb[0].mxu0
        %2190 = vdwg.mxu0
        %2191 = vmatprep.subr.bf16.mxu0 %v1767
        %2192 = vmatpush1.bf16.msra.mxu0 %v1766
        %2193 = vmatprep.subr.bf16.mxu0 %v1779
        %2194 = vmatpush1.bf16.msra.mxu0 %v1778
        %2195 = vmatprep.subr.bf16.mxu0 %v1791
        %2196 = vmatpush1.bf16.msra.mxu0 %v1790
        %2197 = vmatprep.subr.bf16.mxu0 %v1803
        %2198 = vmatpush1.bf16.msra.mxu0 %v1802
        %2199 = vmatprep.subr.bf16.mxu0 %v1815
        %2200 = vmatpush1.bf16.msra.mxu0 %v1814
        %2201 = vmatprep.subr.bf16.mxu0 %v1827
        %2202 = vmatpush1.bf16.msra.mxu0 %v1826
        %2203 = vmatprep.subr.bf16.mxu0 %v1839
        %2204 = vmatpush1.bf16.msra.mxu0 %v1838
        %2205 = vmatprep.subr.bf16.mxu0 %v1851
        %2206 = vmatpush1.bf16.msra.mxu0 %v1850
        %2207 = vmatprep.subr.bf16.mxu0 0
        %2208 = vmatpush1.bf16.msra.mxu0 0
        %2209 = vmatprep.subr.bf16.mxu0 0
        %2210 = vmatpush1.bf16.msra.mxu0 0
        %2211 = vmatprep.subr.bf16.mxu0 0
        %2212 = vmatpush1.bf16.msra.mxu0 0
        %2213 = vmatprep.subr.bf16.mxu0 0
        %2214 = vmatpush1.bf16.msra.mxu0 0
        %2215 = vmatprep.subr.bf16.mxu0 0
        %2216 = vmatpush1.bf16.msra.mxu0 0
        %2217 = vmatprep.subr.bf16.mxu0 0
        %2218 = vmatpush1.bf16.msra.mxu0 0
        %2219 = vmatprep.subr.bf16.mxu0 0
        %2220 = vmatpush1.bf16.msra.mxu0 0
        %2221 = vmatprep.subr.bf16.mxu0 0
        %2222 = vmatpush1.bf16.msra.mxu0 0
        %2223 = vmatprep.mubr.bf16.mxu0 0
        %2224 = vmatmul.mubr.bf16.gmra.mrb[0].mxu0 %v706
        %v2225 = vpop.f32.mrb[0].mxu0
        %v2226 = vadd.f32 %v2185, %v2225
        %v2227 = vpop.f32.mrb[0].mxu0
        %v2228 = vadd.f32 %v2187, %v2227
        %v2229 = vpop.f32.mrb[0].mxu0
        %v2230 = vpop.f32.mrb[0].mxu0
        %2231 = vdwg.mxu0
        %2232 = vmatprep.subr.bf16.mxu0 %v1577
        %2233 = vmatpush1.bf16.msra.mxu0 %v1576
        %2234 = vmatprep.subr.bf16.mxu0 %v1589
        %2235 = vmatpush1.bf16.msra.mxu0 %v1588
        %2236 = vmatprep.subr.bf16.mxu0 %v1601
        %2237 = vmatpush1.bf16.msra.mxu0 %v1600
        %2238 = vmatprep.subr.bf16.mxu0 %v1613
        %2239 = vmatpush1.bf16.msra.mxu0 %v1612
        %2240 = vmatprep.subr.bf16.mxu0 %v1625
        %2241 = vmatpush1.bf16.msra.mxu0 %v1624
        %2242 = vmatprep.subr.bf16.mxu0 %v1637
        %2243 = vmatpush1.bf16.msra.mxu0 %v1636
        %2244 = vmatprep.subr.bf16.mxu0 %v1649
        %2245 = vmatpush1.bf16.msra.mxu0 %v1648
        %2246 = vmatprep.subr.bf16.mxu0 %v1661
        %2247 = vmatpush1.bf16.msra.mxu0 %v1660
        %2248 = vmatprep.subr.bf16.mxu0 %v1673
        %2249 = vmatpush1.bf16.msra.mxu0 %v1672
        %2250 = vmatprep.subr.bf16.mxu0 %v1685
        %2251 = vmatpush1.bf16.msra.mxu0 %v1684
        %2252 = vmatprep.subr.bf16.mxu0 %v1697
        %2253 = vmatpush1.bf16.msra.mxu0 %v1696
        %2254 = vmatprep.subr.bf16.mxu0 %v1709
        %2255 = vmatpush1.bf16.msra.mxu0 %v1708
        %2256 = vmatprep.subr.bf16.mxu0 %v1721
        %2257 = vmatpush1.bf16.msra.mxu0 %v1720
        %2258 = vmatprep.subr.bf16.mxu0 %v1733
        %2259 = vmatpush1.bf16.msra.mxu0 %v1732
        %2260 = vmatprep.subr.bf16.mxu0 %v1745
        %2261 = vmatpush1.bf16.msra.mxu0 %v1744
        %2262 = vmatprep.subr.bf16.mxu0 %v1757
        %2263 = vmatpush1.bf16.msra.mxu0 %v1756
        %2264 = vmatprep.mubr.bf16.mxu0 %v705
        %2265 = vmatmul.mubr.bf16.gmra.mrb[0].mxu0 %v704
        %v2266 = vpop.f32.mrb[0].mxu0
        %v2267 = vadd.f32 %v650, %v2266
        %v2268 = vpop.f32.mrb[0].mxu0
        %v2269 = vadd.f32 %v654, %v2268
        %v2270 = vpop.f32.mrb[0].mxu0
        %v2271 = vpop.f32.mrb[0].mxu0
        %2272 = vdwg.mxu0
        %2273 = vmatprep.subr.bf16.mxu0 %v1769
        %2274 = vmatpush1.bf16.msra.mxu0 %v1768
        %2275 = vmatprep.subr.bf16.mxu0 %v1781
        %2276 = vmatpush1.bf16.msra.mxu0 %v1780
        %2277 = vmatprep.subr.bf16.mxu0 %v1793
        %2278 = vmatpush1.bf16.msra.mxu0 %v1792
        %2279 = vmatprep.subr.bf16.mxu0 %v1805
        %2280 = vmatpush1.bf16.msra.mxu0 %v1804
        %2281 = vmatprep.subr.bf16.mxu0 %v1817
        %2282 = vmatpush1.bf16.msra.mxu0 %v1816
        %2283 = vmatprep.subr.bf16.mxu0 %v1829
        %2284 = vmatpush1.bf16.msra.mxu0 %v1828
        %2285 = vmatprep.subr.bf16.mxu0 %v1841
        %2286 = vmatpush1.bf16.msra.mxu0 %v1840
        %2287 = vmatprep.subr.bf16.mxu0 %v1853
        %2288 = vmatpush1.bf16.msra.mxu0 %v1852
        %2289 = vmatprep.subr.bf16.mxu0 0
        %2290 = vmatpush1.bf16.msra.mxu0 0
        %2291 = vmatprep.subr.bf16.mxu0 0
        %2292 = vmatpush1.bf16.msra.mxu0 0
        %2293 = vmatprep.subr.bf16.mxu0 0
        %2294 = vmatpush1.bf16.msra.mxu0 0
        %2295 = vmatprep.subr.bf16.mxu0 0
        %2296 = vmatpush1.bf16.msra.mxu0 0
        %2297 = vmatprep.subr.bf16.mxu0 0
        %2298 = vmatpush1.bf16.msra.mxu0 0
        %2299 = vmatprep.subr.bf16.mxu0 0
        %2300 = vmatpush1.bf16.msra.mxu0 0
        %2301 = vmatprep.subr.bf16.mxu0 0
        %2302 = vmatpush1.bf16.msra.mxu0 0
        %2303 = vmatprep.subr.bf16.mxu0 0
        %2304 = vmatpush1.bf16.msra.mxu0 0
        %2305 = vmatprep.mubr.bf16.mxu0 0
        %2306 = vmatmul.mubr.bf16.gmra.mrb[0].mxu0 %v706
        %v2307 = vpop.f32.mrb[0].mxu0
        %v2308 = vadd.f32 %v2267, %v2307
        %v2309 = vpop.f32.mrb[0].mxu0
        %v2310 = vadd.f32 %v2269, %v2309
        %v2311 = vpop.f32.mrb[0].mxu0
        %v2312 = vpop.f32.mrb[0].mxu0
        %2313 = vdwg.mxu0
        %2314 = vmatprep.subr.bf16.mxu0 %v1579
        %2315 = vmatpush1.bf16.msra.mxu0 %v1578
        %2316 = vmatprep.subr.bf16.mxu0 %v1591
        %2317 = vmatpush1.bf16.msra.mxu0 %v1590
        %2318 = vmatprep.subr.bf16.mxu0 %v1603
        %2319 = vmatpush1.bf16.msra.mxu0 %v1602
        %2320 = vmatprep.subr.bf16.mxu0 %v1615
        %2321 = vmatpush1.bf16.msra.mxu0 %v1614
        %2322 = vmatprep.subr.bf16.mxu0 %v1627
        %2323 = vmatpush1.bf16.msra.mxu0 %v1626
        %2324 = vmatprep.subr.bf16.mxu0 %v1639
        %2325 = vmatpush1.bf16.msra.mxu0 %v1638
        %2326 = vmatprep.subr.bf16.mxu0 %v1651
        %2327 = vmatpush1.bf16.msra.mxu0 %v1650
        %2328 = vmatprep.subr.bf16.mxu0 %v1663
        %2329 = vmatpush1.bf16.msra.mxu0 %v1662
        %2330 = vmatprep.subr.bf16.mxu0 %v1675
        %2331 = vmatpush1.bf16.msra.mxu0 %v1674
        %2332 = vmatprep.subr.bf16.mxu0 %v1687
        %2333 = vmatpush1.bf16.msra.mxu0 %v1686
        %2334 = vmatprep.subr.bf16.mxu0 %v1699
        %2335 = vmatpush1.bf16.msra.mxu0 %v1698
        %2336 = vmatprep.subr.bf16.mxu0 %v1711
        %2337 = vmatpush1.bf16.msra.mxu0 %v1710
        %2338 = vmatprep.subr.bf16.mxu0 %v1723
        %2339 = vmatpush1.bf16.msra.mxu0 %v1722
        %2340 = vmatprep.subr.bf16.mxu0 %v1735
        %2341 = vmatpush1.bf16.msra.mxu0 %v1734
        %2342 = vmatprep.subr.bf16.mxu0 %v1747
        %2343 = vmatpush1.bf16.msra.mxu0 %v1746
        %2344 = vmatprep.subr.bf16.mxu0 %v1759
        %2345 = vmatpush1.bf16.msra.mxu0 %v1758
        %2346 = vmatprep.mubr.bf16.mxu0 %v705
        %2347 = vmatmul.mubr.bf16.gmra.mrb[0].mxu0 %v704
        %v2348 = vpop.f32.mrb[0].mxu0
        %v2349 = vadd.f32 %v658, %v2348
        %v2350 = vpop.f32.mrb[0].mxu0
        %v2351 = vadd.f32 %v662, %v2350
        %v2352 = vpop.f32.mrb[0].mxu0
        %v2353 = vpop.f32.mrb[0].mxu0
        %2354 = vdwg.mxu0
        %2355 = vmatprep.subr.bf16.mxu0 %v1771
        %2356 = vmatpush1.bf16.msra.mxu0 %v1770
        %2357 = vmatprep.subr.bf16.mxu0 %v1783
        %2358 = vmatpush1.bf16.msra.mxu0 %v1782
        %2359 = vmatprep.subr.bf16.mxu0 %v1795
        %2360 = vmatpush1.bf16.msra.mxu0 %v1794
        %2361 = vmatprep.subr.bf16.mxu0 %v1807
        %2362 = vmatpush1.bf16.msra.mxu0 %v1806
        %2363 = vmatprep.subr.bf16.mxu0 %v1819
        %2364 = vmatpush1.bf16.msra.mxu0 %v1818
        %2365 = vmatprep.subr.bf16.mxu0 %v1831
        %2366 = vmatpush1.bf16.msra.mxu0 %v1830
        %2367 = vmatprep.subr.bf16.mxu0 %v1843
        %2368 = vmatpush1.bf16.msra.mxu0 %v1842
        %2369 = vmatprep.subr.bf16.mxu0 %v1855
        %2370 = vmatpush1.bf16.msra.mxu0 %v1854
        %2371 = vmatprep.subr.bf16.mxu0 0
        %2372 = vmatpush1.bf16.msra.mxu0 0
        %2373 = vmatprep.subr.bf16.mxu0 0
        %2374 = vmatpush1.bf16.msra.mxu0 0
        %2375 = vmatprep.subr.bf16.mxu0 0
        %2376 = vmatpush1.bf16.msra.mxu0 0
        %2377 = vmatprep.subr.bf16.mxu0 0
        %2378 = vmatpush1.bf16.msra.mxu0 0
        %2379 = vmatprep.subr.bf16.mxu0 0
        %2380 = vmatpush1.bf16.msra.mxu0 0
        %2381 = vmatprep.subr.bf16.mxu0 0
        %2382 = vmatpush1.bf16.msra.mxu0 0
        %2383 = vmatprep.subr.bf16.mxu0 0
        %2384 = vmatpush1.bf16.msra.mxu0 0
        %2385 = vmatprep.subr.bf16.mxu0 0
        %2386 = vmatpush1.bf16.msra.mxu0 0
        %2387 = vmatprep.mubr.bf16.mxu0 0
        %2388 = vmatmul.mubr.bf16.gmra.mrb[0].mxu0 %v706
        %v2389 = vpop.f32.mrb[0].mxu0
        %v2390 = vadd.f32 %v2349, %v2389
        %v2391 = vpop.f32.mrb[0].mxu0
        %v2392 = vadd.f32 %v2351, %v2391
        %v2393 = vpop.f32.mrb[0].mxu0
        %v2394 = vpop.f32.mrb[0].mxu0
        %2395 = vdwg.mxu0
        %2396 = vmatprep.subr.bf16.mxu0 %v1581
        %2397 = vmatpush1.bf16.msra.mxu0 %v1580
        %2398 = vmatprep.subr.bf16.mxu0 %v1593
        %2399 = vmatpush1.bf16.msra.mxu0 %v1592
        %2400 = vmatprep.subr.bf16.mxu0 %v1605
        %2401 = vmatpush1.bf16.msra.mxu0 %v1604
        %2402 = vmatprep.subr.bf16.mxu0 %v1617
        %2403 = vmatpush1.bf16.msra.mxu0 %v1616
        %2404 = vmatprep.subr.bf16.mxu0 %v1629
        %2405 = vmatpush1.bf16.msra.mxu0 %v1628
        %2406 = vmatprep.subr.bf16.mxu0 %v1641
        %2407 = vmatpush1.bf16.msra.mxu0 %v1640
        %2408 = vmatprep.subr.bf16.mxu0 %v1653
        %2409 = vmatpush1.bf16.msra.mxu0 %v1652
        %2410 = vmatprep.subr.bf16.mxu0 %v1665
        %2411 = vmatpush1.bf16.msra.mxu0 %v1664
        %2412 = vmatprep.subr.bf16.mxu0 %v1677
        %2413 = vmatpush1.bf16.msra.mxu0 %v1676
        %2414 = vmatprep.subr.bf16.mxu0 %v1689
        %2415 = vmatpush1.bf16.msra.mxu0 %v1688
        %2416 = vmatprep.subr.bf16.mxu0 %v1701
        %2417 = vmatpush1.bf16.msra.mxu0 %v1700
        %2418 = vmatprep.subr.bf16.mxu0 %v1713
        %2419 = vmatpush1.bf16.msra.mxu0 %v1712
        %2420 = vmatprep.subr.bf16.mxu0 %v1725
        %2421 = vmatpush1.bf16.msra.mxu0 %v1724
        %2422 = vmatprep.subr.bf16.mxu0 %v1737
        %2423 = vmatpush1.bf16.msra.mxu0 %v1736
        %2424 = vmatprep.subr.bf16.mxu0 %v1749
        %2425 = vmatpush1.bf16.msra.mxu0 %v1748
        %2426 = vmatprep.subr.bf16.mxu0 %v1761
        %2427 = vmatpush1.bf16.msra.mxu0 %v1760
        %2428 = vmatprep.mubr.bf16.mxu0 %v705
        %2429 = vmatmul.mubr.bf16.gmra.mrb[0].mxu0 %v704
        %v2430 = vpop.f32.mrb[0].mxu0
        %v2431 = vadd.f32 %v666, %v2430
        %v2432 = vpop.f32.mrb[0].mxu0
        %v2433 = vadd.f32 %v670, %v2432
        %v2434 = vpop.f32.mrb[0].mxu0
        %v2435 = vpop.f32.mrb[0].mxu0
        %2436 = vdwg.mxu0
        %2437 = vmatprep.subr.bf16.mxu0 %v1773
        %2438 = vmatpush1.bf16.msra.mxu0 %v1772
        %2439 = vmatprep.subr.bf16.mxu0 %v1785
        %2440 = vmatpush1.bf16.msra.mxu0 %v1784
        %2441 = vmatprep.subr.bf16.mxu0 %v1797
        %2442 = vmatpush1.bf16.msra.mxu0 %v1796
        %2443 = vmatprep.subr.bf16.mxu0 %v1809
        %2444 = vmatpush1.bf16.msra.mxu0 %v1808
        %2445 = vmatprep.subr.bf16.mxu0 %v1821
        %2446 = vmatpush1.bf16.msra.mxu0 %v1820
        %2447 = vmatprep.subr.bf16.mxu0 %v1833
        %2448 = vmatpush1.bf16.msra.mxu0 %v1832
        %2449 = vmatprep.subr.bf16.mxu0 %v1845
        %2450 = vmatpush1.bf16.msra.mxu0 %v1844
        %2451 = vmatprep.subr.bf16.mxu0 %v1857
        %2452 = vmatpush1.bf16.msra.mxu0 %v1856
        %2453 = vmatprep.subr.bf16.mxu0 0
        %2454 = vmatpush1.bf16.msra.mxu0 0
        %2455 = vmatprep.subr.bf16.mxu0 0
        %2456 = vmatpush1.bf16.msra.mxu0 0
        %2457 = vmatprep.subr.bf16.mxu0 0
        %2458 = vmatpush1.bf16.msra.mxu0 0
        %2459 = vmatprep.subr.bf16.mxu0 0
        %2460 = vmatpush1.bf16.msra.mxu0 0
        %2461 = vmatprep.subr.bf16.mxu0 0
        %2462 = vmatpush1.bf16.msra.mxu0 0
        %2463 = vmatprep.subr.bf16.mxu0 0
        %2464 = vmatpush1.bf16.msra.mxu0 0
        %2465 = vmatprep.subr.bf16.mxu0 0
        %2466 = vmatpush1.bf16.msra.mxu0 0
        %2467 = vmatprep.subr.bf16.mxu0 0
        %2468 = vmatpush1.bf16.msra.mxu0 0
        %2469 = vmatprep.mubr.bf16.mxu0 0
        %2470 = vmatmul.mubr.bf16.gmra.mrb[0].mxu0 %v706
        %v2471 = vpop.f32.mrb[0].mxu0
        %v2472 = vadd.f32 %v2431, %v2471
        %v2473 = vpop.f32.mrb[0].mxu0
        %v2474 = vadd.f32 %v2433, %v2473
        %v2475 = vpop.f32.mrb[0].mxu0
        %v2476 = vpop.f32.mrb[0].mxu0
        %2477 = vdwg.mxu0
        %2478 = vmatprep.subr.bf16.mxu0 %v1583
        %2479 = vmatpush1.bf16.msra.mxu0 %v1582
        %2480 = vmatprep.subr.bf16.mxu0 %v1595
        %2481 = vmatpush1.bf16.msra.mxu0 %v1594
        %2482 = vmatprep.subr.bf16.mxu0 %v1607
        %2483 = vmatpush1.bf16.msra.mxu0 %v1606
        %2484 = vmatprep.subr.bf16.mxu0 %v1619
        %2485 = vmatpush1.bf16.msra.mxu0 %v1618
        %2486 = vmatprep.subr.bf16.mxu0 %v1631
        %2487 = vmatpush1.bf16.msra.mxu0 %v1630
        %2488 = vmatprep.subr.bf16.mxu0 %v1643
        %2489 = vmatpush1.bf16.msra.mxu0 %v1642
        %2490 = vmatprep.subr.bf16.mxu0 %v1655
        %2491 = vmatpush1.bf16.msra.mxu0 %v1654
        %2492 = vmatprep.subr.bf16.mxu0 %v1667
        %2493 = vmatpush1.bf16.msra.mxu0 %v1666
        %2494 = vmatprep.subr.bf16.mxu0 %v1679
        %2495 = vmatpush1.bf16.msra.mxu0 %v1678
        %2496 = vmatprep.subr.bf16.mxu0 %v1691
        %2497 = vmatpush1.bf16.msra.mxu0 %v1690
        %2498 = vmatprep.subr.bf16.mxu0 %v1703
        %2499 = vmatpush1.bf16.msra.mxu0 %v1702
        %2500 = vmatprep.subr.bf16.mxu0 %v1715
        %2501 = vmatpush1.bf16.msra.mxu0 %v1714
        %2502 = vmatprep.subr.bf16.mxu0 %v1727
        %2503 = vmatpush1.bf16.msra.mxu0 %v1726
        %2504 = vmatprep.subr.bf16.mxu0 %v1739
        %2505 = vmatpush1.bf16.msra.mxu0 %v1738
        %2506 = vmatprep.subr.bf16.mxu0 %v1751
        %2507 = vmatpush1.bf16.msra.mxu0 %v1750
        %2508 = vmatprep.subr.bf16.mxu0 %v1763
        %2509 = vmatpush1.bf16.msra.mxu0 %v1762
        %2510 = vmatprep.mubr.bf16.mxu0 %v705
        %2511 = vmatmul.mubr.bf16.gmra.mrb[0].mxu0 %v704
        %v2512 = vpop.f32.mrb[0].mxu0
        %v2513 = vadd.f32 %v674, %v2512
        %v2514 = vpop.f32.mrb[0].mxu0
        %v2515 = vadd.f32 %v678, %v2514
        %v2516 = vpop.f32.mrb[0].mxu0
        %v2517 = vpop.f32.mrb[0].mxu0
        %2518 = vdwg.mxu0
        %2519 = vmatprep.subr.bf16.mxu0 %v1775
        %2520 = vmatpush1.bf16.msra.mxu0 %v1774
        %2521 = vmatprep.subr.bf16.mxu0 %v1787
        %2522 = vmatpush1.bf16.msra.mxu0 %v1786
        %2523 = vmatprep.subr.bf16.mxu0 %v1799
        %2524 = vmatpush1.bf16.msra.mxu0 %v1798
        %2525 = vmatprep.subr.bf16.mxu0 %v1811
        %2526 = vmatpush1.bf16.msra.mxu0 %v1810
        %2527 = vmatprep.subr.bf16.mxu0 %v1823
        %2528 = vmatpush1.bf16.msra.mxu0 %v1822
        %2529 = vmatprep.subr.bf16.mxu0 %v1835
        %2530 = vmatpush1.bf16.msra.mxu0 %v1834
        %2531 = vmatprep.subr.bf16.mxu0 %v1847
        %2532 = vmatpush1.bf16.msra.mxu0 %v1846
        %2533 = vmatprep.subr.bf16.mxu0 %v1859
        %2534 = vmatpush1.bf16.msra.mxu0 %v1858
        %2535 = vmatprep.subr.bf16.mxu0 0
        %2536 = vmatpush1.bf16.msra.mxu0 0
        %2537 = vmatprep.subr.bf16.mxu0 0
        %2538 = vmatpush1.bf16.msra.mxu0 0
        %2539 = vmatprep.subr.bf16.mxu0 0
        %2540 = vmatpush1.bf16.msra.mxu0 0
        %2541 = vmatprep.subr.bf16.mxu0 0
        %2542 = vmatpush1.bf16.msra.mxu0 0
        %2543 = vmatprep.subr.bf16.mxu0 0
        %2544 = vmatpush1.bf16.msra.mxu0 0
        %2545 = vmatprep.subr.bf16.mxu0 0
        %2546 = vmatpush1.bf16.msra.mxu0 0
        %2547 = vmatprep.subr.bf16.mxu0 0
        %2548 = vmatpush1.bf16.msra.mxu0 0
        %2549 = vmatprep.subr.bf16.mxu0 0
        %2550 = vmatpush1.bf16.msra.mxu0 0
        %2551 = vmatprep.mubr.bf16.mxu0 0
        %2552 = vmatmul.mubr.bf16.gmra.mrb[0].mxu0 %v706
        %v2553 = vpop.f32.mrb[0].mxu0
        %v2554 = vadd.f32 %v2513, %v2553
        %v2555 = vpop.f32.mrb[0].mxu0
        %v2556 = vadd.f32 %v2515, %v2555
        %v2557 = vpop.f32.mrb[0].mxu0
        %v2558 = vpop.f32.mrb[0].mxu0
        %2559 = vdwg.mxu0
        %2560 = vmatprep.subr.bf16.mxu0 %v1585
        %2561 = vmatpush1.bf16.msra.mxu0 %v1584
        %2562 = vmatprep.subr.bf16.mxu0 %v1597
        %2563 = vmatpush1.bf16.msra.mxu0 %v1596
        %2564 = vmatprep.subr.bf16.mxu0 %v1609
        %2565 = vmatpush1.bf16.msra.mxu0 %v1608
        %2566 = vmatprep.subr.bf16.mxu0 %v1621
        %2567 = vmatpush1.bf16.msra.mxu0 %v1620
        %2568 = vmatprep.subr.bf16.mxu0 %v1633
        %2569 = vmatpush1.bf16.msra.mxu0 %v1632
        %2570 = vmatprep.subr.bf16.mxu0 %v1645
        %2571 = vmatpush1.bf16.msra.mxu0 %v1644
        %2572 = vmatprep.subr.bf16.mxu0 %v1657
        %2573 = vmatpush1.bf16.msra.mxu0 %v1656
        %2574 = vmatprep.subr.bf16.mxu0 %v1669
        %2575 = vmatpush1.bf16.msra.mxu0 %v1668
        %2576 = vmatprep.subr.bf16.mxu0 %v1681
        %2577 = vmatpush1.bf16.msra.mxu0 %v1680
        %2578 = vmatprep.subr.bf16.mxu0 %v1693
        %2579 = vmatpush1.bf16.msra.mxu0 %v1692
        %2580 = vmatprep.subr.bf16.mxu0 %v1705
        %2581 = vmatpush1.bf16.msra.mxu0 %v1704
        %2582 = vmatprep.subr.bf16.mxu0 %v1717
        %2583 = vmatpush1.bf16.msra.mxu0 %v1716
        %2584 = vmatprep.subr.bf16.mxu0 %v1729
        %2585 = vmatpush1.bf16.msra.mxu0 %v1728
        %2586 = vmatprep.subr.bf16.mxu0 %v1741
        %2587 = vmatpush1.bf16.msra.mxu0 %v1740
        %2588 = vmatprep.subr.bf16.mxu0 %v1753
        %2589 = vmatpush1.bf16.msra.mxu0 %v1752
        %2590 = vmatprep.subr.bf16.mxu0 %v1765
        %2591 = vmatpush1.bf16.msra.mxu0 %v1764
        %2592 = vmatprep.mubr.bf16.mxu0 %v705
        %2593 = vmatmul.mubr.bf16.gmra.mrb[0].mxu0 %v704
        %v2594 = vpop.f32.mrb[0].mxu0
        %v2595 = vadd.f32 %v682, %v2594
        %v2596 = vpop.f32.mrb[0].mxu0
        %v2597 = vadd.f32 %v686, %v2596
        %v2598 = vpop.f32.mrb[0].mxu0
        %v2599 = vpop.f32.mrb[0].mxu0
        %2600 = vdwg.mxu0
        %2601 = vmatprep.subr.bf16.mxu0 %v1777
        %2602 = vmatpush1.bf16.msra.mxu0 %v1776
        %2603 = vmatprep.subr.bf16.mxu0 %v1789
        %2604 = vmatpush1.bf16.msra.mxu0 %v1788
        %2605 = vmatprep.subr.bf16.mxu0 %v1801
        %2606 = vmatpush1.bf16.msra.mxu0 %v1800
        %2607 = vmatprep.subr.bf16.mxu0 %v1813
        %2608 = vmatpush1.bf16.msra.mxu0 %v1812
        %2609 = vmatprep.subr.bf16.mxu0 %v1825
        %2610 = vmatpush1.bf16.msra.mxu0 %v1824
        %2611 = vmatprep.subr.bf16.mxu0 %v1837
        %2612 = vmatpush1.bf16.msra.mxu0 %v1836
        %2613 = vmatprep.subr.bf16.mxu0 %v1849
        %2614 = vmatpush1.bf16.msra.mxu0 %v1848
        %2615 = vmatprep.subr.bf16.mxu0 %v1861
        %2616 = vmatpush1.bf16.msra.mxu0 %v1860
        %2617 = vmatprep.subr.bf16.mxu0 0
        %2618 = vmatpush1.bf16.msra.mxu0 0
        %2619 = vmatprep.subr.bf16.mxu0 0
        %2620 = vmatpush1.bf16.msra.mxu0 0
        %2621 = vmatprep.subr.bf16.mxu0 0
        %2622 = vmatpush1.bf16.msra.mxu0 0
        %2623 = vmatprep.subr.bf16.mxu0 0
        %2624 = vmatpush1.bf16.msra.mxu0 0
        %2625 = vmatprep.subr.bf16.mxu0 0
        %2626 = vmatpush1.bf16.msra.mxu0 0
        %2627 = vmatprep.subr.bf16.mxu0 0
        %2628 = vmatpush1.bf16.msra.mxu0 0
        %2629 = vmatprep.subr.bf16.mxu0 0
        %2630 = vmatpush1.bf16.msra.mxu0 0
        %2631 = vmatprep.subr.bf16.mxu0 0
        %2632 = vmatpush1.bf16.msra.mxu0 0
        %2633 = vmatprep.mubr.bf16.mxu0 0
        %2634 = vmatmul.mubr.bf16.gmra.mrb[0].mxu0 %v706
        %v2635 = vpop.f32.mrb[0].mxu0
        %v2636 = vadd.f32 %v2595, %v2635
        %v2637 = vpop.f32.mrb[0].mxu0
        %v2638 = vadd.f32 %v2597, %v2637
        %v2639 = vpop.f32.mrb[0].mxu0
        %v2640 = vpop.f32.mrb[0].mxu0
        %2641 = vdwg.mxu0
        %v2642 = vmax.f32 %v2226, 0.0
        %v2643 = vmax.f32 %v2228, 0.0
        %v2644 = vmax.f32 %v2308, 0.0
        %v2645 = vmax.f32 %v2310, 0.0
        %v2646 = vmax.f32 %v2390, 0.0
        %v2647 = vmax.f32 %v2392, 0.0
        %v2648 = vmax.f32 %v2472, 0.0
        %v2649 = vmax.f32 %v2474, 0.0
        %v2650 = vmax.f32 %v2554, 0.0
        %v2651 = vmax.f32 %v2556, 0.0
        %v2652 = vmax.f32 %v2636, 0.0
        %v2653 = vmax.f32 %v2638, 0.0
        %v2654 = vld [vmem:[#allocation2] sm:$0xff]
        %v2655 = vld [vmem:[#allocation2 + $0x8] sm:$0xff]
        %v2656 = vld [vmem:[#allocation2 + $0x10] sm:$0xff]
        %v2657 = vpack.c.bf16 %v2642, %v2642
        %v2658 = vpack.c.bf16 %v2643, %v2643
        %v2659 = vpack.c.bf16 %v2644, %v2644
        %v2660 = vpack.c.bf16 %v2645, %v2645
        %v2661 = vpack.c.bf16 %v2646, %v2646
        %v2662 = vpack.c.bf16 %v2647, %v2647
        %v2663 = vpack.c.bf16 %v2648, %v2648
        %v2664 = vpack.c.bf16 %v2649, %v2649
        %v2665 = vpack.c.bf16 %v2650, %v2650
        %v2666 = vpack.c.bf16 %v2651, %v2651
        %v2667 = vpack.c.bf16 %v2652, %v2652
        %v2668 = vpack.c.bf16 %v2653, %v2653
        %v2669 = vld [vmem:[#allocation11] sm:$0xff]
        %v2670 = vld [vmem:[#allocation11 + $0x8] sm:$0xf]
        %v2671 = vld [vmem:[#allocation11 + $0xc] sm:$0xff]
        %v2672 = vld [vmem:[#allocation11 + $0x14] sm:$0xf]
        %v2673 = vld [vmem:[#allocation11 + $0x18] sm:$0xff]
        %v2674 = vld [vmem:[#allocation11 + $0x20] sm:$0xf]
        %v2675 = vld [vmem:[#allocation11 + $0x24] sm:$0xff]
        %v2676 = vld [vmem:[#allocation11 + $0x2c] sm:$0xf]
        %v2677 = vld [vmem:[#allocation11 + $0x30] sm:$0xff]
        %v2678 = vld [vmem:[#allocation11 + $0x38] sm:$0xf]
        %v2679 = vld [vmem:[#allocation11 + $0x3c] sm:$0xff]
        %v2680 = vld [vmem:[#allocation11 + $0x44] sm:$0xf]
        %v2681 = vld [vmem:[#allocation11 + $0x48] sm:$0xff]
        %v2682 = vld [vmem:[#allocation11 + $0x50] sm:$0xf]
        %v2683 = vld [vmem:[#allocation11 + $0x54] sm:$0xff]
        %v2684 = vld [vmem:[#allocation11 + $0x5c] sm:$0xf]
        %v2685 = vld [vmem:[#allocation11 + $0x60] sm:$0xff]
        %v2686 = vld [vmem:[#allocation11 + $0x68] sm:$0xf]
        %v2687 = vld [vmem:[#allocation11 + $0x6c] sm:$0xff]
        %v2688 = vld [vmem:[#allocation11 + $0x74] sm:$0xf]
        %v2689 = vld [vmem:[#allocation11 + $0x78] sm:$0xff]
        %v2690 = vld [vmem:[#allocation11 + $0x80] sm:$0xf]
        %v2691 = vld [vmem:[#allocation11 + $0x84] sm:$0xff]
        %v2692 = vld [vmem:[#allocation11 + $0x8c] sm:$0xf]
        %v2693 = vld [vmem:[#allocation11 + $0x90] sm:$0xff]
        %v2694 = vld [vmem:[#allocation11 + $0x98] sm:$0xf]
        %v2695 = vld [vmem:[#allocation11 + $0x9c] sm:$0xff]
        %v2696 = vld [vmem:[#allocation11 + $0xa4] sm:$0xf]
        %v2697 = vld [vmem:[#allocation11 + $0xa8] sm:$0xff]
        %v2698 = vld [vmem:[#allocation11 + $0xb0] sm:$0xf]
        %v2699 = vld [vmem:[#allocation11 + $0xb4] sm:$0xff]
        %v2700 = vld [vmem:[#allocation11 + $0xbc] sm:$0xf]
        %v2701 = vld [vmem:[#allocation11 + $0xc0] sm:$0xff]
        %v2702 = vld [vmem:[#allocation11 + $0xc8] sm:$0xf]
        %v2703 = vld [vmem:[#allocation11 + $0xcc] sm:$0xff]
        %v2704 = vld [vmem:[#allocation11 + $0xd4] sm:$0xf]
        %v2705 = vld [vmem:[#allocation11 + $0xd8] sm:$0xff]
        %v2706 = vld [vmem:[#allocation11 + $0xe0] sm:$0xf]
        %v2707 = vld [vmem:[#allocation11 + $0xe4] sm:$0xff]
        %v2708 = vld [vmem:[#allocation11 + $0xec] sm:$0xf]
        %v2709 = vld [vmem:[#allocation11 + $0xf0] sm:$0xff]
        %v2710 = vld [vmem:[#allocation11 + $0xf8] sm:$0xf]
        %v2711 = vld [vmem:[#allocation11 + $0xfc] sm:$0xff]
        %v2712 = vld [vmem:[#allocation11 + $0x104] sm:$0xf]
        %v2713 = vld [vmem:[#allocation11 + $0x108] sm:$0xff]
        %v2714 = vld [vmem:[#allocation11 + $0x110] sm:$0xf]
        %v2715 = vld [vmem:[#allocation11 + $0x114] sm:$0xff]
        %v2716 = vld [vmem:[#allocation11 + $0x11c] sm:$0xf]
        %v2717 = vld [vmem:[#allocation11 + $0x120] sm:$0xff]
        %v2718 = vld [vmem:[#allocation11 + $0x128] sm:$0xf]
        %v2719 = vld [vmem:[#allocation11 + $0x12c] sm:$0xff]
        %v2720 = vld [vmem:[#allocation11 + $0x134] sm:$0xf]
        %v2721 = vld [vmem:[#allocation11 + $0x138] sm:$0xff]
        %v2722 = vld [vmem:[#allocation11 + $0x140] sm:$0xf]
        %v2723 = vld [vmem:[#allocation11 + $0x144] sm:$0xff]
        %v2724 = vld [vmem:[#allocation11 + $0x14c] sm:$0xf]
        %v2725 = vld [vmem:[#allocation11 + $0x150] sm:$0xff]
        %v2726 = vld [vmem:[#allocation11 + $0x158] sm:$0xf]
        %v2727 = vld [vmem:[#allocation11 + $0x15c] sm:$0xff]
        %v2728 = vld [vmem:[#allocation11 + $0x164] sm:$0xf]
        %v2729 = vld [vmem:[#allocation11 + $0x168] sm:$0xff]
        %v2730 = vld [vmem:[#allocation11 + $0x170] sm:$0xf]
        %v2731 = vld [vmem:[#allocation11 + $0x174] sm:$0xff]
        %v2732 = vld [vmem:[#allocation11 + $0x17c] sm:$0xf]
        %v2733 = vld [vmem:[#allocation11 + $0x180] sm:$0xff]
        %v2734 = vld [vmem:[#allocation11 + $0x188] sm:$0xf]
        %v2735 = vld [vmem:[#allocation11 + $0x18c] sm:$0xff]
        %v2736 = vld [vmem:[#allocation11 + $0x194] sm:$0xf]
        %v2737 = vld [vmem:[#allocation11 + $0x198] sm:$0xff]
        %v2738 = vld [vmem:[#allocation11 + $0x1a0] sm:$0xf]
        %v2739 = vld [vmem:[#allocation11 + $0x1a4] sm:$0xff]
        %v2740 = vld [vmem:[#allocation11 + $0x1ac] sm:$0xf]
        %v2741 = vld [vmem:[#allocation11 + $0x1b0] sm:$0xff]
        %v2742 = vld [vmem:[#allocation11 + $0x1b8] sm:$0xf]
        %v2743 = vld [vmem:[#allocation11 + $0x1bc] sm:$0xff]
        %v2744 = vld [vmem:[#allocation11 + $0x1c4] sm:$0xf]
        %v2745 = vld [vmem:[#allocation11 + $0x1c8] sm:$0xff]
        %v2746 = vld [vmem:[#allocation11 + $0x1d0] sm:$0xf]
        %v2747 = vld [vmem:[#allocation11 + $0x1d4] sm:$0xff]
        %v2748 = vld [vmem:[#allocation11 + $0x1dc] sm:$0xf]
        %v2749 = vld [vmem:[#allocation11 + $0x1e0] sm:$0xff]
        %v2750 = vld [vmem:[#allocation11 + $0x1e8] sm:$0xf]
        %v2751 = vld [vmem:[#allocation11 + $0x1ec] sm:$0xff]
        %v2752 = vld [vmem:[#allocation11 + $0x1f4] sm:$0xf]
        %v2753 = vld [vmem:[#allocation11 + $0x1f8] sm:$0xff]
        %v2754 = vld [vmem:[#allocation11 + $0x200] sm:$0xf]
        %v2755 = vld [vmem:[#allocation11 + $0x204] sm:$0xff]
        %v2756 = vld [vmem:[#allocation11 + $0x20c] sm:$0xf]
        %v2757 = vld [vmem:[#allocation11 + $0x210] sm:$0xff]
        %v2758 = vld [vmem:[#allocation11 + $0x218] sm:$0xf]
        %v2759 = vld [vmem:[#allocation11 + $0x21c] sm:$0xff]
        %v2760 = vld [vmem:[#allocation11 + $0x224] sm:$0xf]
        %v2761 = vld [vmem:[#allocation11 + $0x228] sm:$0xff]
        %v2762 = vld [vmem:[#allocation11 + $0x230] sm:$0xf]
        %v2763 = vld [vmem:[#allocation11 + $0x234] sm:$0xff]
        %v2764 = vld [vmem:[#allocation11 + $0x23c] sm:$0xf]
        %v2765 = vld [vmem:[#allocation11 + $0x240] sm:$0xff]
        %v2766 = vld [vmem:[#allocation11 + $0x248] sm:$0xf]
        %v2767 = vld [vmem:[#allocation11 + $0x24c] sm:$0xff]
        %v2768 = vld [vmem:[#allocation11 + $0x254] sm:$0xf]
        %v2769 = vld [vmem:[#allocation11 + $0x258] sm:$0xff]
        %v2770 = vld [vmem:[#allocation11 + $0x260] sm:$0xf]
        %v2771 = vld [vmem:[#allocation11 + $0x264] sm:$0xff]
        %v2772 = vld [vmem:[#allocation11 + $0x26c] sm:$0xf]
        %v2773 = vld [vmem:[#allocation11 + $0x270] sm:$0xff]
        %v2774 = vld [vmem:[#allocation11 + $0x278] sm:$0xf]
        %v2775 = vld [vmem:[#allocation11 + $0x27c] sm:$0xff]
        %v2776 = vld [vmem:[#allocation11 + $0x284] sm:$0xf]
        %v2777 = vld [vmem:[#allocation11 + $0x288] sm:$0xff]
        %v2778 = vld [vmem:[#allocation11 + $0x290] sm:$0xf]
        %v2779 = vld [vmem:[#allocation11 + $0x294] sm:$0xff]
        %v2780 = vld [vmem:[#allocation11 + $0x29c] sm:$0xf]
        %v2781 = vld [vmem:[#allocation11 + $0x2a0] sm:$0xff]
        %v2782 = vld [vmem:[#allocation11 + $0x2a8] sm:$0xf]
        %v2783 = vld [vmem:[#allocation11 + $0x2ac] sm:$0xff]
        %v2784 = vld [vmem:[#allocation11 + $0x2b4] sm:$0xf]
        %v2785 = vld [vmem:[#allocation11 + $0x2b8] sm:$0xff]
        %v2786 = vld [vmem:[#allocation11 + $0x2c0] sm:$0xf]
        %v2787 = vld [vmem:[#allocation11 + $0x2c4] sm:$0xff]
        %v2788 = vld [vmem:[#allocation11 + $0x2cc] sm:$0xf]
        %v2789 = vld [vmem:[#allocation11 + $0x2d0] sm:$0xff]
        %v2790 = vld [vmem:[#allocation11 + $0x2d8] sm:$0xf]
        %v2791 = vld [vmem:[#allocation11 + $0x2dc] sm:$0xff]
        %v2792 = vld [vmem:[#allocation11 + $0x2e4] sm:$0xf]
        %v2793 = vld [vmem:[#allocation11 + $0x2e8] sm:$0xff]
        %v2794 = vld [vmem:[#allocation11 + $0x2f0] sm:$0xf]
        %v2795 = vld [vmem:[#allocation11 + $0x2f4] sm:$0xff]
        %v2796 = vld [vmem:[#allocation11 + $0x2fc] sm:$0xf]
        %v2797 = vld [vmem:[#allocation11 + $0x300] sm:$0xff]
        %v2798 = vld [vmem:[#allocation11 + $0x308] sm:$0xf]
        %v2799 = vld [vmem:[#allocation11 + $0x30c] sm:$0xff]
        %v2800 = vld [vmem:[#allocation11 + $0x314] sm:$0xf]
        %v2801 = vld [vmem:[#allocation11 + $0x318] sm:$0xff]
        %v2802 = vld [vmem:[#allocation11 + $0x320] sm:$0xf]
        %v2803 = vld [vmem:[#allocation11 + $0x324] sm:$0xff]
        %v2804 = vld [vmem:[#allocation11 + $0x32c] sm:$0xf]
        %v2805 = vld [vmem:[#allocation11 + $0x330] sm:$0xff]
        %v2806 = vld [vmem:[#allocation11 + $0x338] sm:$0xf]
        %v2807 = vld [vmem:[#allocation11 + $0x33c] sm:$0xff]
        %v2808 = vld [vmem:[#allocation11 + $0x344] sm:$0xf]
        %v2809 = vld [vmem:[#allocation11 + $0x348] sm:$0xff]
        %v2810 = vld [vmem:[#allocation11 + $0x350] sm:$0xf]
        %v2811 = vld [vmem:[#allocation11 + $0x354] sm:$0xff]
        %v2812 = vld [vmem:[#allocation11 + $0x35c] sm:$0xf]
        %v2813 = vld [vmem:[#allocation11 + $0x360] sm:$0xff]
        %v2814 = vld [vmem:[#allocation11 + $0x368] sm:$0xf]
        %v2815 = vld [vmem:[#allocation11 + $0x36c] sm:$0xff]
        %v2816 = vld [vmem:[#allocation11 + $0x374] sm:$0xf]
        %v2817 = vld [vmem:[#allocation11 + $0x378] sm:$0xff]
        %v2818 = vld [vmem:[#allocation11 + $0x380] sm:$0xf]
        %v2819 = vld [vmem:[#allocation11 + $0x384] sm:$0xff]
        %v2820 = vld [vmem:[#allocation11 + $0x38c] sm:$0xf]
        %v2821 = vld [vmem:[#allocation11 + $0x390] sm:$0xff]
        %v2822 = vld [vmem:[#allocation11 + $0x398] sm:$0xf]
        %v2823 = vld [vmem:[#allocation11 + $0x39c] sm:$0xff]
        %v2824 = vld [vmem:[#allocation11 + $0x3a4] sm:$0xf]
        %v2825 = vld [vmem:[#allocation11 + $0x3a8] sm:$0xff]
        %v2826 = vld [vmem:[#allocation11 + $0x3b0] sm:$0xf]
        %v2827 = vld [vmem:[#allocation11 + $0x3b4] sm:$0xff]
        %v2828 = vld [vmem:[#allocation11 + $0x3bc] sm:$0xf]
        %v2829 = vld [vmem:[#allocation11 + $0x3c0] sm:$0xff]
        %v2830 = vld [vmem:[#allocation11 + $0x3c8] sm:$0xf]
        %v2831 = vld [vmem:[#allocation11 + $0x3cc] sm:$0xff]
        %v2832 = vld [vmem:[#allocation11 + $0x3d4] sm:$0xf]
        %v2833 = vld [vmem:[#allocation11 + $0x3d8] sm:$0xff]
        %v2834 = vld [vmem:[#allocation11 + $0x3e0] sm:$0xf]
        %v2835 = vld [vmem:[#allocation11 + $0x3e4] sm:$0xff]
        %v2836 = vld [vmem:[#allocation11 + $0x3ec] sm:$0xf]
        %v2837 = vld [vmem:[#allocation11 + $0x3f0] sm:$0xff]
        %v2838 = vld [vmem:[#allocation11 + $0x3f8] sm:$0xf]
        %v2839 = vld [vmem:[#allocation11 + $0x3fc] sm:$0xff]
        %v2840 = vld [vmem:[#allocation11 + $0x404] sm:$0xf]
        %v2841 = vld [vmem:[#allocation11 + $0x408] sm:$0xff]
        %v2842 = vld [vmem:[#allocation11 + $0x410] sm:$0xf]
        %v2843 = vld [vmem:[#allocation11 + $0x414] sm:$0xff]
        %v2844 = vld [vmem:[#allocation11 + $0x41c] sm:$0xf]
        %v2845 = vld [vmem:[#allocation11 + $0x420] sm:$0xff]
        %v2846 = vld [vmem:[#allocation11 + $0x428] sm:$0xf]
        %v2847 = vld [vmem:[#allocation11 + $0x42c] sm:$0xff]
        %v2848 = vld [vmem:[#allocation11 + $0x434] sm:$0xf]
        %v2849 = vld [vmem:[#allocation11 + $0x438] sm:$0xff]
        %v2850 = vld [vmem:[#allocation11 + $0x440] sm:$0xf]
        %v2851 = vld [vmem:[#allocation11 + $0x444] sm:$0xff]
        %v2852 = vld [vmem:[#allocation11 + $0x44c] sm:$0xf]
        %v2853 = vld [vmem:[#allocation11 + $0x450] sm:$0xff]
        %v2854 = vld [vmem:[#allocation11 + $0x458] sm:$0xf]
        %v2855 = vld [vmem:[#allocation11 + $0x45c] sm:$0xff]
        %v2856 = vld [vmem:[#allocation11 + $0x464] sm:$0xf]
        %v2857 = vld [vmem:[#allocation11 + $0x468] sm:$0xff]
        %v2858 = vld [vmem:[#allocation11 + $0x470] sm:$0xf]
        %v2859 = vld [vmem:[#allocation11 + $0x474] sm:$0xff]
        %v2860 = vld [vmem:[#allocation11 + $0x47c] sm:$0xf]
        %v2861 = vld [vmem:[#allocation11 + $0x480] sm:$0xff]
        %v2862 = vld [vmem:[#allocation11 + $0x488] sm:$0xf]
        %v2863 = vld [vmem:[#allocation11 + $0x48c] sm:$0xff]
        %v2864 = vld [vmem:[#allocation11 + $0x494] sm:$0xf]
        %v2865 = vld [vmem:[#allocation11 + $0x498] sm:$0xff]
        %v2866 = vld [vmem:[#allocation11 + $0x4a0] sm:$0xf]
        %v2867 = vld [vmem:[#allocation11 + $0x4a4] sm:$0xff]
        %v2868 = vld [vmem:[#allocation11 + $0x4ac] sm:$0xf]
        %v2869 = vld [vmem:[#allocation11 + $0x4b0] sm:$0xff]
        %v2870 = vld [vmem:[#allocation11 + $0x4b8] sm:$0xf]
        %v2871 = vld [vmem:[#allocation11 + $0x4bc] sm:$0xff]
        %v2872 = vld [vmem:[#allocation11 + $0x4c4] sm:$0xf]
        %v2873 = vld [vmem:[#allocation11 + $0x4c8] sm:$0xff]
        %v2874 = vld [vmem:[#allocation11 + $0x4d0] sm:$0xf]
        %v2875 = vld [vmem:[#allocation11 + $0x4d4] sm:$0xff]
        %v2876 = vld [vmem:[#allocation11 + $0x4dc] sm:$0xf]
        %v2877 = vld [vmem:[#allocation11 + $0x4e0] sm:$0xff]
        %v2878 = vld [vmem:[#allocation11 + $0x4e8] sm:$0xf]
        %v2879 = vld [vmem:[#allocation11 + $0x4ec] sm:$0xff]
        %v2880 = vld [vmem:[#allocation11 + $0x4f4] sm:$0xf]
        %v2881 = vld [vmem:[#allocation11 + $0x4f8] sm:$0xff]
        %v2882 = vld [vmem:[#allocation11 + $0x500] sm:$0xf]
        %v2883 = vld [vmem:[#allocation11 + $0x504] sm:$0xff]
        %v2884 = vld [vmem:[#allocation11 + $0x50c] sm:$0xf]
        %v2885 = vld [vmem:[#allocation11 + $0x510] sm:$0xff]
        %v2886 = vld [vmem:[#allocation11 + $0x518] sm:$0xf]
        %v2887 = vld [vmem:[#allocation11 + $0x51c] sm:$0xff]
        %v2888 = vld [vmem:[#allocation11 + $0x524] sm:$0xf]
        %v2889 = vld [vmem:[#allocation11 + $0x528] sm:$0xff]
        %v2890 = vld [vmem:[#allocation11 + $0x530] sm:$0xf]
        %v2891 = vld [vmem:[#allocation11 + $0x534] sm:$0xff]
        %v2892 = vld [vmem:[#allocation11 + $0x53c] sm:$0xf]
        %v2893 = vld [vmem:[#allocation11 + $0x540] sm:$0xff]
        %v2894 = vld [vmem:[#allocation11 + $0x548] sm:$0xf]
        %v2895 = vld [vmem:[#allocation11 + $0x54c] sm:$0xff]
        %v2896 = vld [vmem:[#allocation11 + $0x554] sm:$0xf]
        %v2897 = vld [vmem:[#allocation11 + $0x558] sm:$0xff]
        %v2898 = vld [vmem:[#allocation11 + $0x560] sm:$0xf]
        %v2899 = vld [vmem:[#allocation11 + $0x564] sm:$0xff]
        %v2900 = vld [vmem:[#allocation11 + $0x56c] sm:$0xf]
        %v2901 = vld [vmem:[#allocation11 + $0x570] sm:$0xff]
        %v2902 = vld [vmem:[#allocation11 + $0x578] sm:$0xf]
        %v2903 = vld [vmem:[#allocation11 + $0x57c] sm:$0xff]
        %v2904 = vld [vmem:[#allocation11 + $0x584] sm:$0xf]
        %v2905 = vld [vmem:[#allocation11 + $0x588] sm:$0xff]
        %v2906 = vld [vmem:[#allocation11 + $0x590] sm:$0xf]
        %v2907 = vld [vmem:[#allocation11 + $0x594] sm:$0xff]
        %v2908 = vld [vmem:[#allocation11 + $0x59c] sm:$0xf]
        %v2909 = vld [vmem:[#allocation11 + $0x5a0] sm:$0xff]
        %v2910 = vld [vmem:[#allocation11 + $0x5a8] sm:$0xf]
        %v2911 = vld [vmem:[#allocation11 + $0x5ac] sm:$0xff]
        %v2912 = vld [vmem:[#allocation11 + $0x5b4] sm:$0xf]
        %v2913 = vld [vmem:[#allocation11 + $0x5b8] sm:$0xff]
        %v2914 = vld [vmem:[#allocation11 + $0x5c0] sm:$0xf]
        %v2915 = vld [vmem:[#allocation11 + $0x5c4] sm:$0xff]
        %v2916 = vld [vmem:[#allocation11 + $0x5cc] sm:$0xf]
        %v2917 = vld [vmem:[#allocation11 + $0x5d0] sm:$0xff]
        %v2918 = vld [vmem:[#allocation11 + $0x5d8] sm:$0xf]
        %v2919 = vld [vmem:[#allocation11 + $0x5dc] sm:$0xff]
        %v2920 = vld [vmem:[#allocation11 + $0x5e4] sm:$0xf]
        %v2921 = vld [vmem:[#allocation11 + $0x5e8] sm:$0xff]
        %v2922 = vld [vmem:[#allocation11 + $0x5f0] sm:$0xf]
        %v2923 = vld [vmem:[#allocation11 + $0x5f4] sm:$0xff]
        %v2924 = vld [vmem:[#allocation11 + $0x5fc] sm:$0xf]
        %v2925 = vld [vmem:[#allocation11 + $0x600] sm:$0xff]
        %v2926 = vld [vmem:[#allocation11 + $0x608] sm:$0xf]
        %v2927 = vld [vmem:[#allocation11 + $0x60c] sm:$0xff]
        %v2928 = vld [vmem:[#allocation11 + $0x614] sm:$0xf]
        %v2929 = vld [vmem:[#allocation11 + $0x618] sm:$0xff]
        %v2930 = vld [vmem:[#allocation11 + $0x620] sm:$0xf]
        %v2931 = vld [vmem:[#allocation11 + $0x624] sm:$0xff]
        %v2932 = vld [vmem:[#allocation11 + $0x62c] sm:$0xf]
        %v2933 = vld [vmem:[#allocation11 + $0x630] sm:$0xff]
        %v2934 = vld [vmem:[#allocation11 + $0x638] sm:$0xf]
        %v2935 = vld [vmem:[#allocation11 + $0x63c] sm:$0xff]
        %v2936 = vld [vmem:[#allocation11 + $0x644] sm:$0xf]
        %v2937 = vld [vmem:[#allocation11 + $0x648] sm:$0xff]
        %v2938 = vld [vmem:[#allocation11 + $0x650] sm:$0xf]
        %v2939 = vld [vmem:[#allocation11 + $0x654] sm:$0xff]
        %v2940 = vld [vmem:[#allocation11 + $0x65c] sm:$0xf]
        %v2941 = vld [vmem:[#allocation11 + $0x660] sm:$0xff]
        %v2942 = vld [vmem:[#allocation11 + $0x668] sm:$0xf]
        %v2943 = vld [vmem:[#allocation11 + $0x66c] sm:$0xff]
        %v2944 = vld [vmem:[#allocation11 + $0x674] sm:$0xf]
        %v2945 = vld [vmem:[#allocation11 + $0x678] sm:$0xff]
        %v2946 = vld [vmem:[#allocation11 + $0x680] sm:$0xf]
        %v2947 = vld [vmem:[#allocation11 + $0x684] sm:$0xff]
        %v2948 = vld [vmem:[#allocation11 + $0x68c] sm:$0xf]
        %v2949 = vld [vmem:[#allocation11 + $0x690] sm:$0xff]
        %v2950 = vld [vmem:[#allocation11 + $0x698] sm:$0xf]
        %v2951 = vld [vmem:[#allocation11 + $0x69c] sm:$0xff]
        %v2952 = vld [vmem:[#allocation11 + $0x6a4] sm:$0xf]
        %v2953 = vld [vmem:[#allocation11 + $0x6a8] sm:$0xff]
        %v2954 = vld [vmem:[#allocation11 + $0x6b0] sm:$0xf]
        %v2955 = vld [vmem:[#allocation11 + $0x6b4] sm:$0xff]
        %v2956 = vld [vmem:[#allocation11 + $0x6bc] sm:$0xf]
        %v2957 = vld [vmem:[#allocation11 + $0x6c0] sm:$0xff]
        %v2958 = vld [vmem:[#allocation11 + $0x6c8] sm:$0xf]
        %v2959 = vld [vmem:[#allocation11 + $0x6cc] sm:$0xff]
        %v2960 = vld [vmem:[#allocation11 + $0x6d4] sm:$0xf]
        %v2961 = vld [vmem:[#allocation11 + $0x6d8] sm:$0xff]
        %v2962 = vld [vmem:[#allocation11 + $0x6e0] sm:$0xf]
        %v2963 = vld [vmem:[#allocation11 + $0x6e4] sm:$0xff]
        %v2964 = vld [vmem:[#allocation11 + $0x6ec] sm:$0xf]
        %v2965 = vld [vmem:[#allocation11 + $0x6f0] sm:$0xff]
        %v2966 = vld [vmem:[#allocation11 + $0x6f8] sm:$0xf]
        %v2967 = vld [vmem:[#allocation11 + $0x6fc] sm:$0xff]
        %v2968 = vld [vmem:[#allocation11 + $0x704] sm:$0xf]
        %v2969 = vld [vmem:[#allocation11 + $0x708] sm:$0xff]
        %v2970 = vld [vmem:[#allocation11 + $0x710] sm:$0xf]
        %v2971 = vld [vmem:[#allocation11 + $0x714] sm:$0xff]
        %v2972 = vld [vmem:[#allocation11 + $0x71c] sm:$0xf]
        %v2973 = vld [vmem:[#allocation11 + $0x720] sm:$0xff]
        %v2974 = vld [vmem:[#allocation11 + $0x728] sm:$0xf]
        %v2975 = vld [vmem:[#allocation11 + $0x72c] sm:$0xff]
        %v2976 = vld [vmem:[#allocation11 + $0x734] sm:$0xf]
        %v2977 = vld [vmem:[#allocation11 + $0x738] sm:$0xff]
        %v2978 = vld [vmem:[#allocation11 + $0x740] sm:$0xf]
        %v2979 = vld [vmem:[#allocation11 + $0x744] sm:$0xff]
        %v2980 = vld [vmem:[#allocation11 + $0x74c] sm:$0xf]
        %v2981 = vld [vmem:[#allocation11 + $0x750] sm:$0xff]
        %v2982 = vld [vmem:[#allocation11 + $0x758] sm:$0xf]
        %v2983 = vld [vmem:[#allocation11 + $0x75c] sm:$0xff]
        %v2984 = vld [vmem:[#allocation11 + $0x764] sm:$0xf]
        %v2985 = vld [vmem:[#allocation11 + $0x768] sm:$0xff]
        %v2986 = vld [vmem:[#allocation11 + $0x770] sm:$0xf]
        %v2987 = vld [vmem:[#allocation11 + $0x774] sm:$0xff]
        %v2988 = vld [vmem:[#allocation11 + $0x77c] sm:$0xf]
        %v2989 = vld [vmem:[#allocation11 + $0x780] sm:$0xff]
        %v2990 = vld [vmem:[#allocation11 + $0x788] sm:$0xf]
        %v2991 = vld [vmem:[#allocation11 + $0x78c] sm:$0xff]
        %v2992 = vld [vmem:[#allocation11 + $0x794] sm:$0xf]
        %v2993 = vld [vmem:[#allocation11 + $0x798] sm:$0xff]
        %v2994 = vld [vmem:[#allocation11 + $0x7a0] sm:$0xf]
        %v2995 = vld [vmem:[#allocation11 + $0x7a4] sm:$0xff]
        %v2996 = vld [vmem:[#allocation11 + $0x7ac] sm:$0xf]
        %v2997 = vld [vmem:[#allocation11 + $0x7b0] sm:$0xff]
        %v2998 = vld [vmem:[#allocation11 + $0x7b8] sm:$0xf]
        %v2999 = vld [vmem:[#allocation11 + $0x7bc] sm:$0xff]
        %v3000 = vld [vmem:[#allocation11 + $0x7c4] sm:$0xf]
        %v3001 = vld [vmem:[#allocation11 + $0x7c8] sm:$0xff]
        %v3002 = vld [vmem:[#allocation11 + $0x7d0] sm:$0xf]
        %v3003 = vld [vmem:[#allocation11 + $0x7d4] sm:$0xff]
        %v3004 = vld [vmem:[#allocation11 + $0x7dc] sm:$0xf]
        %v3005 = vld [vmem:[#allocation11 + $0x7e0] sm:$0xff]
        %v3006 = vld [vmem:[#allocation11 + $0x7e8] sm:$0xf]
        %v3007 = vld [vmem:[#allocation11 + $0x7ec] sm:$0xff]
        %v3008 = vld [vmem:[#allocation11 + $0x7f4] sm:$0xf]
        %v3009 = vld [vmem:[#allocation11 + $0x7f8] sm:$0xff]
        %v3010 = vld [vmem:[#allocation11 + $0x800] sm:$0xf]
        %v3011 = vld [vmem:[#allocation11 + $0x804] sm:$0xff]
        %v3012 = vld [vmem:[#allocation11 + $0x80c] sm:$0xf]
        %v3013 = vld [vmem:[#allocation11 + $0x810] sm:$0xff]
        %v3014 = vld [vmem:[#allocation11 + $0x818] sm:$0xf]
        %v3015 = vld [vmem:[#allocation11 + $0x81c] sm:$0xff]
        %v3016 = vld [vmem:[#allocation11 + $0x824] sm:$0xf]
        %v3017 = vld [vmem:[#allocation11 + $0x828] sm:$0xff]
        %v3018 = vld [vmem:[#allocation11 + $0x830] sm:$0xf]
        %v3019 = vld [vmem:[#allocation11 + $0x834] sm:$0xff]
        %v3020 = vld [vmem:[#allocation11 + $0x83c] sm:$0xf]
        %v3021 = vld [vmem:[#allocation11 + $0x840] sm:$0xff]
        %v3022 = vld [vmem:[#allocation11 + $0x848] sm:$0xf]
        %v3023 = vld [vmem:[#allocation11 + $0x84c] sm:$0xff]
        %v3024 = vld [vmem:[#allocation11 + $0x854] sm:$0xf]
        %v3025 = vld [vmem:[#allocation11 + $0x858] sm:$0xff]
        %v3026 = vld [vmem:[#allocation11 + $0x860] sm:$0xf]
        %v3027 = vld [vmem:[#allocation11 + $0x864] sm:$0xff]
        %v3028 = vld [vmem:[#allocation11 + $0x86c] sm:$0xf]
        %v3029 = vld [vmem:[#allocation11 + $0x870] sm:$0xff]
        %v3030 = vld [vmem:[#allocation11 + $0x878] sm:$0xf]
        %v3031 = vld [vmem:[#allocation11 + $0x87c] sm:$0xff]
        %v3032 = vld [vmem:[#allocation11 + $0x884] sm:$0xf]
        %v3033 = vld [vmem:[#allocation11 + $0x888] sm:$0xff]
        %v3034 = vld [vmem:[#allocation11 + $0x890] sm:$0xf]
        %v3035 = vld [vmem:[#allocation11 + $0x894] sm:$0xff]
        %v3036 = vld [vmem:[#allocation11 + $0x89c] sm:$0xf]
        %v3037 = vld [vmem:[#allocation11 + $0x8a0] sm:$0xff]
        %v3038 = vld [vmem:[#allocation11 + $0x8a8] sm:$0xf]
        %v3039 = vld [vmem:[#allocation11 + $0x8ac] sm:$0xff]
        %v3040 = vld [vmem:[#allocation11 + $0x8b4] sm:$0xf]
        %v3041 = vld [vmem:[#allocation11 + $0x8b8] sm:$0xff]
        %v3042 = vld [vmem:[#allocation11 + $0x8c0] sm:$0xf]
        %v3043 = vld [vmem:[#allocation11 + $0x8c4] sm:$0xff]
        %v3044 = vld [vmem:[#allocation11 + $0x8cc] sm:$0xf]
        %v3045 = vld [vmem:[#allocation11 + $0x8d0] sm:$0xff]
        %v3046 = vld [vmem:[#allocation11 + $0x8d8] sm:$0xf]
        %v3047 = vld [vmem:[#allocation11 + $0x8dc] sm:$0xff]
        %v3048 = vld [vmem:[#allocation11 + $0x8e4] sm:$0xf]
        %v3049 = vld [vmem:[#allocation11 + $0x8e8] sm:$0xff]
        %v3050 = vld [vmem:[#allocation11 + $0x8f0] sm:$0xf]
        %v3051 = vld [vmem:[#allocation11 + $0x8f4] sm:$0xff]
        %v3052 = vld [vmem:[#allocation11 + $0x8fc] sm:$0xf]
        %v3437 = vunpack.c.l.b16 %v2669
        %v3438 = vunpack.c.h.b16 %v2669
        %v3439 = vunpack.c.l.b16 %v2670
        %v3440 = vunpack.c.l.b16 %v2671
        %v3441 = vunpack.c.h.b16 %v2671
        %v3442 = vunpack.c.l.b16 %v2672
        %v3443 = vunpack.c.l.b16 %v2673
        %v3444 = vunpack.c.h.b16 %v2673
        %v3445 = vunpack.c.l.b16 %v2674
        %v3446 = vunpack.c.l.b16 %v2675
        %v3447 = vunpack.c.h.b16 %v2675
        %v3448 = vunpack.c.l.b16 %v2676
        %v3449 = vunpack.c.l.b16 %v2677
        %v3450 = vunpack.c.h.b16 %v2677
        %v3451 = vunpack.c.l.b16 %v2678
        %v3452 = vunpack.c.l.b16 %v2679
        %v3453 = vunpack.c.h.b16 %v2679
        %v3454 = vunpack.c.l.b16 %v2680
        %v3455 = vunpack.c.l.b16 %v2681
        %v3456 = vunpack.c.h.b16 %v2681
        %v3457 = vunpack.c.l.b16 %v2682
        %v3458 = vunpack.c.l.b16 %v2683
        %v3459 = vunpack.c.h.b16 %v2683
        %v3460 = vunpack.c.l.b16 %v2684
        %v3461 = vunpack.c.l.b16 %v2685
        %v3462 = vunpack.c.h.b16 %v2685
        %v3463 = vunpack.c.l.b16 %v2686
        %v3464 = vunpack.c.l.b16 %v2687
        %v3465 = vunpack.c.h.b16 %v2687
        %v3466 = vunpack.c.l.b16 %v2688
        %v3467 = vunpack.c.l.b16 %v2689
        %v3468 = vunpack.c.h.b16 %v2689
        %v3469 = vunpack.c.l.b16 %v2690
        %v3470 = vunpack.c.l.b16 %v2691
        %v3471 = vunpack.c.h.b16 %v2691
        %v3472 = vunpack.c.l.b16 %v2692
        %v3473 = vunpack.c.l.b16 %v2693
        %v3474 = vunpack.c.h.b16 %v2693
        %v3475 = vunpack.c.l.b16 %v2694
        %v3476 = vunpack.c.l.b16 %v2695
        %v3477 = vunpack.c.h.b16 %v2695
        %v3478 = vunpack.c.l.b16 %v2696
        %v3479 = vunpack.c.l.b16 %v2697
        %v3480 = vunpack.c.h.b16 %v2697
        %v3481 = vunpack.c.l.b16 %v2698
        %v3482 = vunpack.c.l.b16 %v2699
        %v3483 = vunpack.c.h.b16 %v2699
        %v3484 = vunpack.c.l.b16 %v2700
        %v3485 = vunpack.c.l.b16 %v2701
        %v3486 = vunpack.c.h.b16 %v2701
        %v3487 = vunpack.c.l.b16 %v2702
        %v3488 = vunpack.c.l.b16 %v2703
        %v3489 = vunpack.c.h.b16 %v2703
        %v3490 = vunpack.c.l.b16 %v2704
        %v3491 = vunpack.c.l.b16 %v2705
        %v3492 = vunpack.c.h.b16 %v2705
        %v3493 = vunpack.c.l.b16 %v2706
        %v3494 = vunpack.c.l.b16 %v2707
        %v3495 = vunpack.c.h.b16 %v2707
        %v3496 = vunpack.c.l.b16 %v2708
        %v3497 = vunpack.c.l.b16 %v2709
        %v3498 = vunpack.c.h.b16 %v2709
        %v3499 = vunpack.c.l.b16 %v2710
        %v3500 = vunpack.c.l.b16 %v2711
        %v3501 = vunpack.c.h.b16 %v2711
        %v3502 = vunpack.c.l.b16 %v2712
        %v3503 = vunpack.c.l.b16 %v2713
        %v3504 = vunpack.c.h.b16 %v2713
        %v3505 = vunpack.c.l.b16 %v2714
        %v3506 = vunpack.c.l.b16 %v2715
        %v3507 = vunpack.c.h.b16 %v2715
        %v3508 = vunpack.c.l.b16 %v2716
        %v3509 = vunpack.c.l.b16 %v2717
        %v3510 = vunpack.c.h.b16 %v2717
        %v3511 = vunpack.c.l.b16 %v2718
        %v3512 = vunpack.c.l.b16 %v2719
        %v3513 = vunpack.c.h.b16 %v2719
        %v3514 = vunpack.c.l.b16 %v2720
        %v3515 = vunpack.c.l.b16 %v2721
        %v3516 = vunpack.c.h.b16 %v2721
        %v3517 = vunpack.c.l.b16 %v2722
        %v3518 = vunpack.c.l.b16 %v2723
        %v3519 = vunpack.c.h.b16 %v2723
        %v3520 = vunpack.c.l.b16 %v2724
        %v3521 = vunpack.c.l.b16 %v2725
        %v3522 = vunpack.c.h.b16 %v2725
        %v3523 = vunpack.c.l.b16 %v2726
        %v3524 = vunpack.c.l.b16 %v2727
        %v3525 = vunpack.c.h.b16 %v2727
        %v3526 = vunpack.c.l.b16 %v2728
        %v3527 = vunpack.c.l.b16 %v2729
        %v3528 = vunpack.c.h.b16 %v2729
        %v3529 = vunpack.c.l.b16 %v2730
        %v3530 = vunpack.c.l.b16 %v2731
        %v3531 = vunpack.c.h.b16 %v2731
        %v3532 = vunpack.c.l.b16 %v2732
        %v3533 = vunpack.c.l.b16 %v2733
        %v3534 = vunpack.c.h.b16 %v2733
        %v3535 = vunpack.c.l.b16 %v2734
        %v3536 = vunpack.c.l.b16 %v2735
        %v3537 = vunpack.c.h.b16 %v2735
        %v3538 = vunpack.c.l.b16 %v2736
        %v3539 = vunpack.c.l.b16 %v2737
        %v3540 = vunpack.c.h.b16 %v2737
        %v3541 = vunpack.c.l.b16 %v2738
        %v3542 = vunpack.c.l.b16 %v2739
        %v3543 = vunpack.c.h.b16 %v2739
        %v3544 = vunpack.c.l.b16 %v2740
        %v3545 = vunpack.c.l.b16 %v2741
        %v3546 = vunpack.c.h.b16 %v2741
        %v3547 = vunpack.c.l.b16 %v2742
        %v3548 = vunpack.c.l.b16 %v2743
        %v3549 = vunpack.c.h.b16 %v2743
        %v3550 = vunpack.c.l.b16 %v2744
        %v3551 = vunpack.c.l.b16 %v2745
        %v3552 = vunpack.c.h.b16 %v2745
        %v3553 = vunpack.c.l.b16 %v2746
        %v3554 = vunpack.c.l.b16 %v2747
        %v3555 = vunpack.c.h.b16 %v2747
        %v3556 = vunpack.c.l.b16 %v2748
        %v3557 = vunpack.c.l.b16 %v2749
        %v3558 = vunpack.c.h.b16 %v2749
        %v3559 = vunpack.c.l.b16 %v2750
        %v3560 = vunpack.c.l.b16 %v2751
        %v3561 = vunpack.c.h.b16 %v2751
        %v3562 = vunpack.c.l.b16 %v2752
        %v3563 = vunpack.c.l.b16 %v2753
        %v3564 = vunpack.c.h.b16 %v2753
        %v3565 = vunpack.c.l.b16 %v2754
        %v3566 = vunpack.c.l.b16 %v2755
        %v3567 = vunpack.c.h.b16 %v2755
        %v3568 = vunpack.c.l.b16 %v2756
        %v3569 = vunpack.c.l.b16 %v2757
        %v3570 = vunpack.c.h.b16 %v2757
        %v3571 = vunpack.c.l.b16 %v2758
        %v3572 = vunpack.c.l.b16 %v2759
        %v3573 = vunpack.c.h.b16 %v2759
        %v3574 = vunpack.c.l.b16 %v2760
        %v3575 = vunpack.c.l.b16 %v2761
        %v3576 = vunpack.c.h.b16 %v2761
        %v3577 = vunpack.c.l.b16 %v2762
        %v3578 = vunpack.c.l.b16 %v2763
        %v3579 = vunpack.c.h.b16 %v2763
        %v3580 = vunpack.c.l.b16 %v2764
        %v3581 = vunpack.c.l.b16 %v2765
        %v3582 = vunpack.c.h.b16 %v2765
        %v3583 = vunpack.c.l.b16 %v2766
        %v3584 = vunpack.c.l.b16 %v2767
        %v3585 = vunpack.c.h.b16 %v2767
        %v3586 = vunpack.c.l.b16 %v2768
        %v3587 = vunpack.c.l.b16 %v2769
        %v3588 = vunpack.c.h.b16 %v2769
        %v3589 = vunpack.c.l.b16 %v2770
        %v3590 = vunpack.c.l.b16 %v2771
        %v3591 = vunpack.c.h.b16 %v2771
        %v3592 = vunpack.c.l.b16 %v2772
        %v3593 = vunpack.c.l.b16 %v2773
        %v3594 = vunpack.c.h.b16 %v2773
        %v3595 = vunpack.c.l.b16 %v2774
        %v3596 = vunpack.c.l.b16 %v2775
        %v3597 = vunpack.c.h.b16 %v2775
        %v3598 = vunpack.c.l.b16 %v2776
        %v3599 = vunpack.c.l.b16 %v2777
        %v3600 = vunpack.c.h.b16 %v2777
        %v3601 = vunpack.c.l.b16 %v2778
        %v3602 = vunpack.c.l.b16 %v2779
        %v3603 = vunpack.c.h.b16 %v2779
        %v3604 = vunpack.c.l.b16 %v2780
        %v3605 = vunpack.c.l.b16 %v2781
        %v3606 = vunpack.c.h.b16 %v2781
        %v3607 = vunpack.c.l.b16 %v2782
        %v3608 = vunpack.c.l.b16 %v2783
        %v3609 = vunpack.c.h.b16 %v2783
        %v3610 = vunpack.c.l.b16 %v2784
        %v3611 = vunpack.c.l.b16 %v2785
        %v3612 = vunpack.c.h.b16 %v2785
        %v3613 = vunpack.c.l.b16 %v2786
        %v3614 = vunpack.c.l.b16 %v2787
        %v3615 = vunpack.c.h.b16 %v2787
        %v3616 = vunpack.c.l.b16 %v2788
        %v3617 = vunpack.c.l.b16 %v2789
        %v3618 = vunpack.c.h.b16 %v2789
        %v3619 = vunpack.c.l.b16 %v2790
        %v3620 = vunpack.c.l.b16 %v2791
        %v3621 = vunpack.c.h.b16 %v2791
        %v3622 = vunpack.c.l.b16 %v2792
        %v3623 = vunpack.c.l.b16 %v2793
        %v3624 = vunpack.c.h.b16 %v2793
        %v3625 = vunpack.c.l.b16 %v2794
        %v3626 = vunpack.c.l.b16 %v2795
        %v3627 = vunpack.c.h.b16 %v2795
        %v3628 = vunpack.c.l.b16 %v2796
        %v3629 = vunpack.c.l.b16 %v2797
        %v3630 = vunpack.c.h.b16 %v2797
        %v3631 = vunpack.c.l.b16 %v2798
        %v3632 = vunpack.c.l.b16 %v2799
        %v3633 = vunpack.c.h.b16 %v2799
        %v3634 = vunpack.c.l.b16 %v2800
        %v3635 = vunpack.c.l.b16 %v2801
        %v3636 = vunpack.c.h.b16 %v2801
        %v3637 = vunpack.c.l.b16 %v2802
        %v3638 = vunpack.c.l.b16 %v2803
        %v3639 = vunpack.c.h.b16 %v2803
        %v3640 = vunpack.c.l.b16 %v2804
        %v3641 = vunpack.c.l.b16 %v2805
        %v3642 = vunpack.c.h.b16 %v2805
        %v3643 = vunpack.c.l.b16 %v2806
        %v3644 = vunpack.c.l.b16 %v2807
        %v3645 = vunpack.c.h.b16 %v2807
        %v3646 = vunpack.c.l.b16 %v2808
        %v3647 = vunpack.c.l.b16 %v2809
        %v3648 = vunpack.c.h.b16 %v2809
        %v3649 = vunpack.c.l.b16 %v2810
        %v3650 = vunpack.c.l.b16 %v2811
        %v3651 = vunpack.c.h.b16 %v2811
        %v3652 = vunpack.c.l.b16 %v2812
        %v3653 = vunpack.c.l.b16 %v2813
        %v3654 = vunpack.c.h.b16 %v2813
        %v3655 = vunpack.c.l.b16 %v2814
        %v3656 = vunpack.c.l.b16 %v2815
        %v3657 = vunpack.c.h.b16 %v2815
        %v3658 = vunpack.c.l.b16 %v2816
        %v3659 = vunpack.c.l.b16 %v2817
        %v3660 = vunpack.c.h.b16 %v2817
        %v3661 = vunpack.c.l.b16 %v2818
        %v3662 = vunpack.c.l.b16 %v2819
        %v3663 = vunpack.c.h.b16 %v2819
        %v3664 = vunpack.c.l.b16 %v2820
        %v3665 = vunpack.c.l.b16 %v2821
        %v3666 = vunpack.c.h.b16 %v2821
        %v3667 = vunpack.c.l.b16 %v2822
        %v3668 = vunpack.c.l.b16 %v2823
        %v3669 = vunpack.c.h.b16 %v2823
        %v3670 = vunpack.c.l.b16 %v2824
        %v3671 = vunpack.c.l.b16 %v2825
        %v3672 = vunpack.c.h.b16 %v2825
        %v3673 = vunpack.c.l.b16 %v2826
        %v3674 = vunpack.c.l.b16 %v2827
        %v3675 = vunpack.c.h.b16 %v2827
        %v3676 = vunpack.c.l.b16 %v2828
        %v3677 = vunpack.c.l.b16 %v2829
        %v3678 = vunpack.c.h.b16 %v2829
        %v3679 = vunpack.c.l.b16 %v2830
        %v3680 = vunpack.c.l.b16 %v2831
        %v3681 = vunpack.c.h.b16 %v2831
        %v3682 = vunpack.c.l.b16 %v2832
        %v3683 = vunpack.c.l.b16 %v2833
        %v3684 = vunpack.c.h.b16 %v2833
        %v3685 = vunpack.c.l.b16 %v2834
        %v3686 = vunpack.c.l.b16 %v2835
        %v3687 = vunpack.c.h.b16 %v2835
        %v3688 = vunpack.c.l.b16 %v2836
        %v3689 = vunpack.c.l.b16 %v2837
        %v3690 = vunpack.c.h.b16 %v2837
        %v3691 = vunpack.c.l.b16 %v2838
        %v3692 = vunpack.c.l.b16 %v2839
        %v3693 = vunpack.c.h.b16 %v2839
        %v3694 = vunpack.c.l.b16 %v2840
        %v3695 = vunpack.c.l.b16 %v2841
        %v3696 = vunpack.c.h.b16 %v2841
        %v3697 = vunpack.c.l.b16 %v2842
        %v3698 = vunpack.c.l.b16 %v2843
        %v3699 = vunpack.c.h.b16 %v2843
        %v3700 = vunpack.c.l.b16 %v2844
        %v3701 = vunpack.c.l.b16 %v2845
        %v3702 = vunpack.c.h.b16 %v2845
        %v3703 = vunpack.c.l.b16 %v2846
        %v3704 = vunpack.c.l.b16 %v2847
        %v3705 = vunpack.c.h.b16 %v2847
        %v3706 = vunpack.c.l.b16 %v2848
        %v3707 = vunpack.c.l.b16 %v2849
        %v3708 = vunpack.c.h.b16 %v2849
        %v3709 = vunpack.c.l.b16 %v2850
        %v3710 = vunpack.c.l.b16 %v2851
        %v3711 = vunpack.c.h.b16 %v2851
        %v3712 = vunpack.c.l.b16 %v2852
        %v3713 = vunpack.c.l.b16 %v2853
        %v3714 = vunpack.c.h.b16 %v2853
        %v3715 = vunpack.c.l.b16 %v2854
        %v3716 = vunpack.c.l.b16 %v2855
        %v3717 = vunpack.c.h.b16 %v2855
        %v3718 = vunpack.c.l.b16 %v2856
        %v3719 = vunpack.c.l.b16 %v2857
        %v3720 = vunpack.c.h.b16 %v2857
        %v3721 = vunpack.c.l.b16 %v2858
        %v3722 = vunpack.c.l.b16 %v2859
        %v3723 = vunpack.c.h.b16 %v2859
        %v3724 = vunpack.c.l.b16 %v2860
        %v3725 = vunpack.c.l.b16 %v2861
        %v3726 = vunpack.c.h.b16 %v2861
        %v3727 = vunpack.c.l.b16 %v2862
        %v3728 = vunpack.c.l.b16 %v2863
        %v3729 = vunpack.c.h.b16 %v2863
        %v3730 = vunpack.c.l.b16 %v2864
        %v3731 = vunpack.c.l.b16 %v2865
        %v3732 = vunpack.c.h.b16 %v2865
        %v3733 = vunpack.c.l.b16 %v2866
        %v3734 = vunpack.c.l.b16 %v2867
        %v3735 = vunpack.c.h.b16 %v2867
        %v3736 = vunpack.c.l.b16 %v2868
        %v3737 = vunpack.c.l.b16 %v2869
        %v3738 = vunpack.c.h.b16 %v2869
        %v3739 = vunpack.c.l.b16 %v2870
        %v3740 = vunpack.c.l.b16 %v2871
        %v3741 = vunpack.c.h.b16 %v2871
        %v3742 = vunpack.c.l.b16 %v2872
        %v3743 = vunpack.c.l.b16 %v2873
        %v3744 = vunpack.c.h.b16 %v2873
        %v3745 = vunpack.c.l.b16 %v2874
        %v3746 = vunpack.c.l.b16 %v2875
        %v3747 = vunpack.c.h.b16 %v2875
        %v3748 = vunpack.c.l.b16 %v2876
        %v3749 = vunpack.c.l.b16 %v2877
        %v3750 = vunpack.c.h.b16 %v2877
        %v3751 = vunpack.c.l.b16 %v2878
        %v3752 = vunpack.c.l.b16 %v2879
        %v3753 = vunpack.c.h.b16 %v2879
        %v3754 = vunpack.c.l.b16 %v2880
        %v3755 = vunpack.c.l.b16 %v2881
        %v3756 = vunpack.c.h.b16 %v2881
        %v3757 = vunpack.c.l.b16 %v2882
        %v3758 = vunpack.c.l.b16 %v2883
        %v3759 = vunpack.c.h.b16 %v2883
        %v3760 = vunpack.c.l.b16 %v2884
        %v3761 = vunpack.c.l.b16 %v2885
        %v3762 = vunpack.c.h.b16 %v2885
        %v3763 = vunpack.c.l.b16 %v2886
        %v3764 = vunpack.c.l.b16 %v2887
        %v3765 = vunpack.c.h.b16 %v2887
        %v3766 = vunpack.c.l.b16 %v2888
        %v3767 = vunpack.c.l.b16 %v2889
        %v3768 = vunpack.c.h.b16 %v2889
        %v3769 = vunpack.c.l.b16 %v2890
        %v3770 = vunpack.c.l.b16 %v2891
        %v3771 = vunpack.c.h.b16 %v2891
        %v3772 = vunpack.c.l.b16 %v2892
        %v3773 = vunpack.c.l.b16 %v2893
        %v3774 = vunpack.c.h.b16 %v2893
        %v3775 = vunpack.c.l.b16 %v2894
        %v3776 = vunpack.c.l.b16 %v2895
        %v3777 = vunpack.c.h.b16 %v2895
        %v3778 = vunpack.c.l.b16 %v2896
        %v3779 = vunpack.c.l.b16 %v2897
        %v3780 = vunpack.c.h.b16 %v2897
        %v3781 = vunpack.c.l.b16 %v2898
        %v3782 = vunpack.c.l.b16 %v2899
        %v3783 = vunpack.c.h.b16 %v2899
        %v3784 = vunpack.c.l.b16 %v2900
        %v3785 = vunpack.c.l.b16 %v2901
        %v3786 = vunpack.c.h.b16 %v2901
        %v3787 = vunpack.c.l.b16 %v2902
        %v3788 = vunpack.c.l.b16 %v2903
        %v3789 = vunpack.c.h.b16 %v2903
        %v3790 = vunpack.c.l.b16 %v2904
        %v3791 = vunpack.c.l.b16 %v2905
        %v3792 = vunpack.c.h.b16 %v2905
        %v3793 = vunpack.c.l.b16 %v2906
        %v3794 = vunpack.c.l.b16 %v2907
        %v3795 = vunpack.c.h.b16 %v2907
        %v3796 = vunpack.c.l.b16 %v2908
        %v3797 = vunpack.c.l.b16 %v2909
        %v3798 = vunpack.c.h.b16 %v2909
        %v3799 = vunpack.c.l.b16 %v2910
        %v3800 = vunpack.c.l.b16 %v2911
        %v3801 = vunpack.c.h.b16 %v2911
        %v3802 = vunpack.c.l.b16 %v2912
        %v3803 = vunpack.c.l.b16 %v2913
        %v3804 = vunpack.c.h.b16 %v2913
        %v3805 = vunpack.c.l.b16 %v2914
        %v3806 = vunpack.c.l.b16 %v2915
        %v3807 = vunpack.c.h.b16 %v2915
        %v3808 = vunpack.c.l.b16 %v2916
        %v3809 = vunpack.c.l.b16 %v2917
        %v3810 = vunpack.c.h.b16 %v2917
        %v3811 = vunpack.c.l.b16 %v2918
        %v3812 = vunpack.c.l.b16 %v2919
        %v3813 = vunpack.c.h.b16 %v2919
        %v3814 = vunpack.c.l.b16 %v2920
        %v3815 = vunpack.c.l.b16 %v2921
        %v3816 = vunpack.c.h.b16 %v2921
        %v3817 = vunpack.c.l.b16 %v2922
        %v3818 = vunpack.c.l.b16 %v2923
        %v3819 = vunpack.c.h.b16 %v2923
        %v3820 = vunpack.c.l.b16 %v2924
        %v3821 = vunpack.c.l.b16 %v2925
        %v3822 = vunpack.c.h.b16 %v2925
        %v3823 = vunpack.c.l.b16 %v2926
        %v3824 = vunpack.c.l.b16 %v2927
        %v3825 = vunpack.c.h.b16 %v2927
        %v3826 = vunpack.c.l.b16 %v2928
        %v3827 = vunpack.c.l.b16 %v2929
        %v3828 = vunpack.c.h.b16 %v2929
        %v3829 = vunpack.c.l.b16 %v2930
        %v3830 = vunpack.c.l.b16 %v2931
        %v3831 = vunpack.c.h.b16 %v2931
        %v3832 = vunpack.c.l.b16 %v2932
        %v3833 = vunpack.c.l.b16 %v2933
        %v3834 = vunpack.c.h.b16 %v2933
        %v3835 = vunpack.c.l.b16 %v2934
        %v3836 = vunpack.c.l.b16 %v2935
        %v3837 = vunpack.c.h.b16 %v2935
        %v3838 = vunpack.c.l.b16 %v2936
        %v3839 = vunpack.c.l.b16 %v2937
        %v3840 = vunpack.c.h.b16 %v2937
        %v3841 = vunpack.c.l.b16 %v2938
        %v3842 = vunpack.c.l.b16 %v2939
        %v3843 = vunpack.c.h.b16 %v2939
        %v3844 = vunpack.c.l.b16 %v2940
        %v3845 = vunpack.c.l.b16 %v2941
        %v3846 = vunpack.c.h.b16 %v2941
        %v3847 = vunpack.c.l.b16 %v2942
        %v3848 = vunpack.c.l.b16 %v2943
        %v3849 = vunpack.c.h.b16 %v2943
        %v3850 = vunpack.c.l.b16 %v2944
        %v3851 = vunpack.c.l.b16 %v2945
        %v3852 = vunpack.c.h.b16 %v2945
        %v3853 = vunpack.c.l.b16 %v2946
        %v3854 = vunpack.c.l.b16 %v2947
        %v3855 = vunpack.c.h.b16 %v2947
        %v3856 = vunpack.c.l.b16 %v2948
        %v3857 = vunpack.c.l.b16 %v2949
        %v3858 = vunpack.c.h.b16 %v2949
        %v3859 = vunpack.c.l.b16 %v2950
        %v3860 = vunpack.c.l.b16 %v2951
        %v3861 = vunpack.c.h.b16 %v2951
        %v3862 = vunpack.c.l.b16 %v2952
        %v3863 = vunpack.c.l.b16 %v2953
        %v3864 = vunpack.c.h.b16 %v2953
        %v3865 = vunpack.c.l.b16 %v2954
        %v3866 = vunpack.c.l.b16 %v2955
        %v3867 = vunpack.c.h.b16 %v2955
        %v3868 = vunpack.c.l.b16 %v2956
        %v3869 = vunpack.c.l.b16 %v2957
        %v3870 = vunpack.c.h.b16 %v2957
        %v3871 = vunpack.c.l.b16 %v2958
        %v3872 = vunpack.c.l.b16 %v2959
        %v3873 = vunpack.c.h.b16 %v2959
        %v3874 = vunpack.c.l.b16 %v2960
        %v3875 = vunpack.c.l.b16 %v2961
        %v3876 = vunpack.c.h.b16 %v2961
        %v3877 = vunpack.c.l.b16 %v2962
        %v3878 = vunpack.c.l.b16 %v2963
        %v3879 = vunpack.c.h.b16 %v2963
        %v3880 = vunpack.c.l.b16 %v2964
        %v3881 = vunpack.c.l.b16 %v2965
        %v3882 = vunpack.c.h.b16 %v2965
        %v3883 = vunpack.c.l.b16 %v2966
        %v3884 = vunpack.c.l.b16 %v2967
        %v3885 = vunpack.c.h.b16 %v2967
        %v3886 = vunpack.c.l.b16 %v2968
        %v3887 = vunpack.c.l.b16 %v2969
        %v3888 = vunpack.c.h.b16 %v2969
        %v3889 = vunpack.c.l.b16 %v2970
        %v3890 = vunpack.c.l.b16 %v2971
        %v3891 = vunpack.c.h.b16 %v2971
        %v3892 = vunpack.c.l.b16 %v2972
        %v3893 = vunpack.c.l.b16 %v2973
        %v3894 = vunpack.c.h.b16 %v2973
        %v3895 = vunpack.c.l.b16 %v2974
        %v3896 = vunpack.c.l.b16 %v2975
        %v3897 = vunpack.c.h.b16 %v2975
        %v3898 = vunpack.c.l.b16 %v2976
        %v3899 = vunpack.c.l.b16 %v2977
        %v3900 = vunpack.c.h.b16 %v2977
        %v3901 = vunpack.c.l.b16 %v2978
        %v3902 = vunpack.c.l.b16 %v2979
        %v3903 = vunpack.c.h.b16 %v2979
        %v3904 = vunpack.c.l.b16 %v2980
        %v3905 = vunpack.c.l.b16 %v2981
        %v3906 = vunpack.c.h.b16 %v2981
        %v3907 = vunpack.c.l.b16 %v2982
        %v3908 = vunpack.c.l.b16 %v2983
        %v3909 = vunpack.c.h.b16 %v2983
        %v3910 = vunpack.c.l.b16 %v2984
        %v3911 = vunpack.c.l.b16 %v2985
        %v3912 = vunpack.c.h.b16 %v2985
        %v3913 = vunpack.c.l.b16 %v2986
        %v3914 = vunpack.c.l.b16 %v2987
        %v3915 = vunpack.c.h.b16 %v2987
        %v3916 = vunpack.c.l.b16 %v2988
        %v3917 = vunpack.c.l.b16 %v2989
        %v3918 = vunpack.c.h.b16 %v2989
        %v3919 = vunpack.c.l.b16 %v2990
        %v3920 = vunpack.c.l.b16 %v2991
        %v3921 = vunpack.c.h.b16 %v2991
        %v3922 = vunpack.c.l.b16 %v2992
        %v3923 = vunpack.c.l.b16 %v2993
        %v3924 = vunpack.c.h.b16 %v2993
        %v3925 = vunpack.c.l.b16 %v2994
        %v3926 = vunpack.c.l.b16 %v2995
        %v3927 = vunpack.c.h.b16 %v2995
        %v3928 = vunpack.c.l.b16 %v2996
        %v3929 = vunpack.c.l.b16 %v2997
        %v3930 = vunpack.c.h.b16 %v2997
        %v3931 = vunpack.c.l.b16 %v2998
        %v3932 = vunpack.c.l.b16 %v2999
        %v3933 = vunpack.c.h.b16 %v2999
        %v3934 = vunpack.c.l.b16 %v3000
        %v3935 = vunpack.c.l.b16 %v3001
        %v3936 = vunpack.c.h.b16 %v3001
        %v3937 = vunpack.c.l.b16 %v3002
        %v3938 = vunpack.c.l.b16 %v3003
        %v3939 = vunpack.c.h.b16 %v3003
        %v3940 = vunpack.c.l.b16 %v3004
        %v3941 = vunpack.c.l.b16 %v3005
        %v3942 = vunpack.c.h.b16 %v3005
        %v3943 = vunpack.c.l.b16 %v3006
        %v3944 = vunpack.c.l.b16 %v3007
        %v3945 = vunpack.c.h.b16 %v3007
        %v3946 = vunpack.c.l.b16 %v3008
        %v3947 = vunpack.c.l.b16 %v3009
        %v3948 = vunpack.c.h.b16 %v3009
        %v3949 = vunpack.c.l.b16 %v3010
        %v3950 = vunpack.c.l.b16 %v3011
        %v3951 = vunpack.c.h.b16 %v3011
        %v3952 = vunpack.c.l.b16 %v3012
        %v3953 = vunpack.c.l.b16 %v3013
        %v3954 = vunpack.c.h.b16 %v3013
        %v3955 = vunpack.c.l.b16 %v3014
        %v3956 = vunpack.c.l.b16 %v3015
        %v3957 = vunpack.c.h.b16 %v3015
        %v3958 = vunpack.c.l.b16 %v3016
        %v3959 = vunpack.c.l.b16 %v3017
        %v3960 = vunpack.c.h.b16 %v3017
        %v3961 = vunpack.c.l.b16 %v3018
        %v3962 = vunpack.c.l.b16 %v3019
        %v3963 = vunpack.c.h.b16 %v3019
        %v3964 = vunpack.c.l.b16 %v3020
        %v3965 = vunpack.c.l.b16 %v3021
        %v3966 = vunpack.c.h.b16 %v3021
        %v3967 = vunpack.c.l.b16 %v3022
        %v3968 = vunpack.c.l.b16 %v3023
        %v3969 = vunpack.c.h.b16 %v3023
        %v3970 = vunpack.c.l.b16 %v3024
        %v3971 = vunpack.c.l.b16 %v3025
        %v3972 = vunpack.c.h.b16 %v3025
        %v3973 = vunpack.c.l.b16 %v3026
        %v3974 = vunpack.c.l.b16 %v3027
        %v3975 = vunpack.c.h.b16 %v3027
        %v3976 = vunpack.c.l.b16 %v3028
        %v3977 = vunpack.c.l.b16 %v3029
        %v3978 = vunpack.c.h.b16 %v3029
        %v3979 = vunpack.c.l.b16 %v3030
        %v3980 = vunpack.c.l.b16 %v3031
        %v3981 = vunpack.c.h.b16 %v3031
        %v3982 = vunpack.c.l.b16 %v3032
        %v3983 = vunpack.c.l.b16 %v3033
        %v3984 = vunpack.c.h.b16 %v3033
        %v3985 = vunpack.c.l.b16 %v3034
        %v3986 = vunpack.c.l.b16 %v3035
        %v3987 = vunpack.c.h.b16 %v3035
        %v3988 = vunpack.c.l.b16 %v3036
        %v3989 = vunpack.c.l.b16 %v3037
        %v3990 = vunpack.c.h.b16 %v3037
        %v3991 = vunpack.c.l.b16 %v3038
        %v3992 = vunpack.c.l.b16 %v3039
        %v3993 = vunpack.c.h.b16 %v3039
        %v3994 = vunpack.c.l.b16 %v3040
        %v3995 = vunpack.c.l.b16 %v3041
        %v3996 = vunpack.c.h.b16 %v3041
        %v3997 = vunpack.c.l.b16 %v3042
        %v3998 = vunpack.c.l.b16 %v3043
        %v3999 = vunpack.c.h.b16 %v3043
        %v4000 = vunpack.c.l.b16 %v3044
        %v4001 = vunpack.c.l.b16 %v3045
        %v4002 = vunpack.c.h.b16 %v3045
        %v4003 = vunpack.c.l.b16 %v3046
        %v4004 = vunpack.c.l.b16 %v3047
        %v4005 = vunpack.c.h.b16 %v3047
        %v4006 = vunpack.c.l.b16 %v3048
        %v4007 = vunpack.c.l.b16 %v3049
        %v4008 = vunpack.c.h.b16 %v3049
        %v4009 = vunpack.c.l.b16 %v3050
        %v4010 = vunpack.c.l.b16 %v3051
        %v4011 = vunpack.c.h.b16 %v3051
        %v4012 = vunpack.c.l.b16 %v3052
        %v4013 = vpack.c.b16 %v3440, %v3437
        %v4014 = vpack.c.b16 %v3441, %v3438
        %v4015 = vpack.c.b16 %v3442, %v3439
        %v4016 = vpack.c.b16 %v3446, %v3443
        %v4017 = vpack.c.b16 %v3447, %v3444
        %v4018 = vpack.c.b16 %v3448, %v3445
        %v4019 = vpack.c.b16 %v3452, %v3449
        %v4020 = vpack.c.b16 %v3453, %v3450
        %v4021 = vpack.c.b16 %v3454, %v3451
        %v4022 = vpack.c.b16 %v3458, %v3455
        %v4023 = vpack.c.b16 %v3459, %v3456
        %v4024 = vpack.c.b16 %v3460, %v3457
        %v4025 = vpack.c.b16 %v3464, %v3461
        %v4026 = vpack.c.b16 %v3465, %v3462
        %v4027 = vpack.c.b16 %v3466, %v3463
        %v4028 = vpack.c.b16 %v3470, %v3467
        %v4029 = vpack.c.b16 %v3471, %v3468
        %v4030 = vpack.c.b16 %v3472, %v3469
        %v4031 = vpack.c.b16 %v3476, %v3473
        %v4032 = vpack.c.b16 %v3477, %v3474
        %v4033 = vpack.c.b16 %v3478, %v3475
        %v4034 = vpack.c.b16 %v3482, %v3479
        %v4035 = vpack.c.b16 %v3483, %v3480
        %v4036 = vpack.c.b16 %v3484, %v3481
        %v4037 = vpack.c.b16 %v3488, %v3485
        %v4038 = vpack.c.b16 %v3489, %v3486
        %v4039 = vpack.c.b16 %v3490, %v3487
        %v4040 = vpack.c.b16 %v3494, %v3491
        %v4041 = vpack.c.b16 %v3495, %v3492
        %v4042 = vpack.c.b16 %v3496, %v3493
        %v4043 = vpack.c.b16 %v3500, %v3497
        %v4044 = vpack.c.b16 %v3501, %v3498
        %v4045 = vpack.c.b16 %v3502, %v3499
        %v4046 = vpack.c.b16 %v3506, %v3503
        %v4047 = vpack.c.b16 %v3507, %v3504
        %v4048 = vpack.c.b16 %v3508, %v3505
        %v4049 = vpack.c.b16 %v3512, %v3509
        %v4050 = vpack.c.b16 %v3513, %v3510
        %v4051 = vpack.c.b16 %v3514, %v3511
        %v4052 = vpack.c.b16 %v3518, %v3515
        %v4053 = vpack.c.b16 %v3519, %v3516
        %v4054 = vpack.c.b16 %v3520, %v3517
        %v4055 = vpack.c.b16 %v3524, %v3521
        %v4056 = vpack.c.b16 %v3525, %v3522
        %v4057 = vpack.c.b16 %v3526, %v3523
        %v4058 = vpack.c.b16 %v3530, %v3527
        %v4059 = vpack.c.b16 %v3531, %v3528
        %v4060 = vpack.c.b16 %v3532, %v3529
        %v4061 = vpack.c.b16 %v3536, %v3533
        %v4062 = vpack.c.b16 %v3537, %v3534
        %v4063 = vpack.c.b16 %v3538, %v3535
        %v4064 = vpack.c.b16 %v3542, %v3539
        %v4065 = vpack.c.b16 %v3543, %v3540
        %v4066 = vpack.c.b16 %v3544, %v3541
        %v4067 = vpack.c.b16 %v3548, %v3545
        %v4068 = vpack.c.b16 %v3549, %v3546
        %v4069 = vpack.c.b16 %v3550, %v3547
        %v4070 = vpack.c.b16 %v3554, %v3551
        %v4071 = vpack.c.b16 %v3555, %v3552
        %v4072 = vpack.c.b16 %v3556, %v3553
        %v4073 = vpack.c.b16 %v3560, %v3557
        %v4074 = vpack.c.b16 %v3561, %v3558
        %v4075 = vpack.c.b16 %v3562, %v3559
        %v4076 = vpack.c.b16 %v3566, %v3563
        %v4077 = vpack.c.b16 %v3567, %v3564
        %v4078 = vpack.c.b16 %v3568, %v3565
        %v4079 = vpack.c.b16 %v3572, %v3569
        %v4080 = vpack.c.b16 %v3573, %v3570
        %v4081 = vpack.c.b16 %v3574, %v3571
        %v4082 = vpack.c.b16 %v3578, %v3575
        %v4083 = vpack.c.b16 %v3579, %v3576
        %v4084 = vpack.c.b16 %v3580, %v3577
        %v4085 = vpack.c.b16 %v3584, %v3581
        %v4086 = vpack.c.b16 %v3585, %v3582
        %v4087 = vpack.c.b16 %v3586, %v3583
        %v4088 = vpack.c.b16 %v3590, %v3587
        %v4089 = vpack.c.b16 %v3591, %v3588
        %v4090 = vpack.c.b16 %v3592, %v3589
        %v4091 = vpack.c.b16 %v3596, %v3593
        %v4092 = vpack.c.b16 %v3597, %v3594
        %v4093 = vpack.c.b16 %v3598, %v3595
        %v4094 = vpack.c.b16 %v3602, %v3599
        %v4095 = vpack.c.b16 %v3603, %v3600
        %v4096 = vpack.c.b16 %v3604, %v3601
        %v4097 = vpack.c.b16 %v3608, %v3605
        %v4098 = vpack.c.b16 %v3609, %v3606
        %v4099 = vpack.c.b16 %v3610, %v3607
        %v4100 = vpack.c.b16 %v3614, %v3611
        %v4101 = vpack.c.b16 %v3615, %v3612
        %v4102 = vpack.c.b16 %v3616, %v3613
        %v4103 = vpack.c.b16 %v3620, %v3617
        %v4104 = vpack.c.b16 %v3621, %v3618
        %v4105 = vpack.c.b16 %v3622, %v3619
        %v4106 = vpack.c.b16 %v3626, %v3623
        %v4107 = vpack.c.b16 %v3627, %v3624
        %v4108 = vpack.c.b16 %v3628, %v3625
        %v4109 = vpack.c.b16 %v3632, %v3629
        %v4110 = vpack.c.b16 %v3633, %v3630
        %v4111 = vpack.c.b16 %v3634, %v3631
        %v4112 = vpack.c.b16 %v3638, %v3635
        %v4113 = vpack.c.b16 %v3639, %v3636
        %v4114 = vpack.c.b16 %v3640, %v3637
        %v4115 = vpack.c.b16 %v3644, %v3641
        %v4116 = vpack.c.b16 %v3645, %v3642
        %v4117 = vpack.c.b16 %v3646, %v3643
        %v4118 = vpack.c.b16 %v3650, %v3647
        %v4119 = vpack.c.b16 %v3651, %v3648
        %v4120 = vpack.c.b16 %v3652, %v3649
        %v4121 = vpack.c.b16 %v3656, %v3653
        %v4122 = vpack.c.b16 %v3657, %v3654
        %v4123 = vpack.c.b16 %v3658, %v3655
        %v4124 = vpack.c.b16 %v3662, %v3659
        %v4125 = vpack.c.b16 %v3663, %v3660
        %v4126 = vpack.c.b16 %v3664, %v3661
        %v4127 = vpack.c.b16 %v3668, %v3665
        %v4128 = vpack.c.b16 %v3669, %v3666
        %v4129 = vpack.c.b16 %v3670, %v3667
        %v4130 = vpack.c.b16 %v3674, %v3671
        %v4131 = vpack.c.b16 %v3675, %v3672
        %v4132 = vpack.c.b16 %v3676, %v3673
        %v4133 = vpack.c.b16 %v3680, %v3677
        %v4134 = vpack.c.b16 %v3681, %v3678
        %v4135 = vpack.c.b16 %v3682, %v3679
        %v4136 = vpack.c.b16 %v3686, %v3683
        %v4137 = vpack.c.b16 %v3687, %v3684
        %v4138 = vpack.c.b16 %v3688, %v3685
        %v4139 = vpack.c.b16 %v3692, %v3689
        %v4140 = vpack.c.b16 %v3693, %v3690
        %v4141 = vpack.c.b16 %v3694, %v3691
        %v4142 = vpack.c.b16 %v3698, %v3695
        %v4143 = vpack.c.b16 %v3699, %v3696
        %v4144 = vpack.c.b16 %v3700, %v3697
        %v4145 = vpack.c.b16 %v3704, %v3701
        %v4146 = vpack.c.b16 %v3705, %v3702
        %v4147 = vpack.c.b16 %v3706, %v3703
        %v4148 = vpack.c.b16 %v3710, %v3707
        %v4149 = vpack.c.b16 %v3711, %v3708
        %v4150 = vpack.c.b16 %v3712, %v3709
        %v4151 = vpack.c.b16 %v3716, %v3713
        %v4152 = vpack.c.b16 %v3717, %v3714
        %v4153 = vpack.c.b16 %v3718, %v3715
        %v4154 = vpack.c.b16 %v3722, %v3719
        %v4155 = vpack.c.b16 %v3723, %v3720
        %v4156 = vpack.c.b16 %v3724, %v3721
        %v4157 = vpack.c.b16 %v3728, %v3725
        %v4158 = vpack.c.b16 %v3729, %v3726
        %v4159 = vpack.c.b16 %v3730, %v3727
        %v4160 = vpack.c.b16 %v3734, %v3731
        %v4161 = vpack.c.b16 %v3735, %v3732
        %v4162 = vpack.c.b16 %v3736, %v3733
        %v4163 = vpack.c.b16 %v3740, %v3737
        %v4164 = vpack.c.b16 %v3741, %v3738
        %v4165 = vpack.c.b16 %v3742, %v3739
        %v4166 = vpack.c.b16 %v3746, %v3743
        %v4167 = vpack.c.b16 %v3747, %v3744
        %v4168 = vpack.c.b16 %v3748, %v3745
        %v4169 = vpack.c.b16 %v3752, %v3749
        %v4170 = vpack.c.b16 %v3753, %v3750
        %v4171 = vpack.c.b16 %v3754, %v3751
        %v4172 = vpack.c.b16 %v3758, %v3755
        %v4173 = vpack.c.b16 %v3759, %v3756
        %v4174 = vpack.c.b16 %v3760, %v3757
        %v4175 = vpack.c.b16 %v3764, %v3761
        %v4176 = vpack.c.b16 %v3765, %v3762
        %v4177 = vpack.c.b16 %v3766, %v3763
        %v4178 = vpack.c.b16 %v3770, %v3767
        %v4179 = vpack.c.b16 %v3771, %v3768
        %v4180 = vpack.c.b16 %v3772, %v3769
        %v4181 = vpack.c.b16 %v3776, %v3773
        %v4182 = vpack.c.b16 %v3777, %v3774
        %v4183 = vpack.c.b16 %v3778, %v3775
        %v4184 = vpack.c.b16 %v3782, %v3779
        %v4185 = vpack.c.b16 %v3783, %v3780
        %v4186 = vpack.c.b16 %v3784, %v3781
        %v4187 = vpack.c.b16 %v3788, %v3785
        %v4188 = vpack.c.b16 %v3789, %v3786
        %v4189 = vpack.c.b16 %v3790, %v3787
        %v4190 = vpack.c.b16 %v3794, %v3791
        %v4191 = vpack.c.b16 %v3795, %v3792
        %v4192 = vpack.c.b16 %v3796, %v3793
        %v4193 = vpack.c.b16 %v3800, %v3797
        %v4194 = vpack.c.b16 %v3801, %v3798
        %v4195 = vpack.c.b16 %v3802, %v3799
        %v4196 = vpack.c.b16 %v3806, %v3803
        %v4197 = vpack.c.b16 %v3807, %v3804
        %v4198 = vpack.c.b16 %v3808, %v3805
        %v4199 = vpack.c.b16 %v3812, %v3809
        %v4200 = vpack.c.b16 %v3813, %v3810
        %v4201 = vpack.c.b16 %v3814, %v3811
        %v4202 = vpack.c.b16 %v3818, %v3815
        %v4203 = vpack.c.b16 %v3819, %v3816
        %v4204 = vpack.c.b16 %v3820, %v3817
        %v4205 = vpack.c.b16 %v3824, %v3821
        %v4206 = vpack.c.b16 %v3825, %v3822
        %v4207 = vpack.c.b16 %v3826, %v3823
        %v4208 = vpack.c.b16 %v3830, %v3827
        %v4209 = vpack.c.b16 %v3831, %v3828
        %v4210 = vpack.c.b16 %v3832, %v3829
        %v4211 = vpack.c.b16 %v3836, %v3833
        %v4212 = vpack.c.b16 %v3837, %v3834
        %v4213 = vpack.c.b16 %v3838, %v3835
        %v4214 = vpack.c.b16 %v3842, %v3839
        %v4215 = vpack.c.b16 %v3843, %v3840
        %v4216 = vpack.c.b16 %v3844, %v3841
        %v4217 = vpack.c.b16 %v3848, %v3845
        %v4218 = vpack.c.b16 %v3849, %v3846
        %v4219 = vpack.c.b16 %v3850, %v3847
        %v4220 = vpack.c.b16 %v3854, %v3851
        %v4221 = vpack.c.b16 %v3855, %v3852
        %v4222 = vpack.c.b16 %v3856, %v3853
        %v4223 = vpack.c.b16 %v3860, %v3857
        %v4224 = vpack.c.b16 %v3861, %v3858
        %v4225 = vpack.c.b16 %v3862, %v3859
        %v4226 = vpack.c.b16 %v3866, %v3863
        %v4227 = vpack.c.b16 %v3867, %v3864
        %v4228 = vpack.c.b16 %v3868, %v3865
        %v4229 = vpack.c.b16 %v3872, %v3869
        %v4230 = vpack.c.b16 %v3873, %v3870
        %v4231 = vpack.c.b16 %v3874, %v3871
        %v4232 = vpack.c.b16 %v3878, %v3875
        %v4233 = vpack.c.b16 %v3879, %v3876
        %v4234 = vpack.c.b16 %v3880, %v3877
        %v4235 = vpack.c.b16 %v3884, %v3881
        %v4236 = vpack.c.b16 %v3885, %v3882
        %v4237 = vpack.c.b16 %v3886, %v3883
        %v4238 = vpack.c.b16 %v3890, %v3887
        %v4239 = vpack.c.b16 %v3891, %v3888
        %v4240 = vpack.c.b16 %v3892, %v3889
        %v4241 = vpack.c.b16 %v3896, %v3893
        %v4242 = vpack.c.b16 %v3897, %v3894
        %v4243 = vpack.c.b16 %v3898, %v3895
        %v4244 = vpack.c.b16 %v3902, %v3899
        %v4245 = vpack.c.b16 %v3903, %v3900
        %v4246 = vpack.c.b16 %v3904, %v3901
        %v4247 = vpack.c.b16 %v3908, %v3905
        %v4248 = vpack.c.b16 %v3909, %v3906
        %v4249 = vpack.c.b16 %v3910, %v3907
        %v4250 = vpack.c.b16 %v3914, %v3911
        %v4251 = vpack.c.b16 %v3915, %v3912
        %v4252 = vpack.c.b16 %v3916, %v3913
        %v4253 = vpack.c.b16 %v3920, %v3917
        %v4254 = vpack.c.b16 %v3921, %v3918
        %v4255 = vpack.c.b16 %v3922, %v3919
        %v4256 = vpack.c.b16 %v3926, %v3923
        %v4257 = vpack.c.b16 %v3927, %v3924
        %v4258 = vpack.c.b16 %v3928, %v3925
        %v4259 = vpack.c.b16 %v3932, %v3929
        %v4260 = vpack.c.b16 %v3933, %v3930
        %v4261 = vpack.c.b16 %v3934, %v3931
        %v4262 = vpack.c.b16 %v3938, %v3935
        %v4263 = vpack.c.b16 %v3939, %v3936
        %v4264 = vpack.c.b16 %v3940, %v3937
        %v4265 = vpack.c.b16 %v3944, %v3941
        %v4266 = vpack.c.b16 %v3945, %v3942
        %v4267 = vpack.c.b16 %v3946, %v3943
        %v4268 = vpack.c.b16 %v3950, %v3947
        %v4269 = vpack.c.b16 %v3951, %v3948
        %v4270 = vpack.c.b16 %v3952, %v3949
        %v4271 = vpack.c.b16 %v3956, %v3953
        %v4272 = vpack.c.b16 %v3957, %v3954
        %v4273 = vpack.c.b16 %v3958, %v3955
        %v4274 = vpack.c.b16 %v3962, %v3959
        %v4275 = vpack.c.b16 %v3963, %v3960
        %v4276 = vpack.c.b16 %v3964, %v3961
        %v4277 = vpack.c.b16 %v3968, %v3965
        %v4278 = vpack.c.b16 %v3969, %v3966
        %v4279 = vpack.c.b16 %v3970, %v3967
        %v4280 = vpack.c.b16 %v3974, %v3971
        %v4281 = vpack.c.b16 %v3975, %v3972
        %v4282 = vpack.c.b16 %v3976, %v3973
        %v4283 = vpack.c.b16 %v3980, %v3977
        %v4284 = vpack.c.b16 %v3981, %v3978
        %v4285 = vpack.c.b16 %v3982, %v3979
        %v4286 = vpack.c.b16 %v3986, %v3983
        %v4287 = vpack.c.b16 %v3987, %v3984
        %v4288 = vpack.c.b16 %v3988, %v3985
        %v4289 = vpack.c.b16 %v3992, %v3989
        %v4290 = vpack.c.b16 %v3993, %v3990
        %v4291 = vpack.c.b16 %v3994, %v3991
        %v4292 = vpack.c.b16 %v3998, %v3995
        %v4293 = vpack.c.b16 %v3999, %v3996
        %v4294 = vpack.c.b16 %v4000, %v3997
        %v4295 = vpack.c.b16 %v4004, %v4001
        %v4296 = vpack.c.b16 %v4005, %v4002
        %v4297 = vpack.c.b16 %v4006, %v4003
        %v4298 = vpack.c.b16 %v4010, %v4007
        %v4299 = vpack.c.b16 %v4011, %v4008
        %v4300 = vpack.c.b16 %v4012, %v4009
        %4589 = vmatprep.subr.bf16.mxu0 %v4014
        %4590 = vmatpush1.bf16.msra.mxu0 %v4013
        %4591 = vmatprep.subr.bf16.mxu0 %v4017
        %4592 = vmatpush1.bf16.msra.mxu0 %v4016
        %4593 = vmatprep.subr.bf16.mxu0 %v4020
        %4594 = vmatpush1.bf16.msra.mxu0 %v4019
        %4595 = vmatprep.subr.bf16.mxu0 %v4023
        %4596 = vmatpush1.bf16.msra.mxu0 %v4022
        %4597 = vmatprep.subr.bf16.mxu0 %v4026
        %4598 = vmatpush1.bf16.msra.mxu0 %v4025
        %4599 = vmatprep.subr.bf16.mxu0 %v4029
        %4600 = vmatpush1.bf16.msra.mxu0 %v4028
        %4601 = vmatprep.subr.bf16.mxu0 %v4032
        %4602 = vmatpush1.bf16.msra.mxu0 %v4031
        %4603 = vmatprep.subr.bf16.mxu0 %v4035
        %4604 = vmatpush1.bf16.msra.mxu0 %v4034
        %4605 = vmatprep.subr.bf16.mxu0 %v4038
        %4606 = vmatpush1.bf16.msra.mxu0 %v4037
        %4607 = vmatprep.subr.bf16.mxu0 %v4041
        %4608 = vmatpush1.bf16.msra.mxu0 %v4040
        %4609 = vmatprep.subr.bf16.mxu0 %v4044
        %4610 = vmatpush1.bf16.msra.mxu0 %v4043
        %4611 = vmatprep.subr.bf16.mxu0 %v4047
        %4612 = vmatpush1.bf16.msra.mxu0 %v4046
        %4613 = vmatprep.subr.bf16.mxu0 %v4050
        %4614 = vmatpush1.bf16.msra.mxu0 %v4049
        %4615 = vmatprep.subr.bf16.mxu0 %v4053
        %4616 = vmatpush1.bf16.msra.mxu0 %v4052
        %4617 = vmatprep.subr.bf16.mxu0 %v4056
        %4618 = vmatpush1.bf16.msra.mxu0 %v4055
        %4619 = vmatprep.subr.bf16.mxu0 %v4059
        %4620 = vmatpush1.bf16.msra.mxu0 %v4058
        %4621 = vmatprep.mubr.bf16.mxu0 %v2658
        %4622 = vmatmul.mubr.bf16.gmra.mrb[0].mxu0 %v2657
        %v4623 = vpop.f32.mrb[0].mxu0
        %v4624 = vadd.f32 0.0, %v4623
        %v4625 = vpop.f32.mrb[0].mxu0
        %v4626 = vadd.f32 0.0, %v4625
        %v4627 = vpop.f32.mrb[0].mxu0
        %v4628 = vpop.f32.mrb[0].mxu0
        %4629 = vdwg.mxu0
        %4630 = vmatprep.subr.bf16.mxu0 %v4062
        %4631 = vmatpush1.bf16.msra.mxu0 %v4061
        %4632 = vmatprep.subr.bf16.mxu0 %v4065
        %4633 = vmatpush1.bf16.msra.mxu0 %v4064
        %4634 = vmatprep.subr.bf16.mxu0 %v4068
        %4635 = vmatpush1.bf16.msra.mxu0 %v4067
        %4636 = vmatprep.subr.bf16.mxu0 %v4071
        %4637 = vmatpush1.bf16.msra.mxu0 %v4070
        %4638 = vmatprep.subr.bf16.mxu0 %v4074
        %4639 = vmatpush1.bf16.msra.mxu0 %v4073
        %4640 = vmatprep.subr.bf16.mxu0 %v4077
        %4641 = vmatpush1.bf16.msra.mxu0 %v4076
        %4642 = vmatprep.subr.bf16.mxu0 %v4080
        %4643 = vmatpush1.bf16.msra.mxu0 %v4079
        %4644 = vmatprep.subr.bf16.mxu0 %v4083
        %4645 = vmatpush1.bf16.msra.mxu0 %v4082
        %4646 = vmatprep.subr.bf16.mxu0 %v4086
        %4647 = vmatpush1.bf16.msra.mxu0 %v4085
        %4648 = vmatprep.subr.bf16.mxu0 %v4089
        %4649 = vmatpush1.bf16.msra.mxu0 %v4088
        %4650 = vmatprep.subr.bf16.mxu0 %v4092
        %4651 = vmatpush1.bf16.msra.mxu0 %v4091
        %4652 = vmatprep.subr.bf16.mxu0 %v4095
        %4653 = vmatpush1.bf16.msra.mxu0 %v4094
        %4654 = vmatprep.subr.bf16.mxu0 %v4098
        %4655 = vmatpush1.bf16.msra.mxu0 %v4097
        %4656 = vmatprep.subr.bf16.mxu0 %v4101
        %4657 = vmatpush1.bf16.msra.mxu0 %v4100
        %4658 = vmatprep.subr.bf16.mxu0 %v4104
        %4659 = vmatpush1.bf16.msra.mxu0 %v4103
        %4660 = vmatprep.subr.bf16.mxu0 %v4107
        %4661 = vmatpush1.bf16.msra.mxu0 %v4106
        %4662 = vmatprep.mubr.bf16.mxu0 %v2660
        %4663 = vmatmul.mubr.bf16.gmra.mrb[0].mxu0 %v2659
        %v4664 = vpop.f32.mrb[0].mxu0
        %v4665 = vadd.f32 %v4624, %v4664
        %v4666 = vpop.f32.mrb[0].mxu0
        %v4667 = vadd.f32 %v4626, %v4666
        %v4668 = vpop.f32.mrb[0].mxu0
        %v4669 = vpop.f32.mrb[0].mxu0
        %4670 = vdwg.mxu0
        %4671 = vmatprep.subr.bf16.mxu0 %v4110
        %4672 = vmatpush1.bf16.msra.mxu0 %v4109
        %4673 = vmatprep.subr.bf16.mxu0 %v4113
        %4674 = vmatpush1.bf16.msra.mxu0 %v4112
        %4675 = vmatprep.subr.bf16.mxu0 %v4116
        %4676 = vmatpush1.bf16.msra.mxu0 %v4115
        %4677 = vmatprep.subr.bf16.mxu0 %v4119
        %4678 = vmatpush1.bf16.msra.mxu0 %v4118
        %4679 = vmatprep.subr.bf16.mxu0 %v4122
        %4680 = vmatpush1.bf16.msra.mxu0 %v4121
        %4681 = vmatprep.subr.bf16.mxu0 %v4125
        %4682 = vmatpush1.bf16.msra.mxu0 %v4124
        %4683 = vmatprep.subr.bf16.mxu0 %v4128
        %4684 = vmatpush1.bf16.msra.mxu0 %v4127
        %4685 = vmatprep.subr.bf16.mxu0 %v4131
        %4686 = vmatpush1.bf16.msra.mxu0 %v4130
        %4687 = vmatprep.subr.bf16.mxu0 %v4134
        %4688 = vmatpush1.bf16.msra.mxu0 %v4133
        %4689 = vmatprep.subr.bf16.mxu0 %v4137
        %4690 = vmatpush1.bf16.msra.mxu0 %v4136
        %4691 = vmatprep.subr.bf16.mxu0 %v4140
        %4692 = vmatpush1.bf16.msra.mxu0 %v4139
        %4693 = vmatprep.subr.bf16.mxu0 %v4143
        %4694 = vmatpush1.bf16.msra.mxu0 %v4142
        %4695 = vmatprep.subr.bf16.mxu0 %v4146
        %4696 = vmatpush1.bf16.msra.mxu0 %v4145
        %4697 = vmatprep.subr.bf16.mxu0 %v4149
        %4698 = vmatpush1.bf16.msra.mxu0 %v4148
        %4699 = vmatprep.subr.bf16.mxu0 %v4152
        %4700 = vmatpush1.bf16.msra.mxu0 %v4151
        %4701 = vmatprep.subr.bf16.mxu0 %v4155
        %4702 = vmatpush1.bf16.msra.mxu0 %v4154
        %4703 = vmatprep.mubr.bf16.mxu0 %v2662
        %4704 = vmatmul.mubr.bf16.gmra.mrb[0].mxu0 %v2661
        %v4705 = vpop.f32.mrb[0].mxu0
        %v4706 = vadd.f32 %v4665, %v4705
        %v4707 = vpop.f32.mrb[0].mxu0
        %v4708 = vadd.f32 %v4667, %v4707
        %v4709 = vpop.f32.mrb[0].mxu0
        %v4710 = vpop.f32.mrb[0].mxu0
        %4711 = vdwg.mxu0
        %4712 = vmatprep.subr.bf16.mxu0 %v4158
        %4713 = vmatpush1.bf16.msra.mxu0 %v4157
        %4714 = vmatprep.subr.bf16.mxu0 %v4161
        %4715 = vmatpush1.bf16.msra.mxu0 %v4160
        %4716 = vmatprep.subr.bf16.mxu0 %v4164
        %4717 = vmatpush1.bf16.msra.mxu0 %v4163
        %4718 = vmatprep.subr.bf16.mxu0 %v4167
        %4719 = vmatpush1.bf16.msra.mxu0 %v4166
        %4720 = vmatprep.subr.bf16.mxu0 %v4170
        %4721 = vmatpush1.bf16.msra.mxu0 %v4169
        %4722 = vmatprep.subr.bf16.mxu0 %v4173
        %4723 = vmatpush1.bf16.msra.mxu0 %v4172
        %4724 = vmatprep.subr.bf16.mxu0 %v4176
        %4725 = vmatpush1.bf16.msra.mxu0 %v4175
        %4726 = vmatprep.subr.bf16.mxu0 %v4179
        %4727 = vmatpush1.bf16.msra.mxu0 %v4178
        %4728 = vmatprep.subr.bf16.mxu0 %v4182
        %4729 = vmatpush1.bf16.msra.mxu0 %v4181
        %4730 = vmatprep.subr.bf16.mxu0 %v4185
        %4731 = vmatpush1.bf16.msra.mxu0 %v4184
        %4732 = vmatprep.subr.bf16.mxu0 %v4188
        %4733 = vmatpush1.bf16.msra.mxu0 %v4187
        %4734 = vmatprep.subr.bf16.mxu0 %v4191
        %4735 = vmatpush1.bf16.msra.mxu0 %v4190
        %4736 = vmatprep.subr.bf16.mxu0 %v4194
        %4737 = vmatpush1.bf16.msra.mxu0 %v4193
        %4738 = vmatprep.subr.bf16.mxu0 %v4197
        %4739 = vmatpush1.bf16.msra.mxu0 %v4196
        %4740 = vmatprep.subr.bf16.mxu0 %v4200
        %4741 = vmatpush1.bf16.msra.mxu0 %v4199
        %4742 = vmatprep.subr.bf16.mxu0 %v4203
        %4743 = vmatpush1.bf16.msra.mxu0 %v4202
        %4744 = vmatprep.mubr.bf16.mxu0 %v2664
        %4745 = vmatmul.mubr.bf16.gmra.mrb[0].mxu0 %v2663
        %v4746 = vpop.f32.mrb[0].mxu0
        %v4747 = vadd.f32 %v4706, %v4746
        %v4748 = vpop.f32.mrb[0].mxu0
        %v4749 = vadd.f32 %v4708, %v4748
        %v4750 = vpop.f32.mrb[0].mxu0
        %v4751 = vpop.f32.mrb[0].mxu0
        %4752 = vdwg.mxu0
        %4753 = vmatprep.subr.bf16.mxu0 %v4206
        %4754 = vmatpush1.bf16.msra.mxu0 %v4205
        %4755 = vmatprep.subr.bf16.mxu0 %v4209
        %4756 = vmatpush1.bf16.msra.mxu0 %v4208
        %4757 = vmatprep.subr.bf16.mxu0 %v4212
        %4758 = vmatpush1.bf16.msra.mxu0 %v4211
        %4759 = vmatprep.subr.bf16.mxu0 %v4215
        %4760 = vmatpush1.bf16.msra.mxu0 %v4214
        %4761 = vmatprep.subr.bf16.mxu0 %v4218
        %4762 = vmatpush1.bf16.msra.mxu0 %v4217
        %4763 = vmatprep.subr.bf16.mxu0 %v4221
        %4764 = vmatpush1.bf16.msra.mxu0 %v4220
        %4765 = vmatprep.subr.bf16.mxu0 %v4224
        %4766 = vmatpush1.bf16.msra.mxu0 %v4223
        %4767 = vmatprep.subr.bf16.mxu0 %v4227
        %4768 = vmatpush1.bf16.msra.mxu0 %v4226
        %4769 = vmatprep.subr.bf16.mxu0 %v4230
        %4770 = vmatpush1.bf16.msra.mxu0 %v4229
        %4771 = vmatprep.subr.bf16.mxu0 %v4233
        %4772 = vmatpush1.bf16.msra.mxu0 %v4232
        %4773 = vmatprep.subr.bf16.mxu0 %v4236
        %4774 = vmatpush1.bf16.msra.mxu0 %v4235
        %4775 = vmatprep.subr.bf16.mxu0 %v4239
        %4776 = vmatpush1.bf16.msra.mxu0 %v4238
        %4777 = vmatprep.subr.bf16.mxu0 %v4242
        %4778 = vmatpush1.bf16.msra.mxu0 %v4241
        %4779 = vmatprep.subr.bf16.mxu0 %v4245
        %4780 = vmatpush1.bf16.msra.mxu0 %v4244
        %4781 = vmatprep.subr.bf16.mxu0 %v4248
        %4782 = vmatpush1.bf16.msra.mxu0 %v4247
        %4783 = vmatprep.subr.bf16.mxu0 %v4251
        %4784 = vmatpush1.bf16.msra.mxu0 %v4250
        %4785 = vmatprep.mubr.bf16.mxu0 %v2666
        %4786 = vmatmul.mubr.bf16.gmra.mrb[0].mxu0 %v2665
        %v4787 = vpop.f32.mrb[0].mxu0
        %v4788 = vadd.f32 %v4747, %v4787
        %v4789 = vpop.f32.mrb[0].mxu0
        %v4790 = vadd.f32 %v4749, %v4789
        %v4791 = vpop.f32.mrb[0].mxu0
        %v4792 = vpop.f32.mrb[0].mxu0
        %4793 = vdwg.mxu0
        %4794 = vmatprep.subr.bf16.mxu0 %v4254
        %4795 = vmatpush1.bf16.msra.mxu0 %v4253
        %4796 = vmatprep.subr.bf16.mxu0 %v4257
        %4797 = vmatpush1.bf16.msra.mxu0 %v4256
        %4798 = vmatprep.subr.bf16.mxu0 %v4260
        %4799 = vmatpush1.bf16.msra.mxu0 %v4259
        %4800 = vmatprep.subr.bf16.mxu0 %v4263
        %4801 = vmatpush1.bf16.msra.mxu0 %v4262
        %4802 = vmatprep.subr.bf16.mxu0 %v4266
        %4803 = vmatpush1.bf16.msra.mxu0 %v4265
        %4804 = vmatprep.subr.bf16.mxu0 %v4269
        %4805 = vmatpush1.bf16.msra.mxu0 %v4268
        %4806 = vmatprep.subr.bf16.mxu0 %v4272
        %4807 = vmatpush1.bf16.msra.mxu0 %v4271
        %4808 = vmatprep.subr.bf16.mxu0 %v4275
        %4809 = vmatpush1.bf16.msra.mxu0 %v4274
        %4810 = vmatprep.subr.bf16.mxu0 %v4278
        %4811 = vmatpush1.bf16.msra.mxu0 %v4277
        %4812 = vmatprep.subr.bf16.mxu0 %v4281
        %4813 = vmatpush1.bf16.msra.mxu0 %v4280
        %4814 = vmatprep.subr.bf16.mxu0 %v4284
        %4815 = vmatpush1.bf16.msra.mxu0 %v4283
        %4816 = vmatprep.subr.bf16.mxu0 %v4287
        %4817 = vmatpush1.bf16.msra.mxu0 %v4286
        %4818 = vmatprep.subr.bf16.mxu0 %v4290
        %4819 = vmatpush1.bf16.msra.mxu0 %v4289
        %4820 = vmatprep.subr.bf16.mxu0 %v4293
        %4821 = vmatpush1.bf16.msra.mxu0 %v4292
        %4822 = vmatprep.subr.bf16.mxu0 %v4296
        %4823 = vmatpush1.bf16.msra.mxu0 %v4295
        %4824 = vmatprep.subr.bf16.mxu0 %v4299
        %4825 = vmatpush1.bf16.msra.mxu0 %v4298
        %4826 = vmatprep.mubr.bf16.mxu0 %v2668
        %4827 = vmatmul.mubr.bf16.gmra.mrb[0].mxu0 %v2667
        %v4828 = vpop.f32.mrb[0].mxu0
        %v4829 = vadd.f32 %v4788, %v4828
        %v4830 = vpop.f32.mrb[0].mxu0
        %v4831 = vadd.f32 %v4790, %v4830
        %v4832 = vpop.f32.mrb[0].mxu0
        %v4833 = vpop.f32.mrb[0].mxu0
        %4834 = vdwg.mxu0
        %4835 = vmatprep.subr.bf16.mxu0 0
        %4836 = vmatpush1.bf16.msra.mxu0 %v4015
        %4837 = vmatprep.subr.bf16.mxu0 0
        %4838 = vmatpush1.bf16.msra.mxu0 %v4018
        %4839 = vmatprep.subr.bf16.mxu0 0
        %4840 = vmatpush1.bf16.msra.mxu0 %v4021
        %4841 = vmatprep.subr.bf16.mxu0 0
        %4842 = vmatpush1.bf16.msra.mxu0 %v4024
        %4843 = vmatprep.subr.bf16.mxu0 0
        %4844 = vmatpush1.bf16.msra.mxu0 %v4027
        %4845 = vmatprep.subr.bf16.mxu0 0
        %4846 = vmatpush1.bf16.msra.mxu0 %v4030
        %4847 = vmatprep.subr.bf16.mxu0 0
        %4848 = vmatpush1.bf16.msra.mxu0 %v4033
        %4849 = vmatprep.subr.bf16.mxu0 0
        %4850 = vmatpush1.bf16.msra.mxu0 %v4036
        %4851 = vmatprep.subr.bf16.mxu0 0
        %4852 = vmatpush1.bf16.msra.mxu0 %v4039
        %4853 = vmatprep.subr.bf16.mxu0 0
        %4854 = vmatpush1.bf16.msra.mxu0 %v4042
        %4855 = vmatprep.subr.bf16.mxu0 0
        %4856 = vmatpush1.bf16.msra.mxu0 %v4045
        %4857 = vmatprep.subr.bf16.mxu0 0
        %4858 = vmatpush1.bf16.msra.mxu0 %v4048
        %4859 = vmatprep.subr.bf16.mxu0 0
        %4860 = vmatpush1.bf16.msra.mxu0 %v4051
        %4861 = vmatprep.subr.bf16.mxu0 0
        %4862 = vmatpush1.bf16.msra.mxu0 %v4054
        %4863 = vmatprep.subr.bf16.mxu0 0
        %4864 = vmatpush1.bf16.msra.mxu0 %v4057
        %4865 = vmatprep.subr.bf16.mxu0 0
        %4866 = vmatpush1.bf16.msra.mxu0 %v4060
        %4867 = vmatprep.mubr.bf16.mxu0 %v2658
        %4868 = vmatmul.mubr.bf16.gmra.mrb[0].mxu0 %v2657
        %v4869 = vpop.f32.mrb[0].mxu0
        %v4870 = vadd.f32 0.0, %v4869
        %v4871 = vpop.f32.mrb[0].mxu0
        %v4872 = vpop.f32.mrb[0].mxu0
        %v4873 = vpop.f32.mrb[0].mxu0
        %4874 = vdwg.mxu0
        %4875 = vmatprep.subr.bf16.mxu0 0
        %4876 = vmatpush1.bf16.msra.mxu0 %v4063
        %4877 = vmatprep.subr.bf16.mxu0 0
        %4878 = vmatpush1.bf16.msra.mxu0 %v4066
        %4879 = vmatprep.subr.bf16.mxu0 0
        %4880 = vmatpush1.bf16.msra.mxu0 %v4069
        %4881 = vmatprep.subr.bf16.mxu0 0
        %4882 = vmatpush1.bf16.msra.mxu0 %v4072
        %4883 = vmatprep.subr.bf16.mxu0 0
        %4884 = vmatpush1.bf16.msra.mxu0 %v4075
        %4885 = vmatprep.subr.bf16.mxu0 0
        %4886 = vmatpush1.bf16.msra.mxu0 %v4078
        %4887 = vmatprep.subr.bf16.mxu0 0
        %4888 = vmatpush1.bf16.msra.mxu0 %v4081
        %4889 = vmatprep.subr.bf16.mxu0 0
        %4890 = vmatpush1.bf16.msra.mxu0 %v4084
        %4891 = vmatprep.subr.bf16.mxu0 0
        %4892 = vmatpush1.bf16.msra.mxu0 %v4087
        %4893 = vmatprep.subr.bf16.mxu0 0
        %4894 = vmatpush1.bf16.msra.mxu0 %v4090
        %4895 = vmatprep.subr.bf16.mxu0 0
        %4896 = vmatpush1.bf16.msra.mxu0 %v4093
        %4897 = vmatprep.subr.bf16.mxu0 0
        %4898 = vmatpush1.bf16.msra.mxu0 %v4096
        %4899 = vmatprep.subr.bf16.mxu0 0
        %4900 = vmatpush1.bf16.msra.mxu0 %v4099
        %4901 = vmatprep.subr.bf16.mxu0 0
        %4902 = vmatpush1.bf16.msra.mxu0 %v4102
        %4903 = vmatprep.subr.bf16.mxu0 0
        %4904 = vmatpush1.bf16.msra.mxu0 %v4105
        %4905 = vmatprep.subr.bf16.mxu0 0
        %4906 = vmatpush1.bf16.msra.mxu0 %v4108
        %4907 = vmatprep.mubr.bf16.mxu0 %v2660
        %4908 = vmatmul.mubr.bf16.gmra.mrb[0].mxu0 %v2659
        %v4909 = vpop.f32.mrb[0].mxu0
        %v4910 = vadd.f32 %v4870, %v4909
        %v4911 = vpop.f32.mrb[0].mxu0
        %v4912 = vpop.f32.mrb[0].mxu0
        %v4913 = vpop.f32.mrb[0].mxu0
        %4914 = vdwg.mxu0
        %4915 = vmatprep.subr.bf16.mxu0 0
        %4916 = vmatpush1.bf16.msra.mxu0 %v4111
        %4917 = vmatprep.subr.bf16.mxu0 0
        %4918 = vmatpush1.bf16.msra.mxu0 %v4114
        %4919 = vmatprep.subr.bf16.mxu0 0
        %4920 = vmatpush1.bf16.msra.mxu0 %v4117
        %4921 = vmatprep.subr.bf16.mxu0 0
        %4922 = vmatpush1.bf16.msra.mxu0 %v4120
        %4923 = vmatprep.subr.bf16.mxu0 0
        %4924 = vmatpush1.bf16.msra.mxu0 %v4123
        %4925 = vmatprep.subr.bf16.mxu0 0
        %4926 = vmatpush1.bf16.msra.mxu0 %v4126
        %4927 = vmatprep.subr.bf16.mxu0 0
        %4928 = vmatpush1.bf16.msra.mxu0 %v4129
        %4929 = vmatprep.subr.bf16.mxu0 0
        %4930 = vmatpush1.bf16.msra.mxu0 %v4132
        %4931 = vmatprep.subr.bf16.mxu0 0
        %4932 = vmatpush1.bf16.msra.mxu0 %v4135
        %4933 = vmatprep.subr.bf16.mxu0 0
        %4934 = vmatpush1.bf16.msra.mxu0 %v4138
        %4935 = vmatprep.subr.bf16.mxu0 0
        %4936 = vmatpush1.bf16.msra.mxu0 %v4141
        %4937 = vmatprep.subr.bf16.mxu0 0
        %4938 = vmatpush1.bf16.msra.mxu0 %v4144
        %4939 = vmatprep.subr.bf16.mxu0 0
        %4940 = vmatpush1.bf16.msra.mxu0 %v4147
        %4941 = vmatprep.subr.bf16.mxu0 0
        %4942 = vmatpush1.bf16.msra.mxu0 %v4150
        %4943 = vmatprep.subr.bf16.mxu0 0
        %4944 = vmatpush1.bf16.msra.mxu0 %v4153
        %4945 = vmatprep.subr.bf16.mxu0 0
        %4946 = vmatpush1.bf16.msra.mxu0 %v4156
        %4947 = vmatprep.mubr.bf16.mxu0 %v2662
        %4948 = vmatmul.mubr.bf16.gmra.mrb[0].mxu0 %v2661
        %v4949 = vpop.f32.mrb[0].mxu0
        %v4950 = vadd.f32 %v4910, %v4949
        %v4951 = vpop.f32.mrb[0].mxu0
        %v4952 = vpop.f32.mrb[0].mxu0
        %v4953 = vpop.f32.mrb[0].mxu0
        %4954 = vdwg.mxu0
        %4955 = vmatprep.subr.bf16.mxu0 0
        %4956 = vmatpush1.bf16.msra.mxu0 %v4159
        %4957 = vmatprep.subr.bf16.mxu0 0
        %4958 = vmatpush1.bf16.msra.mxu0 %v4162
        %4959 = vmatprep.subr.bf16.mxu0 0
        %4960 = vmatpush1.bf16.msra.mxu0 %v4165
        %4961 = vmatprep.subr.bf16.mxu0 0
        %4962 = vmatpush1.bf16.msra.mxu0 %v4168
        %4963 = vmatprep.subr.bf16.mxu0 0
        %4964 = vmatpush1.bf16.msra.mxu0 %v4171
        %4965 = vmatprep.subr.bf16.mxu0 0
        %4966 = vmatpush1.bf16.msra.mxu0 %v4174
        %4967 = vmatprep.subr.bf16.mxu0 0
        %4968 = vmatpush1.bf16.msra.mxu0 %v4177
        %4969 = vmatprep.subr.bf16.mxu0 0
        %4970 = vmatpush1.bf16.msra.mxu0 %v4180
        %4971 = vmatprep.subr.bf16.mxu0 0
        %4972 = vmatpush1.bf16.msra.mxu0 %v4183
        %4973 = vmatprep.subr.bf16.mxu0 0
        %4974 = vmatpush1.bf16.msra.mxu0 %v4186
        %4975 = vmatprep.subr.bf16.mxu0 0
        %4976 = vmatpush1.bf16.msra.mxu0 %v4189
        %4977 = vmatprep.subr.bf16.mxu0 0
        %4978 = vmatpush1.bf16.msra.mxu0 %v4192
        %4979 = vmatprep.subr.bf16.mxu0 0
        %4980 = vmatpush1.bf16.msra.mxu0 %v4195
        %4981 = vmatprep.subr.bf16.mxu0 0
        %4982 = vmatpush1.bf16.msra.mxu0 %v4198
        %4983 = vmatprep.subr.bf16.mxu0 0
        %4984 = vmatpush1.bf16.msra.mxu0 %v4201
        %4985 = vmatprep.subr.bf16.mxu0 0
        %4986 = vmatpush1.bf16.msra.mxu0 %v4204
        %4987 = vmatprep.mubr.bf16.mxu0 %v2664
        %4988 = vmatmul.mubr.bf16.gmra.mrb[0].mxu0 %v2663
        %v4989 = vpop.f32.mrb[0].mxu0
        %v4990 = vadd.f32 %v4950, %v4989
        %v4991 = vpop.f32.mrb[0].mxu0
        %v4992 = vpop.f32.mrb[0].mxu0
        %v4993 = vpop.f32.mrb[0].mxu0
        %4994 = vdwg.mxu0
        %4995 = vmatprep.subr.bf16.mxu0 0
        %4996 = vmatpush1.bf16.msra.mxu0 %v4207
        %4997 = vmatprep.subr.bf16.mxu0 0
        %4998 = vmatpush1.bf16.msra.mxu0 %v4210
        %4999 = vmatprep.subr.bf16.mxu0 0
        %5000 = vmatpush1.bf16.msra.mxu0 %v4213
        %5001 = vmatprep.subr.bf16.mxu0 0
        %5002 = vmatpush1.bf16.msra.mxu0 %v4216
        %5003 = vmatprep.subr.bf16.mxu0 0
        %5004 = vmatpush1.bf16.msra.mxu0 %v4219
        %5005 = vmatprep.subr.bf16.mxu0 0
        %5006 = vmatpush1.bf16.msra.mxu0 %v4222
        %5007 = vmatprep.subr.bf16.mxu0 0
        %5008 = vmatpush1.bf16.msra.mxu0 %v4225
        %5009 = vmatprep.subr.bf16.mxu0 0
        %5010 = vmatpush1.bf16.msra.mxu0 %v4228
        %5011 = vmatprep.subr.bf16.mxu0 0
        %5012 = vmatpush1.bf16.msra.mxu0 %v4231
        %5013 = vmatprep.subr.bf16.mxu0 0
        %5014 = vmatpush1.bf16.msra.mxu0 %v4234
        %5015 = vmatprep.subr.bf16.mxu0 0
        %5016 = vmatpush1.bf16.msra.mxu0 %v4237
        %5017 = vmatprep.subr.bf16.mxu0 0
        %5018 = vmatpush1.bf16.msra.mxu0 %v4240
        %5019 = vmatprep.subr.bf16.mxu0 0
        %5020 = vmatpush1.bf16.msra.mxu0 %v4243
        %5021 = vmatprep.subr.bf16.mxu0 0
        %5022 = vmatpush1.bf16.msra.mxu0 %v4246
        %5023 = vmatprep.subr.bf16.mxu0 0
        %5024 = vmatpush1.bf16.msra.mxu0 %v4249
        %5025 = vmatprep.subr.bf16.mxu0 0
        %5026 = vmatpush1.bf16.msra.mxu0 %v4252
        %5027 = vmatprep.mubr.bf16.mxu0 %v2666
        %5028 = vmatmul.mubr.bf16.gmra.mrb[0].mxu0 %v2665
        %v5029 = vpop.f32.mrb[0].mxu0
        %v5030 = vadd.f32 %v4990, %v5029
        %v5031 = vpop.f32.mrb[0].mxu0
        %v5032 = vpop.f32.mrb[0].mxu0
        %v5033 = vpop.f32.mrb[0].mxu0
        %5034 = vdwg.mxu0
        %5035 = vmatprep.subr.bf16.mxu0 0
        %5036 = vmatpush1.bf16.msra.mxu0 %v4255
        %5037 = vmatprep.subr.bf16.mxu0 0
        %5038 = vmatpush1.bf16.msra.mxu0 %v4258
        %5039 = vmatprep.subr.bf16.mxu0 0
        %5040 = vmatpush1.bf16.msra.mxu0 %v4261
        %5041 = vmatprep.subr.bf16.mxu0 0
        %5042 = vmatpush1.bf16.msra.mxu0 %v4264
        %5043 = vmatprep.subr.bf16.mxu0 0
        %5044 = vmatpush1.bf16.msra.mxu0 %v4267
        %5045 = vmatprep.subr.bf16.mxu0 0
        %5046 = vmatpush1.bf16.msra.mxu0 %v4270
        %5047 = vmatprep.subr.bf16.mxu0 0
        %5048 = vmatpush1.bf16.msra.mxu0 %v4273
        %5049 = vmatprep.subr.bf16.mxu0 0
        %5050 = vmatpush1.bf16.msra.mxu0 %v4276
        %5051 = vmatprep.subr.bf16.mxu0 0
        %5052 = vmatpush1.bf16.msra.mxu0 %v4279
        %5053 = vmatprep.subr.bf16.mxu0 0
        %5054 = vmatpush1.bf16.msra.mxu0 %v4282
        %5055 = vmatprep.subr.bf16.mxu0 0
        %5056 = vmatpush1.bf16.msra.mxu0 %v4285
        %5057 = vmatprep.subr.bf16.mxu0 0
        %5058 = vmatpush1.bf16.msra.mxu0 %v4288
        %5059 = vmatprep.subr.bf16.mxu0 0
        %5060 = vmatpush1.bf16.msra.mxu0 %v4291
        %5061 = vmatprep.subr.bf16.mxu0 0
        %5062 = vmatpush1.bf16.msra.mxu0 %v4294
        %5063 = vmatprep.subr.bf16.mxu0 0
        %5064 = vmatpush1.bf16.msra.mxu0 %v4297
        %5065 = vmatprep.subr.bf16.mxu0 0
        %5066 = vmatpush1.bf16.msra.mxu0 %v4300
        %5067 = vmatprep.mubr.bf16.mxu0 %v2668
        %5068 = vmatmul.mubr.bf16.gmra.mrb[0].mxu0 %v2667
        %v5069 = vpop.f32.mrb[0].mxu0
        %v5070 = vadd.f32 %v5030, %v5069
        %v5071 = vpop.f32.mrb[0].mxu0
        %v5072 = vpop.f32.mrb[0].mxu0
        %v5073 = vpop.f32.mrb[0].mxu0
        %5074 = vdwg.mxu0
        %v5075 = vadd.f32 %v2654, %v4829
        %v5076 = vadd.f32 %v2655, %v4831
        %v5077 = vadd.f32 %v2656, %v5070
        %5078 = vst [vmem:[#allocation2] sm:$0xff] %v5075
        %5079 = vst [vmem:[#allocation2 + $0x8] sm:$0xff] %v5076
        %5080 = vst [vmem:[#allocation2 + $0x10] sm:$0xff] %v5077
        // Predicated region
        $region65: #{tpu_custom_call.1} parent=39 // pred_check
          %p5081 = pneg %p338
        $region66: #{tpu_custom_call.1} parent=39 // pred_check_branch
          %5083 = sbr.rel (%p5081) target = $region68
        $region67: #{tpu_custom_call.1} parent=39 // pred_region
          %v5084 = vld [vmem:[#allocation2] sm:$0xff]
          %v5085 = vld [vmem:[#allocation2 + $0x8] sm:$0xff]
          %v5086 = vld [vmem:[#allocation2 + $0x10] sm:$0xff]
          %v5087 = vld [vmem:[#allocation13] sm:$0x7]
          %v5089 = vlaneseq
          %v5090 = vshrl.u32 %v5089, 7
          %v5091 = vsub.s32 0, %v5090
          %v5092 = vrot.slane %v5087, %v5091
          %v5093 = vlaneseq
          %v5094 = vshrl.u32 %v5093, 7
          %v5095 = vsub.s32 1, %v5094
          %v5096 = vrot.slane %v5087, %v5095
          %v5097 = vlaneseq
          %v5098 = vshrl.u32 %v5097, 7
          %v5099 = vsub.s32 2, %v5098
          %v5100 = vrot.slane %v5087, %v5099
          %v5104 = vadd.f32 %v5084, %v5092
          %v5105 = vadd.f32 %v5085, %v5096
          %v5106 = vadd.f32 %v5086, %v5100
          %5107 = vst [vmem:[%s333] sm:$0xff] %v5104
          %5108 = vst [vmem:[%s333 + $0x8] sm:$0xff] %v5105
          %5109 = vst [vmem:[%s333 + $0x10] sm:$0xff] %v5106
        $region68: #{tpu_custom_call.1} parent=39 // pred_fallthru
          _
        %s5110 = sand.u32 %s171, 1
        %s5111 = scalar_lea.sflag [#allocation7], %s5110
        %s5112 = sand.u32 %s171, 1
        %s5113 = smul.addr %s5112, 24
        %s5114 = scalar_lea.vmem [#allocation14], %s5113
        // Predicated region
        $region69: #{tpu_custom_call.1} parent=39 // pred_check
          %p5115 = pneg %p181
        $region70: #{tpu_custom_call.1} parent=39 // pred_check_branch
          %5117 = sbr.rel (%p5115) target = $region72
        $region71: #{tpu_custom_call.1} parent=39 // pred_region
          %s5119 = ssub.s32 384, 384
          %5120 = vsyncadd %s5111, %s5119
          %s5121 = smul.addr %s30, 3
          %s5122 = smul.addr %s5121, 128
          %s5123 = scalar_lea.hbm %s6, %s5122
          %s5125 = sshll.u32 %s5114, 4
          %s5126 = int_to_ptr.vmem [resolvable:$true] %s5125
          %5128 = dma.vmem_to_hbm [thread:$0]  %s5126, 384, %s5123, %s5111
        $region72: #{tpu_custom_call.1} parent=39 // pred_fallthru
          _
      $region40: #{tpu_custom_call.1} parent=5 // pred_fallthru
        _
      %p5129 = scmp.le.s32.totalorder 2, %s21
      // Predicated region
      $region73: #{tpu_custom_call.1} parent=5 // pred_check
        %p5130 = pneg %p5129
      $region74: #{tpu_custom_call.1} parent=5 // pred_check_branch
        %5132 = sbr.rel (%p5130) target = $region76
      $region75: #{tpu_custom_call.1} parent=5 // pred_region
        %s5133 = ssub.s32 %s21, 2
        // Predicated region
        $region77: #{tpu_custom_call.1} parent=75 // pred_check
          %p5134 = pneg %p187
        $region78: #{tpu_custom_call.1} parent=75 // pred_check_branch
          %5136 = sbr.rel (%p5134) target = $region80
        $region79: #{tpu_custom_call.1} parent=75 // pred_region
          %s5137 = sand.u32 %s172, 1
          %s5138 = scalar_lea.sflag [#allocation7], %s5137
          %s5139 = sand.u32 %s172, 1
          %s5140 = smul.addr %s5139, 24
          %s5141 = scalar_lea.vmem [#allocation14], %s5140
          %5142 = dma.done %s5138, 384
        $region80: #{tpu_custom_call.1} parent=75 // pred_fallthru
          _
      $region76: #{tpu_custom_call.1} parent=5 // pred_fallthru
        _
    $region6: #{tpu_custom_call.1} parent=1 // loop_footer
      %s25 = sadd.s32 1, %s21
    $region7: #{tpu_custom_call.1} parent=1 // loop_footer_branch
      %20 = sbr.rel target = $region3
    $region8: #{tpu_custom_call.1} parent=1 // loop_exit
      _
    %5143 = vsyncpa [#allocation6], 1
    %s5144 = scalar_lea.sflag [#allocation6], 1
    %5145 = vsyncpa %s5144, 1
    %5146 = vsyncpa [#allocation9], 1
    %5147 = vsyncpa [#allocation12], 1
    %5148 = vsyncpa [#allocation7], 1
    %s5149 = scalar_lea.sflag [#allocation7], 1
    %5150 = vsyncpa %s5149, 1

</llo_original>
